<compile_context>
chip_gen: v5e
topology: v5e:2x2
jax: 0.10.0
libtpu: 0.0.40
codegen_flags: <defaults>
</compile_context>

<pallas_src>
import math

import jax
import jax.numpy as jnp
from jax.experimental import pallas as pl
from jax.experimental.pallas import tpu as pltpu

LN_EPS = 1e-5  # PyTorch nn.LayerNorm default


def pair_transition_kernel(x_ref, g_ref, bln_ref, w1_ref, b1_ref, w2_ref, b2_ref,
                           o_ref):
    # x_ref: (tm, c_z) tile of the flattened pair representation.
    x = x_ref[...].astype(jnp.float32)

    # --- LayerNorm over the channel (lane) dim; statistics in f32 ---
    mean = jnp.mean(x, axis=-1, keepdims=True)
    xc = x - mean
    var = jnp.mean(xc * xc, axis=-1, keepdims=True)
    inv = jax.lax.rsqrt(var + LN_EPS)
    normed_f32 = (xc * inv * g_ref[...].astype(jnp.float32)
                  + bln_ref[...].astype(jnp.float32))
    # Feed the MXU in the weights' dtype (bf16 fast path); accumulate in f32.
    normed = normed_f32.astype(w1_ref.dtype)

    # --- Linear1 -> ReLU -> Linear2, full-K dots (MXU-internal accumulation) ---
    h = jnp.dot(normed, w1_ref[...], preferred_element_type=jnp.float32)
    h = jnp.maximum(h + b1_ref[...].astype(jnp.float32), 0.0)
    y = jnp.dot(h.astype(w2_ref.dtype), w2_ref[...],
                preferred_element_type=jnp.float32)
    o_ref[...] = (y + b2_ref[...].astype(jnp.float32)).astype(o_ref.dtype)


def _round_up(a, b):
    return (a + b - 1) // b * b


def pair_transition(z, gamma, beta, w1, b1, w2, b2, *, tm=2048,
                    mxu_dtype=jnp.bfloat16):
    """z: (*, N_res, N_res, c_z).  w1: (c_z, n*c_z), w2: (n*c_z, c_z)
    (already transposed from the PyTorch (out, in) layout)."""
    orig_shape = z.shape
    c_z = orig_shape[-1]
    hidden = w1.shape[1]
    M = math.prod(orig_shape[:-1])

    # bf16 MXU operands (f32 accumulation happens inside the kernel).
    if mxu_dtype is not None:
        w1 = w1.astype(mxu_dtype)
        w2 = w2.astype(mxu_dtype)

    x = z.reshape(M, c_z)

    # --- Row-tile selection ------------------------------------------------
    itemsize = jnp.dtype(z.dtype).itemsize
    sublane = {4: 8, 2: 16, 1: 32}.get(itemsize, 8)   # packed-sublane multiple
    tm = max(sublane, tm // sublane * sublane)
    tm_eff = min(tm, _round_up(M, sublane))
    # v7x has 2 TensorCores: make sure the "parallel" row axis has >= 2 steps.
    if M > sublane and pl.cdiv(M, tm_eff) < 2:
        tm_eff = max(sublane, _round_up(pl.cdiv(M, 2), sublane))
    grid = (pl.cdiv(M, tm_eff),)   # partial last block handled by Pallas masking

    # Advisory cost estimate (two GEMMs dominate; one rsqrt per row).
    flops = 4 * M * c_z * hidden
    bytes_accessed = (
        2 * M * c_z * itemsize
        + w1.size * jnp.dtype(w1.dtype).itemsize
        + w2.size * jnp.dtype(w2.dtype).itemsize
        + (b1.size + b2.size + gamma.size + beta.size) * 4
    )

    out = pl.pallas_call(
        pair_transition_kernel,
        out_shape=jax.ShapeDtypeStruct((M, c_z), z.dtype),
        grid_spec=pltpu.PrefetchScalarGridSpec(
            num_scalar_prefetch=0,
            grid=grid,
            in_specs=[
                pl.BlockSpec((tm_eff, c_z), lambda i: (i, 0)),    # x rows
                pl.BlockSpec((1, c_z), lambda i: (0, 0)),         # LN gamma
                pl.BlockSpec((1, c_z), lambda i: (0, 0)),         # LN beta
                pl.BlockSpec((c_z, hidden), lambda i: (0, 0)),    # W1 (resident)
                pl.BlockSpec((1, hidden), lambda i: (0, 0)),      # b1
                pl.BlockSpec((hidden, c_z), lambda i: (0, 0)),    # W2 (resident)
                pl.BlockSpec((1, c_z), lambda i: (0, 0)),         # b2
            ],
            out_specs=pl.BlockSpec((tm_eff, c_z), lambda i: (i, 0)),
        ),
        compiler_params=pltpu.CompilerParams(
            dimension_semantics=("parallel",),   # shards the row axis across TCs
            vmem_limit_bytes=32 * 1024 * 1024,   # ~10 MiB used at tm=2048
        ),
        cost_estimate=pl.CostEstimate(
            flops=flops, transcendentals=M, bytes_accessed=bytes_accessed),
    )(
        x,
        gamma.reshape(1, c_z),
        beta.reshape(1, c_z),
        w1,
        b1.reshape(1, hidden),
        w2,
        b2.reshape(1, c_z),
    )
    return out.reshape(orig_shape)


def reference(z, gamma, beta, w1, b1, w2, b2):
    x = z.astype(jnp.float32)
    mean = jnp.mean(x, axis=-1, keepdims=True)
    var = jnp.mean((x - mean) ** 2, axis=-1, keepdims=True)
    normed = (x - mean) * jax.lax.rsqrt(var + LN_EPS) * gamma + beta
    h = jnp.maximum(normed @ w1.astype(jnp.float32) + b1, 0.0)
    return (h @ w2.astype(jnp.float32) + b2).astype(z.dtype)


if __name__ == "__main__":
    # batch=2, N_res=25, c_z=128, n=4 -> hidden=512.
    # M = 2*25*25 = 1250 rows: ragged (not a multiple of 8 or the row tile),
    # so this exercises the masked partial last block and the 2-step grid
    # split for v7x's two TensorCores.
    batch, n_res, c_z, n_factor = 2, 25, 128, 4
    hidden = n_factor * c_z

    key = jax.random.PRNGKey(0)
    kz, kg, kb, kw1, kb1, kw2, kb2 = jax.random.split(key, 7)

    z = jax.random.normal(kz, (batch, n_res, n_res, c_z), dtype=jnp.float32)

    # Deterministic synthetic parameters (PyTorch Linear weight is (out, in);
    # here we store the already-transposed (in, out) matrices).
    gamma = 1.0 + 0.05 * jax.random.normal(kg, (c_z,), dtype=jnp.float32)
    beta = 0.05 * jax.random.normal(kb, (c_z,), dtype=jnp.float32)
    w1 = jax.random.normal(kw1, (c_z, hidden), dtype=jnp.float32) / jnp.sqrt(c_z)
    b1 = 0.01 * jax.random.normal(kb1, (hidden,), dtype=jnp.float32)
    w2 = jax.random.normal(kw2, (hidden, c_z), dtype=jnp.float32) / jnp.sqrt(hidden)
    b2 = 0.01 * jax.random.normal(kb2, (c_z,), dtype=jnp.float32)

    out = pair_transition(z, gamma, beta, w1, b1, w2, b2)
    out = jax.block_until_ready(out)

    ref = reference(z, gamma, beta, w1, b1, w2, b2)
    assert out.shape == z.shape
    # bf16 MXU operands vs. f32 reference -> loosened tolerance.
    max_err = jnp.max(jnp.abs(out.astype(jnp.float32) - ref.astype(jnp.float32)))
    assert jnp.allclose(out, ref, atol=5e-2, rtol=5e-2), (
        f"mismatch vs reference: max abs err {max_err}")

    print("KERNEL_OK")
</pallas_src>

<mosaic_0001>
module attributes {stable_mosaic.version = 11 : i64} {
  func.func @pair_transition_kernel(%arg0: i32, %arg1: memref<632x128xf32, #tpu.memory_space<vmem>>, %arg2: memref<1x128xf32, #tpu.memory_space<vmem>>, %arg3: memref<1x128xf32, #tpu.memory_space<vmem>>, %arg4: memref<128x512xbf16, #tpu.memory_space<vmem>>, %arg5: memref<1x512xf32, #tpu.memory_space<vmem>>, %arg6: memref<512x128xbf16, #tpu.memory_space<vmem>>, %arg7: memref<1x128xf32, #tpu.memory_space<vmem>>, %arg8: memref<632x128xf32, #tpu.memory_space<vmem>>) attributes {dimension_semantics = [#tpu.dimension_semantics<parallel>], iteration_bounds = array<i64: 2>, scalar_prefetch = 0 : i64, scratch_operands = 0 : i64, tpu.core_type = #tpu.core_type<tc>, window_params = [{transform_indices = @transform_0, window_bounds = array<i64: 632, 128>}, {pipeline_mode = #tpu.pipeline_mode<synchronous>, transform_indices = @transform_1, window_bounds = array<i64: 1, 128>}, {pipeline_mode = #tpu.pipeline_mode<synchronous>, transform_indices = @transform_2, window_bounds = array<i64: 1, 128>}, {pipeline_mode = #tpu.pipeline_mode<synchronous>, transform_indices = @transform_3, window_bounds = array<i64: 128, 512>}, {pipeline_mode = #tpu.pipeline_mode<synchronous>, transform_indices = @transform_4, window_bounds = array<i64: 1, 512>}, {pipeline_mode = #tpu.pipeline_mode<synchronous>, transform_indices = @transform_5, window_bounds = array<i64: 512, 128>}, {pipeline_mode = #tpu.pipeline_mode<synchronous>, transform_indices = @transform_6, window_bounds = array<i64: 1, 128>}, {transform_indices = @transform_7, window_bounds = array<i64: 632, 128>}]} {
    %c0 = arith.constant 0 : index
    %c0_0 = arith.constant 0 : index
    %0 = vector.load %arg1[%c0, %c0_0] : memref<632x128xf32, #tpu.memory_space<vmem>>, vector<632x128xf32>
    %cst = arith.constant dense<0.000000e+00> : vector<632xf32>
    %1 = vector.multi_reduction <add>, %0, %cst [1] : vector<632x128xf32> to vector<632xf32>
    %2 = vector.shape_cast %1 : vector<632xf32> to vector<632x1xf32>
    %cst_1 = arith.constant 1.280000e+02 : f32
    %3 = vector.broadcast %cst_1 : f32 to vector<632x1xf32>
    %4 = arith.divf %2, %3 : vector<632x1xf32>
    %5 = vector.broadcast %4 : vector<632x1xf32> to vector<632x128xf32>
    %6 = arith.subf %0, %5 : vector<632x128xf32>
    %7 = arith.mulf %6, %6 : vector<632x128xf32>
    %cst_2 = arith.constant dense<0.000000e+00> : vector<632xf32>
    %8 = vector.multi_reduction <add>, %7, %cst_2 [1] : vector<632x128xf32> to vector<632xf32>
    %9 = vector.shape_cast %8 : vector<632xf32> to vector<632x1xf32>
    %cst_3 = arith.constant 1.280000e+02 : f32
    %10 = vector.broadcast %cst_3 : f32 to vector<632x1xf32>
    %11 = arith.divf %9, %10 : vector<632x1xf32>
    %cst_4 = arith.constant 9.99999974E-6 : f32
    %12 = vector.broadcast %cst_4 : f32 to vector<632x1xf32>
    %13 = arith.addf %11, %12 : vector<632x1xf32>
    %14 = math.rsqrt %13 : vector<632x1xf32>
    %15 = vector.broadcast %14 : vector<632x1xf32> to vector<632x128xf32>
    %16 = arith.mulf %6, %15 : vector<632x128xf32>
    %c0_5 = arith.constant 0 : index
    %c0_6 = arith.constant 0 : index
    %17 = vector.load %arg2[%c0_5, %c0_6] : memref<1x128xf32, #tpu.memory_space<vmem>>, vector<1x128xf32>
    %18 = vector.broadcast %17 : vector<1x128xf32> to vector<632x128xf32>
    %19 = arith.mulf %16, %18 : vector<632x128xf32>
    %c0_7 = arith.constant 0 : index
    %c0_8 = arith.constant 0 : index
    %20 = vector.load %arg3[%c0_7, %c0_8] : memref<1x128xf32, #tpu.memory_space<vmem>>, vector<1x128xf32>
    %21 = vector.broadcast %20 : vector<1x128xf32> to vector<632x128xf32>
    %22 = arith.addf %19, %21 : vector<632x128xf32>
    %23 = arith.truncf %22 : vector<632x128xf32> to vector<632x128xbf16>
    %c0_9 = arith.constant 0 : index
    %c0_10 = arith.constant 0 : index
    %24 = vector.load %arg4[%c0_9, %c0_10] : memref<128x512xbf16, #tpu.memory_space<vmem>>, vector<128x512xbf16>
    %cst_11 = arith.constant dense<0.000000e+00> : vector<632x512xf32>
    %25 = tpu.matmul %23, %24, %cst_11 {dimension_numbers = #tpu.dot_dimension_numbers<[1], [0], [0], [1], [0, 0, 1, 1], [], []>} : vector<632x128xbf16>, vector<128x512xbf16>, vector<632x512xf32> -> vector<632x512xf32>
    %c0_12 = arith.constant 0 : index
    %c0_13 = arith.constant 0 : index
    %26 = vector.load %arg5[%c0_12, %c0_13] : memref<1x512xf32, #tpu.memory_space<vmem>>, vector<1x512xf32>
    %27 = vector.broadcast %26 : vector<1x512xf32> to vector<632x512xf32>
    %28 = arith.addf %25, %27 : vector<632x512xf32>
    %cst_14 = arith.constant 0.000000e+00 : f32
    %29 = vector.broadcast %cst_14 : f32 to vector<632x512xf32>
    %30 = arith.maximumf %28, %29 : vector<632x512xf32>
    %31 = arith.truncf %30 : vector<632x512xf32> to vector<632x512xbf16>
    %c0_15 = arith.constant 0 : index
    %c0_16 = arith.constant 0 : index
    %32 = vector.load %arg6[%c0_15, %c0_16] : memref<512x128xbf16, #tpu.memory_space<vmem>>, vector<512x128xbf16>
    %cst_17 = arith.constant dense<0.000000e+00> : vector<632x128xf32>
    %33 = tpu.matmul %31, %32, %cst_17 {dimension_numbers = #tpu.dot_dimension_numbers<[1], [0], [0], [1], [0, 0, 1, 1], [], []>} : vector<632x512xbf16>, vector<512x128xbf16>, vector<632x128xf32> -> vector<632x128xf32>
    %c0_18 = arith.constant 0 : index
    %c0_19 = arith.constant 0 : index
    %34 = vector.load %arg7[%c0_18, %c0_19] : memref<1x128xf32, #tpu.memory_space<vmem>>, vector<1x128xf32>
    %35 = vector.broadcast %34 : vector<1x128xf32> to vector<632x128xf32>
    %36 = arith.addf %33, %35 : vector<632x128xf32>
    %c0_20 = arith.constant 0 : index
    %c0_21 = arith.constant 0 : index
    %37 = vector.load %arg8[%c0_20, %c0_21] : memref<632x128xf32, #tpu.memory_space<vmem>>, vector<632x128xf32>
    tpu.vector_store %arg8[%c0_20, %c0_21], %36 {strides = array<i32>} : memref<632x128xf32, #tpu.memory_space<vmem>>, vector<632x128xf32>,
    return
  }
  func.func @transform_0(%arg0: i32) -> (i32, i32) {
    %c0_i32 = arith.constant 0 : i32
    %c0_i32_0 = arith.constant 0 : i32
    return %arg0, %c0_i32 : i32, i32
  }
  func.func @transform_1(%arg0: i32) -> (i32, i32) {
    %c0_i32 = arith.constant 0 : i32
    %c0_i32_0 = arith.constant 0 : i32
    %c0_i32_1 = arith.constant 0 : i32
    return %c0_i32, %c0_i32_0 : i32, i32
  }
  func.func @transform_2(%arg0: i32) -> (i32, i32) {
    %c0_i32 = arith.constant 0 : i32
    %c0_i32_0 = arith.constant 0 : i32
    %c0_i32_1 = arith.constant 0 : i32
    return %c0_i32, %c0_i32_0 : i32, i32
  }
  func.func @transform_3(%arg0: i32) -> (i32, i32) {
    %c0_i32 = arith.constant 0 : i32
    %c0_i32_0 = arith.constant 0 : i32
    %c0_i32_1 = arith.constant 0 : i32
    return %c0_i32, %c0_i32_0 : i32, i32
  }
  func.func @transform_4(%arg0: i32) -> (i32, i32) {
    %c0_i32 = arith.constant 0 : i32
    %c0_i32_0 = arith.constant 0 : i32
    %c0_i32_1 = arith.constant 0 : i32
    return %c0_i32, %c0_i32_0 : i32, i32
  }
  func.func @transform_5(%arg0: i32) -> (i32, i32) {
    %c0_i32 = arith.constant 0 : i32
    %c0_i32_0 = arith.constant 0 : i32
    %c0_i32_1 = arith.constant 0 : i32
    return %c0_i32, %c0_i32_0 : i32, i32
  }
  func.func @transform_6(%arg0: i32) -> (i32, i32) {
    %c0_i32 = arith.constant 0 : i32
    %c0_i32_0 = arith.constant 0 : i32
    %c0_i32_1 = arith.constant 0 : i32
    return %c0_i32, %c0_i32_0 : i32, i32
  }
  func.func @transform_7(%arg0: i32) -> (i32, i32) {
    %c0_i32 = arith.constant 0 : i32
    %c0_i32_0 = arith.constant 0 : i32
    return %arg0, %c0_i32 : i32, i32
  }
}

</mosaic_0001>

<llo_original>
// kernel: tpu_custom_call.1
$region0: #{tpu_custom_call.1}
  #allocation0 [shape = 'u32[]', space=smem, size = 0x4, offset = 0x4, fixed_abs, tag = 'smem constant byte address 0x4 - core index']
  #allocation1 [shape = 'u32[72,128]{1,0:T(1,128)}', space=vmem, size = 0x9000, scoped, tag = 'internal scratch']
  %s0 = inlined_call_operand.hbm [shape: f32[1250,128], index: 0, kind: input, shape index: {}]
  %s1 = inlined_call_operand.hbm [shape: f32[1,128], index: 1, kind: input, shape index: {}]
  %s2 = inlined_call_operand.vmem [shape: f32[1,128], index: 2, kind: input, shape index: {}]
  %s3 = inlined_call_operand.hbm [shape: bf16[128,512], index: 3, kind: input, shape index: {}]
  %s4 = inlined_call_operand.hbm [shape: f32[1,512], index: 4, kind: input, shape index: {}]
  %s5 = inlined_call_operand.hbm [shape: bf16[512,128], index: 5, kind: input, shape index: {}]
  %s6 = inlined_call_operand.vmem [shape: f32[1,128], index: 6, kind: input, shape index: {}]
  %s7 = inlined_call_operand.hbm [shape: f32[1250,128], index: 7, kind: output, shape index: {}]
  %s8 = sld [smem:[#allocation0]]
  $region81: #{tpu_custom_call.1} parent=0
    _
  %s10 = ssub.s32 1, %s8
  %s11 = scalar_select 0, %s10, %s8
  $region1: #{tpu_custom_call.1} parent=0
    #allocation2 [shape = 'u8[647168]{0}', space=vmem, size = 0x9e000, scoped, tag = 'input window, operand 0']
    #allocation3 [shape = 's32[2]{0}', space=sflag, size = 0x8, scoped, tag = 'scoped memory for tpu_custom_call.1']
    #allocation4 [shape = 's32[2]{0}', space=sflag, size = 0x8, scoped, tag = 'scoped memory for tpu_custom_call.1']
    #allocation5 [shape = 'u8[512]{0}', space=vmem, size = 0x400, scoped, tag = 'input window, operand 1, single buffered']
    #allocation6 [shape = 's32[1]{0}', space=sflag, size = 0x4, scoped, tag = 'scoped memory for tpu_custom_call.1']
    #allocation7 [shape = 'u8[131072]{0}', space=vmem, size = 0x20000, scoped, tag = 'input window, operand 3, single buffered']
    #allocation8 [shape = 'u8[2048]{0}', space=vmem, size = 0x800, scoped, tag = 'input window, operand 4, single buffered']
    #allocation9 [shape = 's32[1]{0}', space=sflag, size = 0x4, scoped, tag = 'scoped memory for tpu_custom_call.1']
    #allocation10 [shape = 'u8[131072]{0}', space=vmem, size = 0x20000, scoped, tag = 'input window, operand 5, single buffered']
    #allocation11 [shape = 'u8[647168]{0}', space=vmem, size = 0x9e000, scoped, tag = 'output window, operand 0']
    %12 = vsyncpa [#allocation3], 0
    %s13 = scalar_lea.sflag [#allocation3], 1
    %14 = vsyncpa %s13, 0
    %15 = vsyncpa [#allocation6], 0
    %16 = vsyncpa [#allocation9], 0
    %17 = vsyncpa [#allocation4], 0
    %s18 = scalar_lea.sflag [#allocation4], 1
    %19 = vsyncpa %s18, 0
    loop: start=0, step=1, limit=4
    $region2: #{tpu_custom_call.1} parent=1 // loop_pre_header
      _
    $region3: #{tpu_custom_call.1} parent=1 // loop_header
      %s21 = sphi 0, %s25
      %p22 = scmp.ge.s32.totalorder %s21, 4
      %s31 = sphi 0, %s33
      %s34 = sphi 0, %s31
      %s35 = sphi 0, %s34
      %s51 = sphi 0, %s35
      %s55 = sphi 0, %s55
      %s57 = sphi 0, %s55
      %s58 = sphi 0, %s57
      %s72 = sphi 0, %s58
      %s76 = sphi 0, %s76
      %s78 = sphi 0, %s76
      %s79 = sphi 0, %s78
      %s93 = sphi 0, %s79
      %s97 = sphi 0, %s97
      %s99 = sphi 0, %s97
      %s100 = sphi 0, %s99
      %s114 = sphi 0, %s100
      %s118 = sphi 0, %s118
      %s120 = sphi 0, %s118
      %s121 = sphi 0, %s120
      %s135 = sphi 0, %s121
      %s139 = sphi 0, %s139
      %s141 = sphi 0, %s139
      %s142 = sphi 0, %s141
      %s156 = sphi 0, %s142
      %s160 = sphi 0, %s160
      %s162 = sphi 0, %s160
      %s163 = sphi 0, %s162
      %s177 = sphi 0, %s163
      %s183 = sphi 0, %s185
      %s186 = sphi 0, %s183
      %s187 = sphi 0, %s186
      %s203 = sphi 0, %s187
    $region4: #{tpu_custom_call.1} parent=1 // loop_header_branch
      %24 = sbr.rel (%p22) target = $region8
    $region5: #{tpu_custom_call.1} parent=1 // loop_body
      %s26 = ssub.s32 %s21, 1
      %s27 = ssub.s32 %s21, 2
      %s28 = sadd.s32 %s21, 1
      %s29 = ssub.s32 %s21, %s28
      %p30 = scmp.eq.s32.totalorder %s29, 0
      %s32 = sadd.s32 %s31, 1
      %s33 = scalar_select %p30, %s31, %s32
      %p36 = pneg %p30
      %p37 = scmp.eq.s32.totalorder %s21, 1
      %p38 = por %p36, %p37
      %p39 = scmp.ne.s32.totalorder %s31, %s34
      %p40 = scmp.eq.s32.totalorder %s21, 0
      %p41 = por %p39, %p40
      %p42 = scmp.ne.s32.totalorder %s31, %s34
      %p43 = scmp.eq.s32.totalorder %s26, 1
      %p44 = por %p42, %p43
      %p45 = scmp.ne.s32.totalorder %s34, %s35
      %p46 = scmp.eq.s32.totalorder %s26, 0
      %p47 = por %p45, %p46
      %p48 = scmp.ne.s32.totalorder %s34, %s35
      %p49 = scmp.eq.s32.totalorder %s27, 1
      %p50 = por %p48, %p49
      %p52 = scmp.ne.s32.totalorder %s35, %s51
      %p53 = scmp.eq.s32.totalorder %s27, 0
      %p54 = por %p52, %p53
      %s56 = sadd.s32 %s55, 1
      %p59 = scmp.eq.s32.totalorder %s21, 1
      %p60 = scmp.ne.s32.totalorder %s55, %s57
      %p61 = scmp.eq.s32.totalorder %s21, 0
      %p62 = por %p60, %p61
      %p63 = scmp.ne.s32.totalorder %s55, %s57
      %p64 = scmp.eq.s32.totalorder %s26, 1
      %p65 = por %p63, %p64
      %p66 = scmp.ne.s32.totalorder %s57, %s58
      %p67 = scmp.eq.s32.totalorder %s26, 0
      %p68 = por %p66, %p67
      %p69 = scmp.ne.s32.totalorder %s57, %s58
      %p70 = scmp.eq.s32.totalorder %s27, 1
      %p71 = por %p69, %p70
      %p73 = scmp.ne.s32.totalorder %s58, %s72
      %p74 = scmp.eq.s32.totalorder %s27, 0
      %p75 = por %p73, %p74
      %s77 = sadd.s32 %s76, 1
      %p80 = scmp.eq.s32.totalorder %s21, 1
      %p81 = scmp.ne.s32.totalorder %s76, %s78
      %p82 = scmp.eq.s32.totalorder %s21, 0
      %p83 = por %p81, %p82
      %p84 = scmp.ne.s32.totalorder %s76, %s78
      %p85 = scmp.eq.s32.totalorder %s26, 1
      %p86 = por %p84, %p85
      %p87 = scmp.ne.s32.totalorder %s78, %s79
      %p88 = scmp.eq.s32.totalorder %s26, 0
      %p89 = por %p87, %p88
      %p90 = scmp.ne.s32.totalorder %s78, %s79
      %p91 = scmp.eq.s32.totalorder %s27, 1
      %p92 = por %p90, %p91
      %p94 = scmp.ne.s32.totalorder %s79, %s93
      %p95 = scmp.eq.s32.totalorder %s27, 0
      %p96 = por %p94, %p95
      %s98 = sadd.s32 %s97, 1
      %p101 = scmp.eq.s32.totalorder %s21, 1
      %p102 = scmp.ne.s32.totalorder %s97, %s99
      %p103 = scmp.eq.s32.totalorder %s21, 0
      %p104 = por %p102, %p103
      %p105 = scmp.ne.s32.totalorder %s97, %s99
      %p106 = scmp.eq.s32.totalorder %s26, 1
      %p107 = por %p105, %p106
      %p108 = scmp.ne.s32.totalorder %s99, %s100
      %p109 = scmp.eq.s32.totalorder %s26, 0
      %p110 = por %p108, %p109
      %p111 = scmp.ne.s32.totalorder %s99, %s100
      %p112 = scmp.eq.s32.totalorder %s27, 1
      %p113 = por %p111, %p112
      %p115 = scmp.ne.s32.totalorder %s100, %s114
      %p116 = scmp.eq.s32.totalorder %s27, 0
      %p117 = por %p115, %p116
      %s119 = sadd.s32 %s118, 1
      %p122 = scmp.eq.s32.totalorder %s21, 1
      %p123 = scmp.ne.s32.totalorder %s118, %s120
      %p124 = scmp.eq.s32.totalorder %s21, 0
      %p125 = por %p123, %p124
      %p126 = scmp.ne.s32.totalorder %s118, %s120
      %p127 = scmp.eq.s32.totalorder %s26, 1
      %p128 = por %p126, %p127
      %p129 = scmp.ne.s32.totalorder %s120, %s121
      %p130 = scmp.eq.s32.totalorder %s26, 0
      %p131 = por %p129, %p130
      %p132 = scmp.ne.s32.totalorder %s120, %s121
      %p133 = scmp.eq.s32.totalorder %s27, 1
      %p134 = por %p132, %p133
      %p136 = scmp.ne.s32.totalorder %s121, %s135
      %p137 = scmp.eq.s32.totalorder %s27, 0
      %p138 = por %p136, %p137
      %s140 = sadd.s32 %s139, 1
      %p143 = scmp.eq.s32.totalorder %s21, 1
      %p144 = scmp.ne.s32.totalorder %s139, %s141
      %p145 = scmp.eq.s32.totalorder %s21, 0
      %p146 = por %p144, %p145
      %p147 = scmp.ne.s32.totalorder %s139, %s141
      %p148 = scmp.eq.s32.totalorder %s26, 1
      %p149 = por %p147, %p148
      %p150 = scmp.ne.s32.totalorder %s141, %s142
      %p151 = scmp.eq.s32.totalorder %s26, 0
      %p152 = por %p150, %p151
      %p153 = scmp.ne.s32.totalorder %s141, %s142
      %p154 = scmp.eq.s32.totalorder %s27, 1
      %p155 = por %p153, %p154
      %p157 = scmp.ne.s32.totalorder %s142, %s156
      %p158 = scmp.eq.s32.totalorder %s27, 0
      %p159 = por %p157, %p158
      %s161 = sadd.s32 %s160, 1
      %p164 = scmp.eq.s32.totalorder %s21, 1
      %p165 = scmp.ne.s32.totalorder %s160, %s162
      %p166 = scmp.eq.s32.totalorder %s21, 0
      %p167 = por %p165, %p166
      %p168 = scmp.ne.s32.totalorder %s160, %s162
      %p169 = scmp.eq.s32.totalorder %s26, 1
      %p170 = por %p168, %p169
      %p171 = scmp.ne.s32.totalorder %s162, %s163
      %p172 = scmp.eq.s32.totalorder %s26, 0
      %p173 = por %p171, %p172
      %p174 = scmp.ne.s32.totalorder %s162, %s163
      %p175 = scmp.eq.s32.totalorder %s27, 1
      %p176 = por %p174, %p175
      %p178 = scmp.ne.s32.totalorder %s163, %s177
      %p179 = scmp.eq.s32.totalorder %s27, 0
      %p180 = por %p178, %p179
      %s181 = ssub.s32 %s21, %s28
      %p182 = scmp.eq.s32.totalorder %s181, 0
      %s184 = sadd.s32 %s183, 1
      %s185 = scalar_select %p182, %s183, %s184
      %p188 = pneg %p182
      %p189 = scmp.eq.s32.totalorder %s21, 1
      %p190 = por %p188, %p189
      %p191 = scmp.ne.s32.totalorder %s183, %s186
      %p192 = scmp.eq.s32.totalorder %s21, 0
      %p193 = por %p191, %p192
      %p194 = scmp.ne.s32.totalorder %s183, %s186
      %p195 = scmp.eq.s32.totalorder %s26, 1
      %p196 = por %p194, %p195
      %p197 = scmp.ne.s32.totalorder %s186, %s187
      %p198 = scmp.eq.s32.totalorder %s26, 0
      %p199 = por %p197, %p198
      %p200 = scmp.ne.s32.totalorder %s186, %s187
      %p201 = scmp.eq.s32.totalorder %s27, 1
      %p202 = por %p200, %p201
      %p204 = scmp.ne.s32.totalorder %s187, %s203
      %p205 = scmp.eq.s32.totalorder %s27, 0
      %p206 = por %p204, %p205
      %p207 = scmp.le.s32.totalorder 1, %s21
      %p208 = scmp.lt.s32.totalorder %s21, 3
      %p209 = pnand %p207, %p208
      %p210 = pneg %p209
      // Predicated region
      $region9: #{tpu_custom_call.1} parent=5 // pred_check
        _
      $region10: #{tpu_custom_call.1} parent=5 // pred_check_branch
        %212 = sbr.rel (%p209) target = $region12
      $region11: #{tpu_custom_call.1} parent=5 // pred_region
        %s213 = ssub.s32 %s21, 1
        // Predicated region
        $region13: #{tpu_custom_call.1} parent=11 // pred_check
          %p214 = pneg %p68
        $region14: #{tpu_custom_call.1} parent=11 // pred_check_branch
          %216 = sbr.rel (%p214) target = $region16
        $region15: #{tpu_custom_call.1} parent=11 // pred_region
          %218 = vsyncadd [#allocation6], 0
          %s220 = sshll.u32 %s1, 4
          %s221 = int_to_ptr.hbm [resolvable:$true] %s220
          %s222 = sshll.u32 [#allocation5], 4
          %s223 = int_to_ptr.vmem [resolvable:$true] %s222
          %225 = dma.hbm_to_vmem [thread:$0]  %s221, 16, %s223, [#allocation6]
        $region16: #{tpu_custom_call.1} parent=11 // pred_fallthru
          _
        // Predicated region
        $region17: #{tpu_custom_call.1} parent=11 // pred_check
          %p226 = pneg %p89
        $region18: #{tpu_custom_call.1} parent=11 // pred_check_branch
          %228 = sbr.rel (%p226) target = $region20
        $region19: #{tpu_custom_call.1} parent=11 // pred_region
          _
        $region20: #{tpu_custom_call.1} parent=11 // pred_fallthru
          _
        // Predicated region
        $region21: #{tpu_custom_call.1} parent=11 // pred_check
          %p229 = pneg %p110
        $region22: #{tpu_custom_call.1} parent=11 // pred_check_branch
          %231 = sbr.rel (%p229) target = $region24
        $region23: #{tpu_custom_call.1} parent=11 // pred_region
          %233 = vsyncadd [#allocation6], 0
          %s234 = sshll.u32 %s3, 4
          %s235 = int_to_ptr.hbm [resolvable:$true] %s234
          %s236 = sshll.u32 [#allocation7], 4
          %s237 = int_to_ptr.vmem [resolvable:$true] %s236
          %242 = dma.hbm_to_vmem [thread:$0]  %s235, 4096, %s237, [#allocation6], 256, 256, 16
        $region24: #{tpu_custom_call.1} parent=11 // pred_fallthru
          _
        // Predicated region
        $region25: #{tpu_custom_call.1} parent=11 // pred_check
          %p243 = pneg %p131
        $region26: #{tpu_custom_call.1} parent=11 // pred_check_branch
          %245 = sbr.rel (%p243) target = $region28
        $region27: #{tpu_custom_call.1} parent=11 // pred_region
          %247 = vsyncadd [#allocation9], 0
          %s249 = sshll.u32 %s4, 4
          %s250 = int_to_ptr.hbm [resolvable:$true] %s249
          %s251 = sshll.u32 [#allocation8], 4
          %s252 = int_to_ptr.vmem [resolvable:$true] %s251
          %254 = dma.hbm_to_vmem [thread:$0]  %s250, 64, %s252, [#allocation9]
        $region28: #{tpu_custom_call.1} parent=11 // pred_fallthru
          _
        // Predicated region
        $region29: #{tpu_custom_call.1} parent=11 // pred_check
          %p255 = pneg %p152
        $region30: #{tpu_custom_call.1} parent=11 // pred_check_branch
          %257 = sbr.rel (%p255) target = $region32
        $region31: #{tpu_custom_call.1} parent=11 // pred_region
          %259 = vsyncadd [#allocation9], 0
          %s260 = sshll.u32 %s5, 4
          %s261 = int_to_ptr.hbm [resolvable:$true] %s260
          %s262 = sshll.u32 [#allocation10], 4
          %s263 = int_to_ptr.vmem [resolvable:$true] %s262
          %268 = dma.hbm_to_vmem [thread:$0]  %s261, 4096, %s263, [#allocation9], 64, 64, 4
        $region32: #{tpu_custom_call.1} parent=11 // pred_fallthru
          _
        // Predicated region
        $region33: #{tpu_custom_call.1} parent=11 // pred_check
          %p269 = pneg %p173
        $region34: #{tpu_custom_call.1} parent=11 // pred_check_branch
          %271 = sbr.rel (%p269) target = $region36
        $region35: #{tpu_custom_call.1} parent=11 // pred_region
          _
        $region36: #{tpu_custom_call.1} parent=11 // pred_fallthru
          _
      $region12: #{tpu_custom_call.1} parent=5 // pred_fallthru
        _
      %p272 = scmp.lt.s32.totalorder %s21, 2
      // Predicated region
      $region37: #{tpu_custom_call.1} parent=5 // pred_check
        %p273 = pneg %p272
      $region38: #{tpu_custom_call.1} parent=5 // pred_check_branch
        %275 = sbr.rel (%p273) target = $region40
      $region39: #{tpu_custom_call.1} parent=5 // pred_region
        // Predicated region
        $region41: #{tpu_custom_call.1} parent=39 // pred_check
          %p276 = pneg %p41
        $region42: #{tpu_custom_call.1} parent=39 // pred_check_branch
          %278 = sbr.rel (%p276) target = $region44
        $region43: #{tpu_custom_call.1} parent=39 // pred_region
          %s279 = sand.u32 %s31, 1
          %s280 = scalar_lea.sflag [#allocation3], %s279
          %s281 = sand.u32 %s31, 1
          %s282 = smul.addr %s281, 632
          %s283 = scalar_lea.vmem [#allocation2], %s282
          %s284 = smul.u32 79, %s21
          %s285 = ssub.s32 157, %s284
          %p286 = scmp.lt.s32.totalorder %s285, 79
          %s287 = scalar_select %p286, %s285, 79
          %s288 = smul.u32 8, %s287
          %s289 = ssub.s32 632, %s288
          %s290 = sshll.u32 %s289, 4
          %291 = vsyncadd %s280, %s290
          %p292 = scmp.ne.s32.totalorder 0, %s288
          %s293 = smul.addr %s284, 8
          %s294 = scalar_lea.hbm %s0, %s293
          %s295 = smul.u32 8, %s287
          %s296 = sshll.u32 %s294, 4
          %s297 = int_to_ptr.hbm [resolvable:$true] %s296
          %s298 = sshll.u32 %s283, 4
          %s299 = int_to_ptr.vmem [resolvable:$true] %s298
          %s300 = sshll.u32 %s295, 4
          %304 = dma.hbm_to_vmem [thread:$0]  (%p292), %s297, %s300, %s299, %s280, 128, 128, 8
        $region44: #{tpu_custom_call.1} parent=39 // pred_fallthru
          _
      $region40: #{tpu_custom_call.1} parent=5 // pred_fallthru
        _
      %p305 = scmp.le.s32.totalorder 1, %s21
      %p306 = scmp.lt.s32.totalorder %s21, 3
      %p307 = pnand %p305, %p306
      %p308 = pneg %p307
      // Predicated region
      $region45: #{tpu_custom_call.1} parent=5 // pred_check
        _
      $region46: #{tpu_custom_call.1} parent=5 // pred_check_branch
        %310 = sbr.rel (%p307) target = $region48
      $region47: #{tpu_custom_call.1} parent=5 // pred_region
        %s311 = ssub.s32 %s21, 1
        %s312 = sand.u32 %s34, 1
        %s313 = scalar_lea.sflag [#allocation3], %s312
        %s314 = sand.u32 %s34, 1
        %s315 = smul.addr %s314, 632
        %s316 = scalar_lea.vmem [#allocation2], %s315
        // Predicated region
        $region49: #{tpu_custom_call.1} parent=47 // pred_check
          %p317 = pneg %p47
        $region50: #{tpu_custom_call.1} parent=47 // pred_check_branch
          %319 = sbr.rel (%p317) target = $region52
        $region51: #{tpu_custom_call.1} parent=47 // pred_region
          %321 = dma.done %s313, 10112
        $region52: #{tpu_custom_call.1} parent=47 // pred_fallthru
          _
        // Predicated region
        $region53: #{tpu_custom_call.1} parent=47 // pred_check
          %p322 = pneg %p68
        $region54: #{tpu_custom_call.1} parent=47 // pred_check_branch
          %324 = sbr.rel (%p322) target = $region56
        $region55: #{tpu_custom_call.1} parent=47 // pred_region
          %326 = dma.done [#allocation6], 16
        $region56: #{tpu_custom_call.1} parent=47 // pred_fallthru
          _
        // Predicated region
        $region57: #{tpu_custom_call.1} parent=47 // pred_check
          %p327 = pneg %p110
        $region58: #{tpu_custom_call.1} parent=47 // pred_check_branch
          %329 = sbr.rel (%p327) target = $region60
        $region59: #{tpu_custom_call.1} parent=47 // pred_region
          %331 = dma.done [#allocation6], 4096
        $region60: #{tpu_custom_call.1} parent=47 // pred_fallthru
          _
        // Predicated region
        $region61: #{tpu_custom_call.1} parent=47 // pred_check
          %p332 = pneg %p131
        $region62: #{tpu_custom_call.1} parent=47 // pred_check_branch
          %334 = sbr.rel (%p332) target = $region64
        $region63: #{tpu_custom_call.1} parent=47 // pred_region
          %336 = dma.done [#allocation9], 64
        $region64: #{tpu_custom_call.1} parent=47 // pred_fallthru
          _
        // Predicated region
        $region65: #{tpu_custom_call.1} parent=47 // pred_check
          %p337 = pneg %p152
        $region66: #{tpu_custom_call.1} parent=47 // pred_check_branch
          %339 = sbr.rel (%p337) target = $region68
        $region67: #{tpu_custom_call.1} parent=47 // pred_region
          %341 = dma.done [#allocation9], 4096
        $region68: #{tpu_custom_call.1} parent=47 // pred_fallthru
          _
        %s342 = sand.u32 %s34, 1
        %s343 = scalar_lea.sflag [#allocation3], %s342
        %s344 = sand.u32 %s34, 1
        %s345 = smul.addr %s344, 632
        %s346 = scalar_lea.vmem [#allocation2], %s345
        %p347 = pneg %p47
        %p348 = pneg %p44
        %p349 = pneg %p68
        %p350 = pneg %p65
        %p351 = pneg %p89
        %p352 = pneg %p86
        %p353 = pneg %p110
        %p354 = pneg %p107
        %p355 = pneg %p131
        %p356 = pneg %p128
        %p357 = pneg %p152
        %p358 = pneg %p149
        %p359 = pneg %p173
        %p360 = pneg %p170
        %p361 = pneg %p199
        %p362 = pneg %p196
        %s363 = sand.u32 %s186, 1
        %s364 = scalar_lea.sflag [#allocation4], %s363
        %s365 = sand.u32 %s186, 1
        %s366 = smul.addr %s365, 632
        %s367 = scalar_lea.vmem [#allocation11], %s366
        %s368 = smul.u32 79, %s26
        %s369 = ssub.s32 157, %s368
        %p370 = scmp.lt.s32.totalorder %s369, 79
        %s371 = scalar_select %p370, %s369, 79
        %s372 = smul.u32 8, %s371
        %s373 = smul.u32 79, %s26
        %s374 = ssub.s32 157, %s373
        %p375 = scmp.lt.s32.totalorder %s374, 79
        %s376 = scalar_select %p375, %s374, 79
        %s377 = smul.u32 8, %s376
        %v378 = vld [vmem:[%s316] sm:$0xff]
        %v379 = vld [vmem:[%s316 + $0x8] sm:$0xff]
        %v380 = vld [vmem:[%s316 + $0x10] sm:$0xff]
        %v381 = vld [vmem:[%s316 + $0x18] sm:$0xff]
        %v382 = vld [vmem:[%s316 + $0x20] sm:$0xff]
        %v383 = vld [vmem:[%s316 + $0x28] sm:$0xff]
        %v384 = vld [vmem:[%s316 + $0x30] sm:$0xff]
        %v385 = vld [vmem:[%s316 + $0x38] sm:$0xff]
        %v386 = vld [vmem:[%s316 + $0x40] sm:$0xff]
        %v387 = vld [vmem:[%s316 + $0x48] sm:$0xff]
        %v388 = vld [vmem:[%s316 + $0x50] sm:$0xff]
        %v389 = vld [vmem:[%s316 + $0x58] sm:$0xff]
        %v390 = vld [vmem:[%s316 + $0x60] sm:$0xff]
        %v391 = vld [vmem:[%s316 + $0x68] sm:$0xff]
        %v392 = vld [vmem:[%s316 + $0x70] sm:$0xff]
        %v393 = vld [vmem:[%s316 + $0x78] sm:$0xff]
        %v394 = vld [vmem:[%s316 + $0x80] sm:$0xff]
        %v395 = vld [vmem:[%s316 + $0x88] sm:$0xff]
        %v396 = vld [vmem:[%s316 + $0x90] sm:$0xff]
        %v397 = vld [vmem:[%s316 + $0x98] sm:$0xff]
        %v398 = vld [vmem:[%s316 + $0xa0] sm:$0xff]
        %v399 = vld [vmem:[%s316 + $0xa8] sm:$0xff]
        %v400 = vld [vmem:[%s316 + $0xb0] sm:$0xff]
        %v401 = vld [vmem:[%s316 + $0xb8] sm:$0xff]
        %v402 = vld [vmem:[%s316 + $0xc0] sm:$0xff]
        %v403 = vld [vmem:[%s316 + $0xc8] sm:$0xff]
        %v404 = vld [vmem:[%s316 + $0xd0] sm:$0xff]
        %v405 = vld [vmem:[%s316 + $0xd8] sm:$0xff]
        %v406 = vld [vmem:[%s316 + $0xe0] sm:$0xff]
        %v407 = vld [vmem:[%s316 + $0xe8] sm:$0xff]
        %v408 = vld [vmem:[%s316 + $0xf0] sm:$0xff]
        %v409 = vld [vmem:[%s316 + $0xf8] sm:$0xff]
        %v410 = vld [vmem:[%s316 + $0x100] sm:$0xff]
        %v411 = vld [vmem:[%s316 + $0x108] sm:$0xff]
        %v412 = vld [vmem:[%s316 + $0x110] sm:$0xff]
        %v413 = vld [vmem:[%s316 + $0x118] sm:$0xff]
        %v414 = vld [vmem:[%s316 + $0x120] sm:$0xff]
        %v415 = vld [vmem:[%s316 + $0x128] sm:$0xff]
        %v416 = vld [vmem:[%s316 + $0x130] sm:$0xff]
        %v417 = vld [vmem:[%s316 + $0x138] sm:$0xff]
        %v418 = vld [vmem:[%s316 + $0x140] sm:$0xff]
        %v419 = vld [vmem:[%s316 + $0x148] sm:$0xff]
        %v420 = vld [vmem:[%s316 + $0x150] sm:$0xff]
        %v421 = vld [vmem:[%s316 + $0x158] sm:$0xff]
        %v422 = vld [vmem:[%s316 + $0x160] sm:$0xff]
        %v423 = vld [vmem:[%s316 + $0x168] sm:$0xff]
        %v424 = vld [vmem:[%s316 + $0x170] sm:$0xff]
        %v425 = vld [vmem:[%s316 + $0x178] sm:$0xff]
        %v426 = vld [vmem:[%s316 + $0x180] sm:$0xff]
        %v427 = vld [vmem:[%s316 + $0x188] sm:$0xff]
        %v428 = vld [vmem:[%s316 + $0x190] sm:$0xff]
        %v429 = vld [vmem:[%s316 + $0x198] sm:$0xff]
        %v430 = vld [vmem:[%s316 + $0x1a0] sm:$0xff]
        %v431 = vld [vmem:[%s316 + $0x1a8] sm:$0xff]
        %v432 = vld [vmem:[%s316 + $0x1b0] sm:$0xff]
        %v433 = vld [vmem:[%s316 + $0x1b8] sm:$0xff]
        %v434 = vld [vmem:[%s316 + $0x1c0] sm:$0xff]
        %v435 = vld [vmem:[%s316 + $0x1c8] sm:$0xff]
        %v436 = vld [vmem:[%s316 + $0x1d0] sm:$0xff]
        %v437 = vld [vmem:[%s316 + $0x1d8] sm:$0xff]
        %v438 = vld [vmem:[%s316 + $0x1e0] sm:$0xff]
        %v439 = vld [vmem:[%s316 + $0x1e8] sm:$0xff]
        %v440 = vld [vmem:[%s316 + $0x1f0] sm:$0xff]
        %v441 = vld [vmem:[%s316 + $0x1f8] sm:$0xff]
        %v442 = vld [vmem:[%s316 + $0x200] sm:$0xff]
        %v443 = vld [vmem:[%s316 + $0x208] sm:$0xff]
        %v444 = vld [vmem:[%s316 + $0x210] sm:$0xff]
        %v445 = vld [vmem:[%s316 + $0x218] sm:$0xff]
        %v446 = vld [vmem:[%s316 + $0x220] sm:$0xff]
        %v447 = vld [vmem:[%s316 + $0x228] sm:$0xff]
        %v448 = vld [vmem:[%s316 + $0x230] sm:$0xff]
        %v449 = vld [vmem:[%s316 + $0x238] sm:$0xff]
        %v450 = vld [vmem:[%s316 + $0x240] sm:$0xff]
        %v451 = vld [vmem:[%s316 + $0x248] sm:$0xff]
        %v452 = vld [vmem:[%s316 + $0x250] sm:$0xff]
        %v453 = vld [vmem:[%s316 + $0x258] sm:$0xff]
        %v454 = vld [vmem:[%s316 + $0x260] sm:$0xff]
        %v455 = vld [vmem:[%s316 + $0x268] sm:$0xff]
        %v456 = vld [vmem:[%s316 + $0x270] sm:$0xff]
        %457 = vadd.xlane.f32.xlu0 %v378
        %v458 = vpop.xlane.xlu0 %457
        %459 = vadd.xlane.f32.xlu0 %v379
        %v460 = vpop.xlane.xlu0 %459
        %461 = vadd.xlane.f32.xlu0 %v380
        %v462 = vpop.xlane.xlu0 %461
        %463 = vadd.xlane.f32.xlu0 %v381
        %v464 = vpop.xlane.xlu0 %463
        %465 = vadd.xlane.f32.xlu0 %v382
        %v466 = vpop.xlane.xlu0 %465
        %467 = vadd.xlane.f32.xlu0 %v383
        %v468 = vpop.xlane.xlu0 %467
        %469 = vadd.xlane.f32.xlu0 %v384
        %v470 = vpop.xlane.xlu0 %469
        %471 = vadd.xlane.f32.xlu0 %v385
        %v472 = vpop.xlane.xlu0 %471
        %473 = vadd.xlane.f32.xlu0 %v386
        %v474 = vpop.xlane.xlu0 %473
        %475 = vadd.xlane.f32.xlu0 %v387
        %v476 = vpop.xlane.xlu0 %475
        %477 = vadd.xlane.f32.xlu0 %v388
        %v478 = vpop.xlane.xlu0 %477
        %479 = vadd.xlane.f32.xlu0 %v389
        %v480 = vpop.xlane.xlu0 %479
        %481 = vadd.xlane.f32.xlu0 %v390
        %v482 = vpop.xlane.xlu0 %481
        %483 = vadd.xlane.f32.xlu0 %v391
        %v484 = vpop.xlane.xlu0 %483
        %485 = vadd.xlane.f32.xlu0 %v392
        %v486 = vpop.xlane.xlu0 %485
        %487 = vadd.xlane.f32.xlu0 %v393
        %v488 = vpop.xlane.xlu0 %487
        %489 = vadd.xlane.f32.xlu0 %v394
        %v490 = vpop.xlane.xlu0 %489
        %491 = vadd.xlane.f32.xlu0 %v395
        %v492 = vpop.xlane.xlu0 %491
        %493 = vadd.xlane.f32.xlu0 %v396
        %v494 = vpop.xlane.xlu0 %493
        %495 = vadd.xlane.f32.xlu0 %v397
        %v496 = vpop.xlane.xlu0 %495
        %497 = vadd.xlane.f32.xlu0 %v398
        %v498 = vpop.xlane.xlu0 %497
        %499 = vadd.xlane.f32.xlu0 %v399
        %v500 = vpop.xlane.xlu0 %499
        %501 = vadd.xlane.f32.xlu0 %v400
        %v502 = vpop.xlane.xlu0 %501
        %503 = vadd.xlane.f32.xlu0 %v401
        %v504 = vpop.xlane.xlu0 %503
        %505 = vadd.xlane.f32.xlu0 %v402
        %v506 = vpop.xlane.xlu0 %505
        %507 = vadd.xlane.f32.xlu0 %v403
        %v508 = vpop.xlane.xlu0 %507
        %509 = vadd.xlane.f32.xlu0 %v404
        %v510 = vpop.xlane.xlu0 %509
        %511 = vadd.xlane.f32.xlu0 %v405
        %v512 = vpop.xlane.xlu0 %511
        %513 = vadd.xlane.f32.xlu0 %v406
        %v514 = vpop.xlane.xlu0 %513
        %515 = vadd.xlane.f32.xlu0 %v407
        %v516 = vpop.xlane.xlu0 %515
        %517 = vadd.xlane.f32.xlu0 %v408
        %v518 = vpop.xlane.xlu0 %517
        %519 = vadd.xlane.f32.xlu0 %v409
        %v520 = vpop.xlane.xlu0 %519
        %521 = vadd.xlane.f32.xlu0 %v410
        %v522 = vpop.xlane.xlu0 %521
        %523 = vadd.xlane.f32.xlu0 %v411
        %v524 = vpop.xlane.xlu0 %523
        %525 = vadd.xlane.f32.xlu0 %v412
        %v526 = vpop.xlane.xlu0 %525
        %527 = vadd.xlane.f32.xlu0 %v413
        %v528 = vpop.xlane.xlu0 %527
        %529 = vadd.xlane.f32.xlu0 %v414
        %v530 = vpop.xlane.xlu0 %529
        %531 = vadd.xlane.f32.xlu0 %v415
        %v532 = vpop.xlane.xlu0 %531
        %533 = vadd.xlane.f32.xlu0 %v416
        %v534 = vpop.xlane.xlu0 %533
        %535 = vadd.xlane.f32.xlu0 %v417
        %v536 = vpop.xlane.xlu0 %535
        %537 = vadd.xlane.f32.xlu0 %v418
        %v538 = vpop.xlane.xlu0 %537
        %539 = vadd.xlane.f32.xlu0 %v419
        %v540 = vpop.xlane.xlu0 %539
        %541 = vadd.xlane.f32.xlu0 %v420
        %v542 = vpop.xlane.xlu0 %541
        %543 = vadd.xlane.f32.xlu0 %v421
        %v544 = vpop.xlane.xlu0 %543
        %545 = vadd.xlane.f32.xlu0 %v422
        %v546 = vpop.xlane.xlu0 %545
        %547 = vadd.xlane.f32.xlu0 %v423
        %v548 = vpop.xlane.xlu0 %547
        %549 = vadd.xlane.f32.xlu0 %v424
        %v550 = vpop.xlane.xlu0 %549
        %551 = vadd.xlane.f32.xlu0 %v425
        %v552 = vpop.xlane.xlu0 %551
        %553 = vadd.xlane.f32.xlu0 %v426
        %v554 = vpop.xlane.xlu0 %553
        %555 = vadd.xlane.f32.xlu0 %v427
        %v556 = vpop.xlane.xlu0 %555
        %557 = vadd.xlane.f32.xlu0 %v428
        %v558 = vpop.xlane.xlu0 %557
        %559 = vadd.xlane.f32.xlu0 %v429
        %v560 = vpop.xlane.xlu0 %559
        %561 = vadd.xlane.f32.xlu0 %v430
        %v562 = vpop.xlane.xlu0 %561
        %563 = vadd.xlane.f32.xlu0 %v431
        %v564 = vpop.xlane.xlu0 %563
        %565 = vadd.xlane.f32.xlu0 %v432
        %v566 = vpop.xlane.xlu0 %565
        %567 = vadd.xlane.f32.xlu0 %v433
        %v568 = vpop.xlane.xlu0 %567
        %569 = vadd.xlane.f32.xlu0 %v434
        %v570 = vpop.xlane.xlu0 %569
        %571 = vadd.xlane.f32.xlu0 %v435
        %v572 = vpop.xlane.xlu0 %571
        %573 = vadd.xlane.f32.xlu0 %v436
        %v574 = vpop.xlane.xlu0 %573
        %575 = vadd.xlane.f32.xlu0 %v437
        %v576 = vpop.xlane.xlu0 %575
        %577 = vadd.xlane.f32.xlu0 %v438
        %v578 = vpop.xlane.xlu0 %577
        %579 = vadd.xlane.f32.xlu0 %v439
        %v580 = vpop.xlane.xlu0 %579
        %581 = vadd.xlane.f32.xlu0 %v440
        %v582 = vpop.xlane.xlu0 %581
        %583 = vadd.xlane.f32.xlu0 %v441
        %v584 = vpop.xlane.xlu0 %583
        %585 = vadd.xlane.f32.xlu0 %v442
        %v586 = vpop.xlane.xlu0 %585
        %587 = vadd.xlane.f32.xlu0 %v443
        %v588 = vpop.xlane.xlu0 %587
        %589 = vadd.xlane.f32.xlu0 %v444
        %v590 = vpop.xlane.xlu0 %589
        %591 = vadd.xlane.f32.xlu0 %v445
        %v592 = vpop.xlane.xlu0 %591
        %593 = vadd.xlane.f32.xlu0 %v446
        %v594 = vpop.xlane.xlu0 %593
        %595 = vadd.xlane.f32.xlu0 %v447
        %v596 = vpop.xlane.xlu0 %595
        %597 = vadd.xlane.f32.xlu0 %v448
        %v598 = vpop.xlane.xlu0 %597
        %599 = vadd.xlane.f32.xlu0 %v449
        %v600 = vpop.xlane.xlu0 %599
        %601 = vadd.xlane.f32.xlu0 %v450
        %v602 = vpop.xlane.xlu0 %601
        %603 = vadd.xlane.f32.xlu0 %v451
        %v604 = vpop.xlane.xlu0 %603
        %605 = vadd.xlane.f32.xlu0 %v452
        %v606 = vpop.xlane.xlu0 %605
        %607 = vadd.xlane.f32.xlu0 %v453
        %v608 = vpop.xlane.xlu0 %607
        %609 = vadd.xlane.f32.xlu0 %v454
        %v610 = vpop.xlane.xlu0 %609
        %611 = vadd.xlane.f32.xlu0 %v455
        %v612 = vpop.xlane.xlu0 %611
        %613 = vadd.xlane.f32.xlu0 %v456
        %v614 = vpop.xlane.xlu0 %613
        %v615 = vrcp.pop 128.0
        %v616 = vmul.f32 128.0, %v615
        %v617 = vsub.f32 1.0, %v616
        %v618 = vmul.f32 %v615, %v617
        %v619 = vadd.f32 %v615, %v618
        %vm620 = vweird.f32 %v615
        %v621 = vsel %vm620, %v615, %v619
        %v622 = vmul.f32 %v458, %v621
        %v623 = vmul.f32 %v460, %v621
        %v624 = vmul.f32 %v462, %v621
        %v625 = vmul.f32 %v464, %v621
        %v626 = vmul.f32 %v466, %v621
        %v627 = vmul.f32 %v468, %v621
        %v628 = vmul.f32 %v470, %v621
        %v629 = vmul.f32 %v472, %v621
        %v630 = vmul.f32 %v474, %v621
        %v631 = vmul.f32 %v476, %v621
        %v632 = vmul.f32 %v478, %v621
        %v633 = vmul.f32 %v480, %v621
        %v634 = vmul.f32 %v482, %v621
        %v635 = vmul.f32 %v484, %v621
        %v636 = vmul.f32 %v486, %v621
        %v637 = vmul.f32 %v488, %v621
        %v638 = vmul.f32 %v490, %v621
        %v639 = vmul.f32 %v492, %v621
        %v640 = vmul.f32 %v494, %v621
        %v641 = vmul.f32 %v496, %v621
        %v642 = vmul.f32 %v498, %v621
        %v643 = vmul.f32 %v500, %v621
        %v644 = vmul.f32 %v502, %v621
        %v645 = vmul.f32 %v504, %v621
        %v646 = vmul.f32 %v506, %v621
        %v647 = vmul.f32 %v508, %v621
        %v648 = vmul.f32 %v510, %v621
        %v649 = vmul.f32 %v512, %v621
        %v650 = vmul.f32 %v514, %v621
        %v651 = vmul.f32 %v516, %v621
        %v652 = vmul.f32 %v518, %v621
        %v653 = vmul.f32 %v520, %v621
        %v654 = vmul.f32 %v522, %v621
        %v655 = vmul.f32 %v524, %v621
        %v656 = vmul.f32 %v526, %v621
        %v657 = vmul.f32 %v528, %v621
        %v658 = vmul.f32 %v530, %v621
        %v659 = vmul.f32 %v532, %v621
        %v660 = vmul.f32 %v534, %v621
        %v661 = vmul.f32 %v536, %v621
        %v662 = vmul.f32 %v538, %v621
        %v663 = vmul.f32 %v540, %v621
        %v664 = vmul.f32 %v542, %v621
        %v665 = vmul.f32 %v544, %v621
        %v666 = vmul.f32 %v546, %v621
        %v667 = vmul.f32 %v548, %v621
        %v668 = vmul.f32 %v550, %v621
        %v669 = vmul.f32 %v552, %v621
        %v670 = vmul.f32 %v554, %v621
        %v671 = vmul.f32 %v556, %v621
        %v672 = vmul.f32 %v558, %v621
        %v673 = vmul.f32 %v560, %v621
        %v674 = vmul.f32 %v562, %v621
        %v675 = vmul.f32 %v564, %v621
        %v676 = vmul.f32 %v566, %v621
        %v677 = vmul.f32 %v568, %v621
        %v678 = vmul.f32 %v570, %v621
        %v679 = vmul.f32 %v572, %v621
        %v680 = vmul.f32 %v574, %v621
        %v681 = vmul.f32 %v576, %v621
        %v682 = vmul.f32 %v578, %v621
        %v683 = vmul.f32 %v580, %v621
        %v684 = vmul.f32 %v582, %v621
        %v685 = vmul.f32 %v584, %v621
        %v686 = vmul.f32 %v586, %v621
        %v687 = vmul.f32 %v588, %v621
        %v688 = vmul.f32 %v590, %v621
        %v689 = vmul.f32 %v592, %v621
        %v690 = vmul.f32 %v594, %v621
        %v691 = vmul.f32 %v596, %v621
        %v692 = vmul.f32 %v598, %v621
        %v693 = vmul.f32 %v600, %v621
        %v694 = vmul.f32 %v602, %v621
        %v695 = vmul.f32 %v604, %v621
        %v696 = vmul.f32 %v606, %v621
        %v697 = vmul.f32 %v608, %v621
        %v698 = vmul.f32 %v610, %v621
        %v699 = vmul.f32 %v612, %v621
        %v700 = vmul.f32 %v614, %v621
        %v701 = vsub.f32 %v378, %v622
        %v702 = vsub.f32 %v379, %v623
        %v703 = vsub.f32 %v380, %v624
        %v704 = vsub.f32 %v381, %v625
        %v705 = vsub.f32 %v382, %v626
        %v706 = vsub.f32 %v383, %v627
        %v707 = vsub.f32 %v384, %v628
        %v708 = vsub.f32 %v385, %v629
        %v709 = vsub.f32 %v386, %v630
        %v710 = vsub.f32 %v387, %v631
        %v711 = vsub.f32 %v388, %v632
        %v712 = vsub.f32 %v389, %v633
        %v713 = vsub.f32 %v390, %v634
        %v714 = vsub.f32 %v391, %v635
        %v715 = vsub.f32 %v392, %v636
        %v716 = vsub.f32 %v393, %v637
        %v717 = vsub.f32 %v394, %v638
        %v718 = vsub.f32 %v395, %v639
        %v719 = vsub.f32 %v396, %v640
        %v720 = vsub.f32 %v397, %v641
        %v721 = vsub.f32 %v398, %v642
        %v722 = vsub.f32 %v399, %v643
        %v723 = vsub.f32 %v400, %v644
        %v724 = vsub.f32 %v401, %v645
        %v725 = vsub.f32 %v402, %v646
        %v726 = vsub.f32 %v403, %v647
        %v727 = vsub.f32 %v404, %v648
        %v728 = vsub.f32 %v405, %v649
        %v729 = vsub.f32 %v406, %v650
        %v730 = vsub.f32 %v407, %v651
        %v731 = vsub.f32 %v408, %v652
        %v732 = vsub.f32 %v409, %v653
        %v733 = vsub.f32 %v410, %v654
        %v734 = vsub.f32 %v411, %v655
        %v735 = vsub.f32 %v412, %v656
        %v736 = vsub.f32 %v413, %v657
        %v737 = vsub.f32 %v414, %v658
        %v738 = vsub.f32 %v415, %v659
        %v739 = vsub.f32 %v416, %v660
        %v740 = vsub.f32 %v417, %v661
        %v741 = vsub.f32 %v418, %v662
        %v742 = vsub.f32 %v419, %v663
        %v743 = vsub.f32 %v420, %v664
        %v744 = vsub.f32 %v421, %v665
        %v745 = vsub.f32 %v422, %v666
        %v746 = vsub.f32 %v423, %v667
        %v747 = vsub.f32 %v424, %v668
        %v748 = vsub.f32 %v425, %v669
        %v749 = vsub.f32 %v426, %v670
        %v750 = vsub.f32 %v427, %v671
        %v751 = vsub.f32 %v428, %v672
        %v752 = vsub.f32 %v429, %v673
        %v753 = vsub.f32 %v430, %v674
        %v754 = vsub.f32 %v431, %v675
        %v755 = vsub.f32 %v432, %v676
        %v756 = vsub.f32 %v433, %v677
        %v757 = vsub.f32 %v434, %v678
        %v758 = vsub.f32 %v435, %v679
        %v759 = vsub.f32 %v436, %v680
        %v760 = vsub.f32 %v437, %v681
        %v761 = vsub.f32 %v438, %v682
        %v762 = vsub.f32 %v439, %v683
        %v763 = vsub.f32 %v440, %v684
        %v764 = vsub.f32 %v441, %v685
        %v765 = vsub.f32 %v442, %v686
        %v766 = vsub.f32 %v443, %v687
        %v767 = vsub.f32 %v444, %v688
        %v768 = vsub.f32 %v445, %v689
        %v769 = vsub.f32 %v446, %v690
        %v770 = vsub.f32 %v447, %v691
        %v771 = vsub.f32 %v448, %v692
        %v772 = vsub.f32 %v449, %v693
        %v773 = vsub.f32 %v450, %v694
        %v774 = vsub.f32 %v451, %v695
        %v775 = vsub.f32 %v452, %v696
        %v776 = vsub.f32 %v453, %v697
        %v777 = vsub.f32 %v454, %v698
        %v778 = vsub.f32 %v455, %v699
        %v779 = vsub.f32 %v456, %v700
        %v780 = vmul.f32 %v701, %v701
        %v781 = vmul.f32 %v702, %v702
        %v782 = vmul.f32 %v703, %v703
        %v783 = vmul.f32 %v704, %v704
        %v784 = vmul.f32 %v705, %v705
        %v785 = vmul.f32 %v706, %v706
        %v786 = vmul.f32 %v707, %v707
        %v787 = vmul.f32 %v708, %v708
        %v788 = vmul.f32 %v709, %v709
        %v789 = vmul.f32 %v710, %v710
        %v790 = vmul.f32 %v711, %v711
        %v791 = vmul.f32 %v712, %v712
        %v792 = vmul.f32 %v713, %v713
        %v793 = vmul.f32 %v714, %v714
        %v794 = vmul.f32 %v715, %v715
        %v795 = vmul.f32 %v716, %v716
        %v796 = vmul.f32 %v717, %v717
        %v797 = vmul.f32 %v718, %v718
        %v798 = vmul.f32 %v719, %v719
        %v799 = vmul.f32 %v720, %v720
        %v800 = vmul.f32 %v721, %v721
        %v801 = vmul.f32 %v722, %v722
        %v802 = vmul.f32 %v723, %v723
        %v803 = vmul.f32 %v724, %v724
        %v804 = vmul.f32 %v725, %v725
        %v805 = vmul.f32 %v726, %v726
        %v806 = vmul.f32 %v727, %v727
        %v807 = vmul.f32 %v728, %v728
        %v808 = vmul.f32 %v729, %v729
        %v809 = vmul.f32 %v730, %v730
        %v810 = vmul.f32 %v731, %v731
        %v811 = vmul.f32 %v732, %v732
        %v812 = vmul.f32 %v733, %v733
        %v813 = vmul.f32 %v734, %v734
        %v814 = vmul.f32 %v735, %v735
        %v815 = vmul.f32 %v736, %v736
        %v816 = vmul.f32 %v737, %v737
        %v817 = vmul.f32 %v738, %v738
        %v818 = vmul.f32 %v739, %v739
        %v819 = vmul.f32 %v740, %v740
        %v820 = vmul.f32 %v741, %v741
        %v821 = vmul.f32 %v742, %v742
        %v822 = vmul.f32 %v743, %v743
        %v823 = vmul.f32 %v744, %v744
        %v824 = vmul.f32 %v745, %v745
        %v825 = vmul.f32 %v746, %v746
        %v826 = vmul.f32 %v747, %v747
        %v827 = vmul.f32 %v748, %v748
        %v828 = vmul.f32 %v749, %v749
        %v829 = vmul.f32 %v750, %v750
        %v830 = vmul.f32 %v751, %v751
        %v831 = vmul.f32 %v752, %v752
        %v832 = vmul.f32 %v753, %v753
        %v833 = vmul.f32 %v754, %v754
        %v834 = vmul.f32 %v755, %v755
        %v835 = vmul.f32 %v756, %v756
        %v836 = vmul.f32 %v757, %v757
        %v837 = vmul.f32 %v758, %v758
        %v838 = vmul.f32 %v759, %v759
        %v839 = vmul.f32 %v760, %v760
        %v840 = vmul.f32 %v761, %v761
        %v841 = vmul.f32 %v762, %v762
        %v842 = vmul.f32 %v763, %v763
        %v843 = vmul.f32 %v764, %v764
        %v844 = vmul.f32 %v765, %v765
        %v845 = vmul.f32 %v766, %v766
        %v846 = vmul.f32 %v767, %v767
        %v847 = vmul.f32 %v768, %v768
        %v848 = vmul.f32 %v769, %v769
        %v849 = vmul.f32 %v770, %v770
        %v850 = vmul.f32 %v771, %v771
        %v851 = vmul.f32 %v772, %v772
        %v852 = vmul.f32 %v773, %v773
        %v853 = vmul.f32 %v774, %v774
        %v854 = vmul.f32 %v775, %v775
        %v855 = vmul.f32 %v776, %v776
        %v856 = vmul.f32 %v777, %v777
        %v857 = vmul.f32 %v778, %v778
        %v858 = vmul.f32 %v779, %v779
        %859 = vadd.xlane.f32.xlu0 %v780
        %v860 = vpop.xlane.xlu0 %859
        %861 = vadd.xlane.f32.xlu0 %v781
        %v862 = vpop.xlane.xlu0 %861
        %863 = vadd.xlane.f32.xlu0 %v782
        %v864 = vpop.xlane.xlu0 %863
        %865 = vadd.xlane.f32.xlu0 %v783
        %v866 = vpop.xlane.xlu0 %865
        %867 = vadd.xlane.f32.xlu0 %v784
        %v868 = vpop.xlane.xlu0 %867
        %869 = vadd.xlane.f32.xlu0 %v785
        %v870 = vpop.xlane.xlu0 %869
        %871 = vadd.xlane.f32.xlu0 %v786
        %v872 = vpop.xlane.xlu0 %871
        %873 = vadd.xlane.f32.xlu0 %v787
        %v874 = vpop.xlane.xlu0 %873
        %875 = vadd.xlane.f32.xlu0 %v788
        %v876 = vpop.xlane.xlu0 %875
        %877 = vadd.xlane.f32.xlu0 %v789
        %v878 = vpop.xlane.xlu0 %877
        %879 = vadd.xlane.f32.xlu0 %v790
        %v880 = vpop.xlane.xlu0 %879
        %881 = vadd.xlane.f32.xlu0 %v791
        %v882 = vpop.xlane.xlu0 %881
        %883 = vadd.xlane.f32.xlu0 %v792
        %v884 = vpop.xlane.xlu0 %883
        %885 = vadd.xlane.f32.xlu0 %v793
        %v886 = vpop.xlane.xlu0 %885
        %887 = vadd.xlane.f32.xlu0 %v794
        %v888 = vpop.xlane.xlu0 %887
        %889 = vadd.xlane.f32.xlu0 %v795
        %v890 = vpop.xlane.xlu0 %889
        %891 = vadd.xlane.f32.xlu0 %v796
        %v892 = vpop.xlane.xlu0 %891
        %893 = vadd.xlane.f32.xlu0 %v797
        %v894 = vpop.xlane.xlu0 %893
        %895 = vadd.xlane.f32.xlu0 %v798
        %v896 = vpop.xlane.xlu0 %895
        %897 = vadd.xlane.f32.xlu0 %v799
        %v898 = vpop.xlane.xlu0 %897
        %899 = vadd.xlane.f32.xlu0 %v800
        %v900 = vpop.xlane.xlu0 %899
        %901 = vadd.xlane.f32.xlu0 %v801
        %v902 = vpop.xlane.xlu0 %901
        %903 = vadd.xlane.f32.xlu0 %v802
        %v904 = vpop.xlane.xlu0 %903
        %905 = vadd.xlane.f32.xlu0 %v803
        %v906 = vpop.xlane.xlu0 %905
        %907 = vadd.xlane.f32.xlu0 %v804
        %v908 = vpop.xlane.xlu0 %907
        %909 = vadd.xlane.f32.xlu0 %v805
        %v910 = vpop.xlane.xlu0 %909
        %911 = vadd.xlane.f32.xlu0 %v806
        %v912 = vpop.xlane.xlu0 %911
        %913 = vadd.xlane.f32.xlu0 %v807
        %v914 = vpop.xlane.xlu0 %913
        %915 = vadd.xlane.f32.xlu0 %v808
        %v916 = vpop.xlane.xlu0 %915
        %917 = vadd.xlane.f32.xlu0 %v809
        %v918 = vpop.xlane.xlu0 %917
        %919 = vadd.xlane.f32.xlu0 %v810
        %v920 = vpop.xlane.xlu0 %919
        %921 = vadd.xlane.f32.xlu0 %v811
        %v922 = vpop.xlane.xlu0 %921
        %923 = vadd.xlane.f32.xlu0 %v812
        %v924 = vpop.xlane.xlu0 %923
        %925 = vadd.xlane.f32.xlu0 %v813
        %v926 = vpop.xlane.xlu0 %925
        %927 = vadd.xlane.f32.xlu0 %v814
        %v928 = vpop.xlane.xlu0 %927
        %929 = vadd.xlane.f32.xlu0 %v815
        %v930 = vpop.xlane.xlu0 %929
        %931 = vadd.xlane.f32.xlu0 %v816
        %v932 = vpop.xlane.xlu0 %931
        %933 = vadd.xlane.f32.xlu0 %v817
        %v934 = vpop.xlane.xlu0 %933
        %935 = vadd.xlane.f32.xlu0 %v818
        %v936 = vpop.xlane.xlu0 %935
        %937 = vadd.xlane.f32.xlu0 %v819
        %v938 = vpop.xlane.xlu0 %937
        %939 = vadd.xlane.f32.xlu0 %v820
        %v940 = vpop.xlane.xlu0 %939
        %941 = vadd.xlane.f32.xlu0 %v821
        %v942 = vpop.xlane.xlu0 %941
        %943 = vadd.xlane.f32.xlu0 %v822
        %v944 = vpop.xlane.xlu0 %943
        %945 = vadd.xlane.f32.xlu0 %v823
        %v946 = vpop.xlane.xlu0 %945
        %947 = vadd.xlane.f32.xlu0 %v824
        %v948 = vpop.xlane.xlu0 %947
        %949 = vadd.xlane.f32.xlu0 %v825
        %v950 = vpop.xlane.xlu0 %949
        %951 = vadd.xlane.f32.xlu0 %v826
        %v952 = vpop.xlane.xlu0 %951
        %953 = vadd.xlane.f32.xlu0 %v827
        %v954 = vpop.xlane.xlu0 %953
        %955 = vadd.xlane.f32.xlu0 %v828
        %v956 = vpop.xlane.xlu0 %955
        %957 = vadd.xlane.f32.xlu0 %v829
        %v958 = vpop.xlane.xlu0 %957
        %959 = vadd.xlane.f32.xlu0 %v830
        %v960 = vpop.xlane.xlu0 %959
        %961 = vadd.xlane.f32.xlu0 %v831
        %v962 = vpop.xlane.xlu0 %961
        %963 = vadd.xlane.f32.xlu0 %v832
        %v964 = vpop.xlane.xlu0 %963
        %965 = vadd.xlane.f32.xlu0 %v833
        %v966 = vpop.xlane.xlu0 %965
        %967 = vadd.xlane.f32.xlu0 %v834
        %v968 = vpop.xlane.xlu0 %967
        %969 = vadd.xlane.f32.xlu0 %v835
        %v970 = vpop.xlane.xlu0 %969
        %971 = vadd.xlane.f32.xlu0 %v836
        %v972 = vpop.xlane.xlu0 %971
        %973 = vadd.xlane.f32.xlu0 %v837
        %v974 = vpop.xlane.xlu0 %973
        %975 = vadd.xlane.f32.xlu0 %v838
        %v976 = vpop.xlane.xlu0 %975
        %977 = vadd.xlane.f32.xlu0 %v839
        %v978 = vpop.xlane.xlu0 %977
        %979 = vadd.xlane.f32.xlu0 %v840
        %v980 = vpop.xlane.xlu0 %979
        %981 = vadd.xlane.f32.xlu0 %v841
        %v982 = vpop.xlane.xlu0 %981
        %983 = vadd.xlane.f32.xlu0 %v842
        %v984 = vpop.xlane.xlu0 %983
        %985 = vadd.xlane.f32.xlu0 %v843
        %v986 = vpop.xlane.xlu0 %985
        %987 = vadd.xlane.f32.xlu0 %v844
        %v988 = vpop.xlane.xlu0 %987
        %989 = vadd.xlane.f32.xlu0 %v845
        %v990 = vpop.xlane.xlu0 %989
        %991 = vadd.xlane.f32.xlu0 %v846
        %v992 = vpop.xlane.xlu0 %991
        %993 = vadd.xlane.f32.xlu0 %v847
        %v994 = vpop.xlane.xlu0 %993
        %995 = vadd.xlane.f32.xlu0 %v848
        %v996 = vpop.xlane.xlu0 %995
        %997 = vadd.xlane.f32.xlu0 %v849
        %v998 = vpop.xlane.xlu0 %997
        %999 = vadd.xlane.f32.xlu0 %v850
        %v1000 = vpop.xlane.xlu0 %999
        %1001 = vadd.xlane.f32.xlu0 %v851
        %v1002 = vpop.xlane.xlu0 %1001
        %1003 = vadd.xlane.f32.xlu0 %v852
        %v1004 = vpop.xlane.xlu0 %1003
        %1005 = vadd.xlane.f32.xlu0 %v853
        %v1006 = vpop.xlane.xlu0 %1005
        %1007 = vadd.xlane.f32.xlu0 %v854
        %v1008 = vpop.xlane.xlu0 %1007
        %1009 = vadd.xlane.f32.xlu0 %v855
        %v1010 = vpop.xlane.xlu0 %1009
        %1011 = vadd.xlane.f32.xlu0 %v856
        %v1012 = vpop.xlane.xlu0 %1011
        %1013 = vadd.xlane.f32.xlu0 %v857
        %v1014 = vpop.xlane.xlu0 %1013
        %1015 = vadd.xlane.f32.xlu0 %v858
        %v1016 = vpop.xlane.xlu0 %1015
        %v1017 = vmul.f32 %v860, %v621
        %v1018 = vmul.f32 %v862, %v621
        %v1019 = vmul.f32 %v864, %v621
        %v1020 = vmul.f32 %v866, %v621
        %v1021 = vmul.f32 %v868, %v621
        %v1022 = vmul.f32 %v870, %v621
        %v1023 = vmul.f32 %v872, %v621
        %v1024 = vmul.f32 %v874, %v621
        %v1025 = vmul.f32 %v876, %v621
        %v1026 = vmul.f32 %v878, %v621
        %v1027 = vmul.f32 %v880, %v621
        %v1028 = vmul.f32 %v882, %v621
        %v1029 = vmul.f32 %v884, %v621
        %v1030 = vmul.f32 %v886, %v621
        %v1031 = vmul.f32 %v888, %v621
        %v1032 = vmul.f32 %v890, %v621
        %v1033 = vmul.f32 %v892, %v621
        %v1034 = vmul.f32 %v894, %v621
        %v1035 = vmul.f32 %v896, %v621
        %v1036 = vmul.f32 %v898, %v621
        %v1037 = vmul.f32 %v900, %v621
        %v1038 = vmul.f32 %v902, %v621
        %v1039 = vmul.f32 %v904, %v621
        %v1040 = vmul.f32 %v906, %v621
        %v1041 = vmul.f32 %v908, %v621
        %v1042 = vmul.f32 %v910, %v621
        %v1043 = vmul.f32 %v912, %v621
        %v1044 = vmul.f32 %v914, %v621
        %v1045 = vmul.f32 %v916, %v621
        %v1046 = vmul.f32 %v918, %v621
        %v1047 = vmul.f32 %v920, %v621
        %v1048 = vmul.f32 %v922, %v621
        %v1049 = vmul.f32 %v924, %v621
        %v1050 = vmul.f32 %v926, %v621
        %v1051 = vmul.f32 %v928, %v621
        %v1052 = vmul.f32 %v930, %v621
        %v1053 = vmul.f32 %v932, %v621
        %v1054 = vmul.f32 %v934, %v621
        %v1055 = vmul.f32 %v936, %v621
        %v1056 = vmul.f32 %v938, %v621
        %v1057 = vmul.f32 %v940, %v621
        %v1058 = vmul.f32 %v942, %v621
        %v1059 = vmul.f32 %v944, %v621
        %v1060 = vmul.f32 %v946, %v621
        %v1061 = vmul.f32 %v948, %v621
        %v1062 = vmul.f32 %v950, %v621
        %v1063 = vmul.f32 %v952, %v621
        %v1064 = vmul.f32 %v954, %v621
        %v1065 = vmul.f32 %v956, %v621
        %v1066 = vmul.f32 %v958, %v621
        %v1067 = vmul.f32 %v960, %v621
        %v1068 = vmul.f32 %v962, %v621
        %v1069 = vmul.f32 %v964, %v621
        %v1070 = vmul.f32 %v966, %v621
        %v1071 = vmul.f32 %v968, %v621
        %v1072 = vmul.f32 %v970, %v621
        %v1073 = vmul.f32 %v972, %v621
        %v1074 = vmul.f32 %v974, %v621
        %v1075 = vmul.f32 %v976, %v621
        %v1076 = vmul.f32 %v978, %v621
        %v1077 = vmul.f32 %v980, %v621
        %v1078 = vmul.f32 %v982, %v621
        %v1079 = vmul.f32 %v984, %v621
        %v1080 = vmul.f32 %v986, %v621
        %v1081 = vmul.f32 %v988, %v621
        %v1082 = vmul.f32 %v990, %v621
        %v1083 = vmul.f32 %v992, %v621
        %v1084 = vmul.f32 %v994, %v621
        %v1085 = vmul.f32 %v996, %v621
        %v1086 = vmul.f32 %v998, %v621
        %v1087 = vmul.f32 %v1000, %v621
        %v1088 = vmul.f32 %v1002, %v621
        %v1089 = vmul.f32 %v1004, %v621
        %v1090 = vmul.f32 %v1006, %v621
        %v1091 = vmul.f32 %v1008, %v621
        %v1092 = vmul.f32 %v1010, %v621
        %v1093 = vmul.f32 %v1012, %v621
        %v1094 = vmul.f32 %v1014, %v621
        %v1095 = vmul.f32 %v1016, %v621
        %v1096 = vadd.f32 %v1017, 1e-05
        %v1097 = vadd.f32 %v1018, 1e-05
        %v1098 = vadd.f32 %v1019, 1e-05
        %v1099 = vadd.f32 %v1020, 1e-05
        %v1100 = vadd.f32 %v1021, 1e-05
        %v1101 = vadd.f32 %v1022, 1e-05
        %v1102 = vadd.f32 %v1023, 1e-05
        %v1103 = vadd.f32 %v1024, 1e-05
        %v1104 = vadd.f32 %v1025, 1e-05
        %v1105 = vadd.f32 %v1026, 1e-05
        %v1106 = vadd.f32 %v1027, 1e-05
        %v1107 = vadd.f32 %v1028, 1e-05
        %v1108 = vadd.f32 %v1029, 1e-05
        %v1109 = vadd.f32 %v1030, 1e-05
        %v1110 = vadd.f32 %v1031, 1e-05
        %v1111 = vadd.f32 %v1032, 1e-05
        %v1112 = vadd.f32 %v1033, 1e-05
        %v1113 = vadd.f32 %v1034, 1e-05
        %v1114 = vadd.f32 %v1035, 1e-05
        %v1115 = vadd.f32 %v1036, 1e-05
        %v1116 = vadd.f32 %v1037, 1e-05
        %v1117 = vadd.f32 %v1038, 1e-05
        %v1118 = vadd.f32 %v1039, 1e-05
        %v1119 = vadd.f32 %v1040, 1e-05
        %v1120 = vadd.f32 %v1041, 1e-05
        %v1121 = vadd.f32 %v1042, 1e-05
        %v1122 = vadd.f32 %v1043, 1e-05
        %v1123 = vadd.f32 %v1044, 1e-05
        %v1124 = vadd.f32 %v1045, 1e-05
        %v1125 = vadd.f32 %v1046, 1e-05
        %v1126 = vadd.f32 %v1047, 1e-05
        %v1127 = vadd.f32 %v1048, 1e-05
        %v1128 = vadd.f32 %v1049, 1e-05
        %v1129 = vadd.f32 %v1050, 1e-05
        %v1130 = vadd.f32 %v1051, 1e-05
        %v1131 = vadd.f32 %v1052, 1e-05
        %v1132 = vadd.f32 %v1053, 1e-05
        %v1133 = vadd.f32 %v1054, 1e-05
        %v1134 = vadd.f32 %v1055, 1e-05
        %v1135 = vadd.f32 %v1056, 1e-05
        %v1136 = vadd.f32 %v1057, 1e-05
        %v1137 = vadd.f32 %v1058, 1e-05
        %v1138 = vadd.f32 %v1059, 1e-05
        %v1139 = vadd.f32 %v1060, 1e-05
        %v1140 = vadd.f32 %v1061, 1e-05
        %v1141 = vadd.f32 %v1062, 1e-05
        %v1142 = vadd.f32 %v1063, 1e-05
        %v1143 = vadd.f32 %v1064, 1e-05
        %v1144 = vadd.f32 %v1065, 1e-05
        %v1145 = vadd.f32 %v1066, 1e-05
        %v1146 = vadd.f32 %v1067, 1e-05
        %v1147 = vadd.f32 %v1068, 1e-05
        %v1148 = vadd.f32 %v1069, 1e-05
        %v1149 = vadd.f32 %v1070, 1e-05
        %v1150 = vadd.f32 %v1071, 1e-05
        %v1151 = vadd.f32 %v1072, 1e-05
        %v1152 = vadd.f32 %v1073, 1e-05
        %v1153 = vadd.f32 %v1074, 1e-05
        %v1154 = vadd.f32 %v1075, 1e-05
        %v1155 = vadd.f32 %v1076, 1e-05
        %v1156 = vadd.f32 %v1077, 1e-05
        %v1157 = vadd.f32 %v1078, 1e-05
        %v1158 = vadd.f32 %v1079, 1e-05
        %v1159 = vadd.f32 %v1080, 1e-05
        %v1160 = vadd.f32 %v1081, 1e-05
        %v1161 = vadd.f32 %v1082, 1e-05
        %v1162 = vadd.f32 %v1083, 1e-05
        %v1163 = vadd.f32 %v1084, 1e-05
        %v1164 = vadd.f32 %v1085, 1e-05
        %v1165 = vadd.f32 %v1086, 1e-05
        %v1166 = vadd.f32 %v1087, 1e-05
        %v1167 = vadd.f32 %v1088, 1e-05
        %v1168 = vadd.f32 %v1089, 1e-05
        %v1169 = vadd.f32 %v1090, 1e-05
        %v1170 = vadd.f32 %v1091, 1e-05
        %v1171 = vadd.f32 %v1092, 1e-05
        %v1172 = vadd.f32 %v1093, 1e-05
        %v1173 = vadd.f32 %v1094, 1e-05
        %v1174 = vadd.f32 %v1095, 1e-05
        %v1175 = vrsqrt.pop %v1096
        %v1176 = vmul.f32 %v1175, %v1096
        %v1177 = vmul.f32 %v1176, %v1175
        %v1178 = vmul.f32 0.5, %v1177
        %v1179 = vsub.f32 1.5, %v1178
        %v1180 = vmul.f32 %v1175, %v1179
        %vm1181 = vweird.f32 %v1096
        %vm1182 = vweird.f32 %v1175
        %vm1183 = vmor %vm1181, %vm1182
        %v1184 = vsel %vm1183, %v1175, %v1180
        %v1185 = vrsqrt.pop %v1097
        %v1186 = vmul.f32 %v1185, %v1097
        %v1187 = vmul.f32 %v1186, %v1185
        %v1188 = vmul.f32 0.5, %v1187
        %v1189 = vsub.f32 1.5, %v1188
        %v1190 = vmul.f32 %v1185, %v1189
        %vm1191 = vweird.f32 %v1097
        %vm1192 = vweird.f32 %v1185
        %vm1193 = vmor %vm1191, %vm1192
        %v1194 = vsel %vm1193, %v1185, %v1190
        %v1195 = vrsqrt.pop %v1098
        %v1196 = vmul.f32 %v1195, %v1098
        %v1197 = vmul.f32 %v1196, %v1195
        %v1198 = vmul.f32 0.5, %v1197
        %v1199 = vsub.f32 1.5, %v1198
        %v1200 = vmul.f32 %v1195, %v1199
        %vm1201 = vweird.f32 %v1098
        %vm1202 = vweird.f32 %v1195
        %vm1203 = vmor %vm1201, %vm1202
        %v1204 = vsel %vm1203, %v1195, %v1200
        %v1205 = vrsqrt.pop %v1099
        %v1206 = vmul.f32 %v1205, %v1099
        %v1207 = vmul.f32 %v1206, %v1205
        %v1208 = vmul.f32 0.5, %v1207
        %v1209 = vsub.f32 1.5, %v1208
        %v1210 = vmul.f32 %v1205, %v1209
        %vm1211 = vweird.f32 %v1099
        %vm1212 = vweird.f32 %v1205
        %vm1213 = vmor %vm1211, %vm1212
        %v1214 = vsel %vm1213, %v1205, %v1210
        %v1215 = vrsqrt.pop %v1100
        %v1216 = vmul.f32 %v1215, %v1100
        %v1217 = vmul.f32 %v1216, %v1215
        %v1218 = vmul.f32 0.5, %v1217
        %v1219 = vsub.f32 1.5, %v1218
        %v1220 = vmul.f32 %v1215, %v1219
        %vm1221 = vweird.f32 %v1100
        %vm1222 = vweird.f32 %v1215
        %vm1223 = vmor %vm1221, %vm1222
        %v1224 = vsel %vm1223, %v1215, %v1220
        %v1225 = vrsqrt.pop %v1101
        %v1226 = vmul.f32 %v1225, %v1101
        %v1227 = vmul.f32 %v1226, %v1225
        %v1228 = vmul.f32 0.5, %v1227
        %v1229 = vsub.f32 1.5, %v1228
        %v1230 = vmul.f32 %v1225, %v1229
        %vm1231 = vweird.f32 %v1101
        %vm1232 = vweird.f32 %v1225
        %vm1233 = vmor %vm1231, %vm1232
        %v1234 = vsel %vm1233, %v1225, %v1230
        %v1235 = vrsqrt.pop %v1102
        %v1236 = vmul.f32 %v1235, %v1102
        %v1237 = vmul.f32 %v1236, %v1235
        %v1238 = vmul.f32 0.5, %v1237
        %v1239 = vsub.f32 1.5, %v1238
        %v1240 = vmul.f32 %v1235, %v1239
        %vm1241 = vweird.f32 %v1102
        %vm1242 = vweird.f32 %v1235
        %vm1243 = vmor %vm1241, %vm1242
        %v1244 = vsel %vm1243, %v1235, %v1240
        %v1245 = vrsqrt.pop %v1103
        %v1246 = vmul.f32 %v1245, %v1103
        %v1247 = vmul.f32 %v1246, %v1245
        %v1248 = vmul.f32 0.5, %v1247
        %v1249 = vsub.f32 1.5, %v1248
        %v1250 = vmul.f32 %v1245, %v1249
        %vm1251 = vweird.f32 %v1103
        %vm1252 = vweird.f32 %v1245
        %vm1253 = vmor %vm1251, %vm1252
        %v1254 = vsel %vm1253, %v1245, %v1250
        %v1255 = vrsqrt.pop %v1104
        %v1256 = vmul.f32 %v1255, %v1104
        %v1257 = vmul.f32 %v1256, %v1255
        %v1258 = vmul.f32 0.5, %v1257
        %v1259 = vsub.f32 1.5, %v1258
        %v1260 = vmul.f32 %v1255, %v1259
        %vm1261 = vweird.f32 %v1104
        %vm1262 = vweird.f32 %v1255
        %vm1263 = vmor %vm1261, %vm1262
        %v1264 = vsel %vm1263, %v1255, %v1260
        %v1265 = vrsqrt.pop %v1105
        %v1266 = vmul.f32 %v1265, %v1105
        %v1267 = vmul.f32 %v1266, %v1265
        %v1268 = vmul.f32 0.5, %v1267
        %v1269 = vsub.f32 1.5, %v1268
        %v1270 = vmul.f32 %v1265, %v1269
        %vm1271 = vweird.f32 %v1105
        %vm1272 = vweird.f32 %v1265
        %vm1273 = vmor %vm1271, %vm1272
        %v1274 = vsel %vm1273, %v1265, %v1270
        %v1275 = vrsqrt.pop %v1106
        %v1276 = vmul.f32 %v1275, %v1106
        %v1277 = vmul.f32 %v1276, %v1275
        %v1278 = vmul.f32 0.5, %v1277
        %v1279 = vsub.f32 1.5, %v1278
        %v1280 = vmul.f32 %v1275, %v1279
        %vm1281 = vweird.f32 %v1106
        %vm1282 = vweird.f32 %v1275
        %vm1283 = vmor %vm1281, %vm1282
        %v1284 = vsel %vm1283, %v1275, %v1280
        %v1285 = vrsqrt.pop %v1107
        %v1286 = vmul.f32 %v1285, %v1107
        %v1287 = vmul.f32 %v1286, %v1285
        %v1288 = vmul.f32 0.5, %v1287
        %v1289 = vsub.f32 1.5, %v1288
        %v1290 = vmul.f32 %v1285, %v1289
        %vm1291 = vweird.f32 %v1107
        %vm1292 = vweird.f32 %v1285
        %vm1293 = vmor %vm1291, %vm1292
        %v1294 = vsel %vm1293, %v1285, %v1290
        %v1295 = vrsqrt.pop %v1108
        %v1296 = vmul.f32 %v1295, %v1108
        %v1297 = vmul.f32 %v1296, %v1295
        %v1298 = vmul.f32 0.5, %v1297
        %v1299 = vsub.f32 1.5, %v1298
        %v1300 = vmul.f32 %v1295, %v1299
        %vm1301 = vweird.f32 %v1108
        %vm1302 = vweird.f32 %v1295
        %vm1303 = vmor %vm1301, %vm1302
        %v1304 = vsel %vm1303, %v1295, %v1300
        %v1305 = vrsqrt.pop %v1109
        %v1306 = vmul.f32 %v1305, %v1109
        %v1307 = vmul.f32 %v1306, %v1305
        %v1308 = vmul.f32 0.5, %v1307
        %v1309 = vsub.f32 1.5, %v1308
        %v1310 = vmul.f32 %v1305, %v1309
        %vm1311 = vweird.f32 %v1109
        %vm1312 = vweird.f32 %v1305
        %vm1313 = vmor %vm1311, %vm1312
        %v1314 = vsel %vm1313, %v1305, %v1310
        %v1315 = vrsqrt.pop %v1110
        %v1316 = vmul.f32 %v1315, %v1110
        %v1317 = vmul.f32 %v1316, %v1315
        %v1318 = vmul.f32 0.5, %v1317
        %v1319 = vsub.f32 1.5, %v1318
        %v1320 = vmul.f32 %v1315, %v1319
        %vm1321 = vweird.f32 %v1110
        %vm1322 = vweird.f32 %v1315
        %vm1323 = vmor %vm1321, %vm1322
        %v1324 = vsel %vm1323, %v1315, %v1320
        %v1325 = vrsqrt.pop %v1111
        %v1326 = vmul.f32 %v1325, %v1111
        %v1327 = vmul.f32 %v1326, %v1325
        %v1328 = vmul.f32 0.5, %v1327
        %v1329 = vsub.f32 1.5, %v1328
        %v1330 = vmul.f32 %v1325, %v1329
        %vm1331 = vweird.f32 %v1111
        %vm1332 = vweird.f32 %v1325
        %vm1333 = vmor %vm1331, %vm1332
        %v1334 = vsel %vm1333, %v1325, %v1330
        %v1335 = vrsqrt.pop %v1112
        %v1336 = vmul.f32 %v1335, %v1112
        %v1337 = vmul.f32 %v1336, %v1335
        %v1338 = vmul.f32 0.5, %v1337
        %v1339 = vsub.f32 1.5, %v1338
        %v1340 = vmul.f32 %v1335, %v1339
        %vm1341 = vweird.f32 %v1112
        %vm1342 = vweird.f32 %v1335
        %vm1343 = vmor %vm1341, %vm1342
        %v1344 = vsel %vm1343, %v1335, %v1340
        %v1345 = vrsqrt.pop %v1113
        %v1346 = vmul.f32 %v1345, %v1113
        %v1347 = vmul.f32 %v1346, %v1345
        %v1348 = vmul.f32 0.5, %v1347
        %v1349 = vsub.f32 1.5, %v1348
        %v1350 = vmul.f32 %v1345, %v1349
        %vm1351 = vweird.f32 %v1113
        %vm1352 = vweird.f32 %v1345
        %vm1353 = vmor %vm1351, %vm1352
        %v1354 = vsel %vm1353, %v1345, %v1350
        %v1355 = vrsqrt.pop %v1114
        %v1356 = vmul.f32 %v1355, %v1114
        %v1357 = vmul.f32 %v1356, %v1355
        %v1358 = vmul.f32 0.5, %v1357
        %v1359 = vsub.f32 1.5, %v1358
        %v1360 = vmul.f32 %v1355, %v1359
        %vm1361 = vweird.f32 %v1114
        %vm1362 = vweird.f32 %v1355
        %vm1363 = vmor %vm1361, %vm1362
        %v1364 = vsel %vm1363, %v1355, %v1360
        %v1365 = vrsqrt.pop %v1115
        %v1366 = vmul.f32 %v1365, %v1115
        %v1367 = vmul.f32 %v1366, %v1365
        %v1368 = vmul.f32 0.5, %v1367
        %v1369 = vsub.f32 1.5, %v1368
        %v1370 = vmul.f32 %v1365, %v1369
        %vm1371 = vweird.f32 %v1115
        %vm1372 = vweird.f32 %v1365
        %vm1373 = vmor %vm1371, %vm1372
        %v1374 = vsel %vm1373, %v1365, %v1370
        %v1375 = vrsqrt.pop %v1116
        %v1376 = vmul.f32 %v1375, %v1116
        %v1377 = vmul.f32 %v1376, %v1375
        %v1378 = vmul.f32 0.5, %v1377
        %v1379 = vsub.f32 1.5, %v1378
        %v1380 = vmul.f32 %v1375, %v1379
        %vm1381 = vweird.f32 %v1116
        %vm1382 = vweird.f32 %v1375
        %vm1383 = vmor %vm1381, %vm1382
        %v1384 = vsel %vm1383, %v1375, %v1380
        %v1385 = vrsqrt.pop %v1117
        %v1386 = vmul.f32 %v1385, %v1117
        %v1387 = vmul.f32 %v1386, %v1385
        %v1388 = vmul.f32 0.5, %v1387
        %v1389 = vsub.f32 1.5, %v1388
        %v1390 = vmul.f32 %v1385, %v1389
        %vm1391 = vweird.f32 %v1117
        %vm1392 = vweird.f32 %v1385
        %vm1393 = vmor %vm1391, %vm1392
        %v1394 = vsel %vm1393, %v1385, %v1390
        %v1395 = vrsqrt.pop %v1118
        %v1396 = vmul.f32 %v1395, %v1118
        %v1397 = vmul.f32 %v1396, %v1395
        %v1398 = vmul.f32 0.5, %v1397
        %v1399 = vsub.f32 1.5, %v1398
        %v1400 = vmul.f32 %v1395, %v1399
        %vm1401 = vweird.f32 %v1118
        %vm1402 = vweird.f32 %v1395
        %vm1403 = vmor %vm1401, %vm1402
        %v1404 = vsel %vm1403, %v1395, %v1400
        %v1405 = vrsqrt.pop %v1119
        %v1406 = vmul.f32 %v1405, %v1119
        %v1407 = vmul.f32 %v1406, %v1405
        %v1408 = vmul.f32 0.5, %v1407
        %v1409 = vsub.f32 1.5, %v1408
        %v1410 = vmul.f32 %v1405, %v1409
        %vm1411 = vweird.f32 %v1119
        %vm1412 = vweird.f32 %v1405
        %vm1413 = vmor %vm1411, %vm1412
        %v1414 = vsel %vm1413, %v1405, %v1410
        %v1415 = vrsqrt.pop %v1120
        %v1416 = vmul.f32 %v1415, %v1120
        %v1417 = vmul.f32 %v1416, %v1415
        %v1418 = vmul.f32 0.5, %v1417
        %v1419 = vsub.f32 1.5, %v1418
        %v1420 = vmul.f32 %v1415, %v1419
        %vm1421 = vweird.f32 %v1120
        %vm1422 = vweird.f32 %v1415
        %vm1423 = vmor %vm1421, %vm1422
        %v1424 = vsel %vm1423, %v1415, %v1420
        %v1425 = vrsqrt.pop %v1121
        %v1426 = vmul.f32 %v1425, %v1121
        %v1427 = vmul.f32 %v1426, %v1425
        %v1428 = vmul.f32 0.5, %v1427
        %v1429 = vsub.f32 1.5, %v1428
        %v1430 = vmul.f32 %v1425, %v1429
        %vm1431 = vweird.f32 %v1121
        %vm1432 = vweird.f32 %v1425
        %vm1433 = vmor %vm1431, %vm1432
        %v1434 = vsel %vm1433, %v1425, %v1430
        %v1435 = vrsqrt.pop %v1122
        %v1436 = vmul.f32 %v1435, %v1122
        %v1437 = vmul.f32 %v1436, %v1435
        %v1438 = vmul.f32 0.5, %v1437
        %v1439 = vsub.f32 1.5, %v1438
        %v1440 = vmul.f32 %v1435, %v1439
        %vm1441 = vweird.f32 %v1122
        %vm1442 = vweird.f32 %v1435
        %vm1443 = vmor %vm1441, %vm1442
        %v1444 = vsel %vm1443, %v1435, %v1440
        %v1445 = vrsqrt.pop %v1123
        %v1446 = vmul.f32 %v1445, %v1123
        %v1447 = vmul.f32 %v1446, %v1445
        %v1448 = vmul.f32 0.5, %v1447
        %v1449 = vsub.f32 1.5, %v1448
        %v1450 = vmul.f32 %v1445, %v1449
        %vm1451 = vweird.f32 %v1123
        %vm1452 = vweird.f32 %v1445
        %vm1453 = vmor %vm1451, %vm1452
        %v1454 = vsel %vm1453, %v1445, %v1450
        %v1455 = vrsqrt.pop %v1124
        %v1456 = vmul.f32 %v1455, %v1124
        %v1457 = vmul.f32 %v1456, %v1455
        %v1458 = vmul.f32 0.5, %v1457
        %v1459 = vsub.f32 1.5, %v1458
        %v1460 = vmul.f32 %v1455, %v1459
        %vm1461 = vweird.f32 %v1124
        %vm1462 = vweird.f32 %v1455
        %vm1463 = vmor %vm1461, %vm1462
        %v1464 = vsel %vm1463, %v1455, %v1460
        %v1465 = vrsqrt.pop %v1125
        %v1466 = vmul.f32 %v1465, %v1125
        %v1467 = vmul.f32 %v1466, %v1465
        %v1468 = vmul.f32 0.5, %v1467
        %v1469 = vsub.f32 1.5, %v1468
        %v1470 = vmul.f32 %v1465, %v1469
        %vm1471 = vweird.f32 %v1125
        %vm1472 = vweird.f32 %v1465
        %vm1473 = vmor %vm1471, %vm1472
        %v1474 = vsel %vm1473, %v1465, %v1470
        %v1475 = vrsqrt.pop %v1126
        %v1476 = vmul.f32 %v1475, %v1126
        %v1477 = vmul.f32 %v1476, %v1475
        %v1478 = vmul.f32 0.5, %v1477
        %v1479 = vsub.f32 1.5, %v1478
        %v1480 = vmul.f32 %v1475, %v1479
        %vm1481 = vweird.f32 %v1126
        %vm1482 = vweird.f32 %v1475
        %vm1483 = vmor %vm1481, %vm1482
        %v1484 = vsel %vm1483, %v1475, %v1480
        %v1485 = vrsqrt.pop %v1127
        %v1486 = vmul.f32 %v1485, %v1127
        %v1487 = vmul.f32 %v1486, %v1485
        %v1488 = vmul.f32 0.5, %v1487
        %v1489 = vsub.f32 1.5, %v1488
        %v1490 = vmul.f32 %v1485, %v1489
        %vm1491 = vweird.f32 %v1127
        %vm1492 = vweird.f32 %v1485
        %vm1493 = vmor %vm1491, %vm1492
        %v1494 = vsel %vm1493, %v1485, %v1490
        %v1495 = vrsqrt.pop %v1128
        %v1496 = vmul.f32 %v1495, %v1128
        %v1497 = vmul.f32 %v1496, %v1495
        %v1498 = vmul.f32 0.5, %v1497
        %v1499 = vsub.f32 1.5, %v1498
        %v1500 = vmul.f32 %v1495, %v1499
        %vm1501 = vweird.f32 %v1128
        %vm1502 = vweird.f32 %v1495
        %vm1503 = vmor %vm1501, %vm1502
        %v1504 = vsel %vm1503, %v1495, %v1500
        %v1505 = vrsqrt.pop %v1129
        %v1506 = vmul.f32 %v1505, %v1129
        %v1507 = vmul.f32 %v1506, %v1505
        %v1508 = vmul.f32 0.5, %v1507
        %v1509 = vsub.f32 1.5, %v1508
        %v1510 = vmul.f32 %v1505, %v1509
        %vm1511 = vweird.f32 %v1129
        %vm1512 = vweird.f32 %v1505
        %vm1513 = vmor %vm1511, %vm1512
        %v1514 = vsel %vm1513, %v1505, %v1510
        %v1515 = vrsqrt.pop %v1130
        %v1516 = vmul.f32 %v1515, %v1130
        %v1517 = vmul.f32 %v1516, %v1515
        %v1518 = vmul.f32 0.5, %v1517
        %v1519 = vsub.f32 1.5, %v1518
        %v1520 = vmul.f32 %v1515, %v1519
        %vm1521 = vweird.f32 %v1130
        %vm1522 = vweird.f32 %v1515
        %vm1523 = vmor %vm1521, %vm1522
        %v1524 = vsel %vm1523, %v1515, %v1520
        %v1525 = vrsqrt.pop %v1131
        %v1526 = vmul.f32 %v1525, %v1131
        %v1527 = vmul.f32 %v1526, %v1525
        %v1528 = vmul.f32 0.5, %v1527
        %v1529 = vsub.f32 1.5, %v1528
        %v1530 = vmul.f32 %v1525, %v1529
        %vm1531 = vweird.f32 %v1131
        %vm1532 = vweird.f32 %v1525
        %vm1533 = vmor %vm1531, %vm1532
        %v1534 = vsel %vm1533, %v1525, %v1530
        %v1535 = vrsqrt.pop %v1132
        %v1536 = vmul.f32 %v1535, %v1132
        %v1537 = vmul.f32 %v1536, %v1535
        %v1538 = vmul.f32 0.5, %v1537
        %v1539 = vsub.f32 1.5, %v1538
        %v1540 = vmul.f32 %v1535, %v1539
        %vm1541 = vweird.f32 %v1132
        %vm1542 = vweird.f32 %v1535
        %vm1543 = vmor %vm1541, %vm1542
        %v1544 = vsel %vm1543, %v1535, %v1540
        %v1545 = vrsqrt.pop %v1133
        %v1546 = vmul.f32 %v1545, %v1133
        %v1547 = vmul.f32 %v1546, %v1545
        %v1548 = vmul.f32 0.5, %v1547
        %v1549 = vsub.f32 1.5, %v1548
        %v1550 = vmul.f32 %v1545, %v1549
        %vm1551 = vweird.f32 %v1133
        %vm1552 = vweird.f32 %v1545
        %vm1553 = vmor %vm1551, %vm1552
        %v1554 = vsel %vm1553, %v1545, %v1550
        %v1555 = vrsqrt.pop %v1134
        %v1556 = vmul.f32 %v1555, %v1134
        %v1557 = vmul.f32 %v1556, %v1555
        %v1558 = vmul.f32 0.5, %v1557
        %v1559 = vsub.f32 1.5, %v1558
        %v1560 = vmul.f32 %v1555, %v1559
        %vm1561 = vweird.f32 %v1134
        %vm1562 = vweird.f32 %v1555
        %vm1563 = vmor %vm1561, %vm1562
        %v1564 = vsel %vm1563, %v1555, %v1560
        %v1565 = vrsqrt.pop %v1135
        %v1566 = vmul.f32 %v1565, %v1135
        %v1567 = vmul.f32 %v1566, %v1565
        %v1568 = vmul.f32 0.5, %v1567
        %v1569 = vsub.f32 1.5, %v1568
        %v1570 = vmul.f32 %v1565, %v1569
        %vm1571 = vweird.f32 %v1135
        %vm1572 = vweird.f32 %v1565
        %vm1573 = vmor %vm1571, %vm1572
        %v1574 = vsel %vm1573, %v1565, %v1570
        %v1575 = vrsqrt.pop %v1136
        %v1576 = vmul.f32 %v1575, %v1136
        %v1577 = vmul.f32 %v1576, %v1575
        %v1578 = vmul.f32 0.5, %v1577
        %v1579 = vsub.f32 1.5, %v1578
        %v1580 = vmul.f32 %v1575, %v1579
        %vm1581 = vweird.f32 %v1136
        %vm1582 = vweird.f32 %v1575
        %vm1583 = vmor %vm1581, %vm1582
        %v1584 = vsel %vm1583, %v1575, %v1580
        %v1585 = vrsqrt.pop %v1137
        %v1586 = vmul.f32 %v1585, %v1137
        %v1587 = vmul.f32 %v1586, %v1585
        %v1588 = vmul.f32 0.5, %v1587
        %v1589 = vsub.f32 1.5, %v1588
        %v1590 = vmul.f32 %v1585, %v1589
        %vm1591 = vweird.f32 %v1137
        %vm1592 = vweird.f32 %v1585
        %vm1593 = vmor %vm1591, %vm1592
        %v1594 = vsel %vm1593, %v1585, %v1590
        %v1595 = vrsqrt.pop %v1138
        %v1596 = vmul.f32 %v1595, %v1138
        %v1597 = vmul.f32 %v1596, %v1595
        %v1598 = vmul.f32 0.5, %v1597
        %v1599 = vsub.f32 1.5, %v1598
        %v1600 = vmul.f32 %v1595, %v1599
        %vm1601 = vweird.f32 %v1138
        %vm1602 = vweird.f32 %v1595
        %vm1603 = vmor %vm1601, %vm1602
        %v1604 = vsel %vm1603, %v1595, %v1600
        %v1605 = vrsqrt.pop %v1139
        %v1606 = vmul.f32 %v1605, %v1139
        %v1607 = vmul.f32 %v1606, %v1605
        %v1608 = vmul.f32 0.5, %v1607
        %v1609 = vsub.f32 1.5, %v1608
        %v1610 = vmul.f32 %v1605, %v1609
        %vm1611 = vweird.f32 %v1139
        %vm1612 = vweird.f32 %v1605
        %vm1613 = vmor %vm1611, %vm1612
        %v1614 = vsel %vm1613, %v1605, %v1610
        %v1615 = vrsqrt.pop %v1140
        %v1616 = vmul.f32 %v1615, %v1140
        %v1617 = vmul.f32 %v1616, %v1615
        %v1618 = vmul.f32 0.5, %v1617
        %v1619 = vsub.f32 1.5, %v1618
        %v1620 = vmul.f32 %v1615, %v1619
        %vm1621 = vweird.f32 %v1140
        %vm1622 = vweird.f32 %v1615
        %vm1623 = vmor %vm1621, %vm1622
        %v1624 = vsel %vm1623, %v1615, %v1620
        %v1625 = vrsqrt.pop %v1141
        %v1626 = vmul.f32 %v1625, %v1141
        %v1627 = vmul.f32 %v1626, %v1625
        %v1628 = vmul.f32 0.5, %v1627
        %v1629 = vsub.f32 1.5, %v1628
        %v1630 = vmul.f32 %v1625, %v1629
        %vm1631 = vweird.f32 %v1141
        %vm1632 = vweird.f32 %v1625
        %vm1633 = vmor %vm1631, %vm1632
        %v1634 = vsel %vm1633, %v1625, %v1630
        %v1635 = vrsqrt.pop %v1142
        %v1636 = vmul.f32 %v1635, %v1142
        %v1637 = vmul.f32 %v1636, %v1635
        %v1638 = vmul.f32 0.5, %v1637
        %v1639 = vsub.f32 1.5, %v1638
        %v1640 = vmul.f32 %v1635, %v1639
        %vm1641 = vweird.f32 %v1142
        %vm1642 = vweird.f32 %v1635
        %vm1643 = vmor %vm1641, %vm1642
        %v1644 = vsel %vm1643, %v1635, %v1640
        %v1645 = vrsqrt.pop %v1143
        %v1646 = vmul.f32 %v1645, %v1143
        %v1647 = vmul.f32 %v1646, %v1645
        %v1648 = vmul.f32 0.5, %v1647
        %v1649 = vsub.f32 1.5, %v1648
        %v1650 = vmul.f32 %v1645, %v1649
        %vm1651 = vweird.f32 %v1143
        %vm1652 = vweird.f32 %v1645
        %vm1653 = vmor %vm1651, %vm1652
        %v1654 = vsel %vm1653, %v1645, %v1650
        %v1655 = vrsqrt.pop %v1144
        %v1656 = vmul.f32 %v1655, %v1144
        %v1657 = vmul.f32 %v1656, %v1655
        %v1658 = vmul.f32 0.5, %v1657
        %v1659 = vsub.f32 1.5, %v1658
        %v1660 = vmul.f32 %v1655, %v1659
        %vm1661 = vweird.f32 %v1144
        %vm1662 = vweird.f32 %v1655
        %vm1663 = vmor %vm1661, %vm1662
        %v1664 = vsel %vm1663, %v1655, %v1660
        %v1665 = vrsqrt.pop %v1145
        %v1666 = vmul.f32 %v1665, %v1145
        %v1667 = vmul.f32 %v1666, %v1665
        %v1668 = vmul.f32 0.5, %v1667
        %v1669 = vsub.f32 1.5, %v1668
        %v1670 = vmul.f32 %v1665, %v1669
        %vm1671 = vweird.f32 %v1145
        %vm1672 = vweird.f32 %v1665
        %vm1673 = vmor %vm1671, %vm1672
        %v1674 = vsel %vm1673, %v1665, %v1670
        %v1675 = vrsqrt.pop %v1146
        %v1676 = vmul.f32 %v1675, %v1146
        %v1677 = vmul.f32 %v1676, %v1675
        %v1678 = vmul.f32 0.5, %v1677
        %v1679 = vsub.f32 1.5, %v1678
        %v1680 = vmul.f32 %v1675, %v1679
        %vm1681 = vweird.f32 %v1146
        %vm1682 = vweird.f32 %v1675
        %vm1683 = vmor %vm1681, %vm1682
        %v1684 = vsel %vm1683, %v1675, %v1680
        %v1685 = vrsqrt.pop %v1147
        %v1686 = vmul.f32 %v1685, %v1147
        %v1687 = vmul.f32 %v1686, %v1685
        %v1688 = vmul.f32 0.5, %v1687
        %v1689 = vsub.f32 1.5, %v1688
        %v1690 = vmul.f32 %v1685, %v1689
        %vm1691 = vweird.f32 %v1147
        %vm1692 = vweird.f32 %v1685
        %vm1693 = vmor %vm1691, %vm1692
        %v1694 = vsel %vm1693, %v1685, %v1690
        %v1695 = vrsqrt.pop %v1148
        %v1696 = vmul.f32 %v1695, %v1148
        %v1697 = vmul.f32 %v1696, %v1695
        %v1698 = vmul.f32 0.5, %v1697
        %v1699 = vsub.f32 1.5, %v1698
        %v1700 = vmul.f32 %v1695, %v1699
        %vm1701 = vweird.f32 %v1148
        %vm1702 = vweird.f32 %v1695
        %vm1703 = vmor %vm1701, %vm1702
        %v1704 = vsel %vm1703, %v1695, %v1700
        %v1705 = vrsqrt.pop %v1149
        %v1706 = vmul.f32 %v1705, %v1149
        %v1707 = vmul.f32 %v1706, %v1705
        %v1708 = vmul.f32 0.5, %v1707
        %v1709 = vsub.f32 1.5, %v1708
        %v1710 = vmul.f32 %v1705, %v1709
        %vm1711 = vweird.f32 %v1149
        %vm1712 = vweird.f32 %v1705
        %vm1713 = vmor %vm1711, %vm1712
        %v1714 = vsel %vm1713, %v1705, %v1710
        %v1715 = vrsqrt.pop %v1150
        %v1716 = vmul.f32 %v1715, %v1150
        %v1717 = vmul.f32 %v1716, %v1715
        %v1718 = vmul.f32 0.5, %v1717
        %v1719 = vsub.f32 1.5, %v1718
        %v1720 = vmul.f32 %v1715, %v1719
        %vm1721 = vweird.f32 %v1150
        %vm1722 = vweird.f32 %v1715
        %vm1723 = vmor %vm1721, %vm1722
        %v1724 = vsel %vm1723, %v1715, %v1720
        %v1725 = vrsqrt.pop %v1151
        %v1726 = vmul.f32 %v1725, %v1151
        %v1727 = vmul.f32 %v1726, %v1725
        %v1728 = vmul.f32 0.5, %v1727
        %v1729 = vsub.f32 1.5, %v1728
        %v1730 = vmul.f32 %v1725, %v1729
        %vm1731 = vweird.f32 %v1151
        %vm1732 = vweird.f32 %v1725
        %vm1733 = vmor %vm1731, %vm1732
        %v1734 = vsel %vm1733, %v1725, %v1730
        %v1735 = vrsqrt.pop %v1152
        %v1736 = vmul.f32 %v1735, %v1152
        %v1737 = vmul.f32 %v1736, %v1735
        %v1738 = vmul.f32 0.5, %v1737
        %v1739 = vsub.f32 1.5, %v1738
        %v1740 = vmul.f32 %v1735, %v1739
        %vm1741 = vweird.f32 %v1152
        %vm1742 = vweird.f32 %v1735
        %vm1743 = vmor %vm1741, %vm1742
        %v1744 = vsel %vm1743, %v1735, %v1740
        %v1745 = vrsqrt.pop %v1153
        %v1746 = vmul.f32 %v1745, %v1153
        %v1747 = vmul.f32 %v1746, %v1745
        %v1748 = vmul.f32 0.5, %v1747
        %v1749 = vsub.f32 1.5, %v1748
        %v1750 = vmul.f32 %v1745, %v1749
        %vm1751 = vweird.f32 %v1153
        %vm1752 = vweird.f32 %v1745
        %vm1753 = vmor %vm1751, %vm1752
        %v1754 = vsel %vm1753, %v1745, %v1750
        %v1755 = vrsqrt.pop %v1154
        %v1756 = vmul.f32 %v1755, %v1154
        %v1757 = vmul.f32 %v1756, %v1755
        %v1758 = vmul.f32 0.5, %v1757
        %v1759 = vsub.f32 1.5, %v1758
        %v1760 = vmul.f32 %v1755, %v1759
        %vm1761 = vweird.f32 %v1154
        %vm1762 = vweird.f32 %v1755
        %vm1763 = vmor %vm1761, %vm1762
        %v1764 = vsel %vm1763, %v1755, %v1760
        %v1765 = vrsqrt.pop %v1155
        %v1766 = vmul.f32 %v1765, %v1155
        %v1767 = vmul.f32 %v1766, %v1765
        %v1768 = vmul.f32 0.5, %v1767
        %v1769 = vsub.f32 1.5, %v1768
        %v1770 = vmul.f32 %v1765, %v1769
        %vm1771 = vweird.f32 %v1155
        %vm1772 = vweird.f32 %v1765
        %vm1773 = vmor %vm1771, %vm1772
        %v1774 = vsel %vm1773, %v1765, %v1770
        %v1775 = vrsqrt.pop %v1156
        %v1776 = vmul.f32 %v1775, %v1156
        %v1777 = vmul.f32 %v1776, %v1775
        %v1778 = vmul.f32 0.5, %v1777
        %v1779 = vsub.f32 1.5, %v1778
        %v1780 = vmul.f32 %v1775, %v1779
        %vm1781 = vweird.f32 %v1156
        %vm1782 = vweird.f32 %v1775
        %vm1783 = vmor %vm1781, %vm1782
        %v1784 = vsel %vm1783, %v1775, %v1780
        %v1785 = vrsqrt.pop %v1157
        %v1786 = vmul.f32 %v1785, %v1157
        %v1787 = vmul.f32 %v1786, %v1785
        %v1788 = vmul.f32 0.5, %v1787
        %v1789 = vsub.f32 1.5, %v1788
        %v1790 = vmul.f32 %v1785, %v1789
        %vm1791 = vweird.f32 %v1157
        %vm1792 = vweird.f32 %v1785
        %vm1793 = vmor %vm1791, %vm1792
        %v1794 = vsel %vm1793, %v1785, %v1790
        %v1795 = vrsqrt.pop %v1158
        %v1796 = vmul.f32 %v1795, %v1158
        %v1797 = vmul.f32 %v1796, %v1795
        %v1798 = vmul.f32 0.5, %v1797
        %v1799 = vsub.f32 1.5, %v1798
        %v1800 = vmul.f32 %v1795, %v1799
        %vm1801 = vweird.f32 %v1158
        %vm1802 = vweird.f32 %v1795
        %vm1803 = vmor %vm1801, %vm1802
        %v1804 = vsel %vm1803, %v1795, %v1800
        %v1805 = vrsqrt.pop %v1159
        %v1806 = vmul.f32 %v1805, %v1159
        %v1807 = vmul.f32 %v1806, %v1805
        %v1808 = vmul.f32 0.5, %v1807
        %v1809 = vsub.f32 1.5, %v1808
        %v1810 = vmul.f32 %v1805, %v1809
        %vm1811 = vweird.f32 %v1159
        %vm1812 = vweird.f32 %v1805
        %vm1813 = vmor %vm1811, %vm1812
        %v1814 = vsel %vm1813, %v1805, %v1810
        %v1815 = vrsqrt.pop %v1160
        %v1816 = vmul.f32 %v1815, %v1160
        %v1817 = vmul.f32 %v1816, %v1815
        %v1818 = vmul.f32 0.5, %v1817
        %v1819 = vsub.f32 1.5, %v1818
        %v1820 = vmul.f32 %v1815, %v1819
        %vm1821 = vweird.f32 %v1160
        %vm1822 = vweird.f32 %v1815
        %vm1823 = vmor %vm1821, %vm1822
        %v1824 = vsel %vm1823, %v1815, %v1820
        %v1825 = vrsqrt.pop %v1161
        %v1826 = vmul.f32 %v1825, %v1161
        %v1827 = vmul.f32 %v1826, %v1825
        %v1828 = vmul.f32 0.5, %v1827
        %v1829 = vsub.f32 1.5, %v1828
        %v1830 = vmul.f32 %v1825, %v1829
        %vm1831 = vweird.f32 %v1161
        %vm1832 = vweird.f32 %v1825
        %vm1833 = vmor %vm1831, %vm1832
        %v1834 = vsel %vm1833, %v1825, %v1830
        %v1835 = vrsqrt.pop %v1162
        %v1836 = vmul.f32 %v1835, %v1162
        %v1837 = vmul.f32 %v1836, %v1835
        %v1838 = vmul.f32 0.5, %v1837
        %v1839 = vsub.f32 1.5, %v1838
        %v1840 = vmul.f32 %v1835, %v1839
        %vm1841 = vweird.f32 %v1162
        %vm1842 = vweird.f32 %v1835
        %vm1843 = vmor %vm1841, %vm1842
        %v1844 = vsel %vm1843, %v1835, %v1840
        %v1845 = vrsqrt.pop %v1163
        %v1846 = vmul.f32 %v1845, %v1163
        %v1847 = vmul.f32 %v1846, %v1845
        %v1848 = vmul.f32 0.5, %v1847
        %v1849 = vsub.f32 1.5, %v1848
        %v1850 = vmul.f32 %v1845, %v1849
        %vm1851 = vweird.f32 %v1163
        %vm1852 = vweird.f32 %v1845
        %vm1853 = vmor %vm1851, %vm1852
        %v1854 = vsel %vm1853, %v1845, %v1850
        %v1855 = vrsqrt.pop %v1164
        %v1856 = vmul.f32 %v1855, %v1164
        %v1857 = vmul.f32 %v1856, %v1855
        %v1858 = vmul.f32 0.5, %v1857
        %v1859 = vsub.f32 1.5, %v1858
        %v1860 = vmul.f32 %v1855, %v1859
        %vm1861 = vweird.f32 %v1164
        %vm1862 = vweird.f32 %v1855
        %vm1863 = vmor %vm1861, %vm1862
        %v1864 = vsel %vm1863, %v1855, %v1860
        %v1865 = vrsqrt.pop %v1165
        %v1866 = vmul.f32 %v1865, %v1165
        %v1867 = vmul.f32 %v1866, %v1865
        %v1868 = vmul.f32 0.5, %v1867
        %v1869 = vsub.f32 1.5, %v1868
        %v1870 = vmul.f32 %v1865, %v1869
        %vm1871 = vweird.f32 %v1165
        %vm1872 = vweird.f32 %v1865
        %vm1873 = vmor %vm1871, %vm1872
        %v1874 = vsel %vm1873, %v1865, %v1870
        %v1875 = vrsqrt.pop %v1166
        %v1876 = vmul.f32 %v1875, %v1166
        %v1877 = vmul.f32 %v1876, %v1875
        %v1878 = vmul.f32 0.5, %v1877
        %v1879 = vsub.f32 1.5, %v1878
        %v1880 = vmul.f32 %v1875, %v1879
        %vm1881 = vweird.f32 %v1166
        %vm1882 = vweird.f32 %v1875
        %vm1883 = vmor %vm1881, %vm1882
        %v1884 = vsel %vm1883, %v1875, %v1880
        %v1885 = vrsqrt.pop %v1167
        %v1886 = vmul.f32 %v1885, %v1167
        %v1887 = vmul.f32 %v1886, %v1885
        %v1888 = vmul.f32 0.5, %v1887
        %v1889 = vsub.f32 1.5, %v1888
        %v1890 = vmul.f32 %v1885, %v1889
        %vm1891 = vweird.f32 %v1167
        %vm1892 = vweird.f32 %v1885
        %vm1893 = vmor %vm1891, %vm1892
        %v1894 = vsel %vm1893, %v1885, %v1890
        %v1895 = vrsqrt.pop %v1168
        %v1896 = vmul.f32 %v1895, %v1168
        %v1897 = vmul.f32 %v1896, %v1895
        %v1898 = vmul.f32 0.5, %v1897
        %v1899 = vsub.f32 1.5, %v1898
        %v1900 = vmul.f32 %v1895, %v1899
        %vm1901 = vweird.f32 %v1168
        %vm1902 = vweird.f32 %v1895
        %vm1903 = vmor %vm1901, %vm1902
        %v1904 = vsel %vm1903, %v1895, %v1900
        %v1905 = vrsqrt.pop %v1169
        %v1906 = vmul.f32 %v1905, %v1169
        %v1907 = vmul.f32 %v1906, %v1905
        %v1908 = vmul.f32 0.5, %v1907
        %v1909 = vsub.f32 1.5, %v1908
        %v1910 = vmul.f32 %v1905, %v1909
        %vm1911 = vweird.f32 %v1169
        %vm1912 = vweird.f32 %v1905
        %vm1913 = vmor %vm1911, %vm1912
        %v1914 = vsel %vm1913, %v1905, %v1910
        %v1915 = vrsqrt.pop %v1170
        %v1916 = vmul.f32 %v1915, %v1170
        %v1917 = vmul.f32 %v1916, %v1915
        %v1918 = vmul.f32 0.5, %v1917
        %v1919 = vsub.f32 1.5, %v1918
        %v1920 = vmul.f32 %v1915, %v1919
        %vm1921 = vweird.f32 %v1170
        %vm1922 = vweird.f32 %v1915
        %vm1923 = vmor %vm1921, %vm1922
        %v1924 = vsel %vm1923, %v1915, %v1920
        %v1925 = vrsqrt.pop %v1171
        %v1926 = vmul.f32 %v1925, %v1171
        %v1927 = vmul.f32 %v1926, %v1925
        %v1928 = vmul.f32 0.5, %v1927
        %v1929 = vsub.f32 1.5, %v1928
        %v1930 = vmul.f32 %v1925, %v1929
        %vm1931 = vweird.f32 %v1171
        %vm1932 = vweird.f32 %v1925
        %vm1933 = vmor %vm1931, %vm1932
        %v1934 = vsel %vm1933, %v1925, %v1930
        %v1935 = vrsqrt.pop %v1172
        %v1936 = vmul.f32 %v1935, %v1172
        %v1937 = vmul.f32 %v1936, %v1935
        %v1938 = vmul.f32 0.5, %v1937
        %v1939 = vsub.f32 1.5, %v1938
        %v1940 = vmul.f32 %v1935, %v1939
        %vm1941 = vweird.f32 %v1172
        %vm1942 = vweird.f32 %v1935
        %vm1943 = vmor %vm1941, %vm1942
        %v1944 = vsel %vm1943, %v1935, %v1940
        %v1945 = vrsqrt.pop %v1173
        %v1946 = vmul.f32 %v1945, %v1173
        %v1947 = vmul.f32 %v1946, %v1945
        %v1948 = vmul.f32 0.5, %v1947
        %v1949 = vsub.f32 1.5, %v1948
        %v1950 = vmul.f32 %v1945, %v1949
        %vm1951 = vweird.f32 %v1173
        %vm1952 = vweird.f32 %v1945
        %vm1953 = vmor %vm1951, %vm1952
        %v1954 = vsel %vm1953, %v1945, %v1950
        %v1955 = vrsqrt.pop %v1174
        %v1956 = vmul.f32 %v1955, %v1174
        %v1957 = vmul.f32 %v1956, %v1955
        %v1958 = vmul.f32 0.5, %v1957
        %v1959 = vsub.f32 1.5, %v1958
        %v1960 = vmul.f32 %v1955, %v1959
        %vm1961 = vweird.f32 %v1174
        %vm1962 = vweird.f32 %v1955
        %vm1963 = vmor %vm1961, %vm1962
        %v1964 = vsel %vm1963, %v1955, %v1960
        %v1965 = vmul.f32 %v701, %v1184
        %v1966 = vmul.f32 %v702, %v1194
        %v1967 = vmul.f32 %v703, %v1204
        %v1968 = vmul.f32 %v704, %v1214
        %v1969 = vmul.f32 %v705, %v1224
        %v1970 = vmul.f32 %v706, %v1234
        %v1971 = vmul.f32 %v707, %v1244
        %v1972 = vmul.f32 %v708, %v1254
        %v1973 = vmul.f32 %v709, %v1264
        %v1974 = vmul.f32 %v710, %v1274
        %v1975 = vmul.f32 %v711, %v1284
        %v1976 = vmul.f32 %v712, %v1294
        %v1977 = vmul.f32 %v713, %v1304
        %v1978 = vmul.f32 %v714, %v1314
        %v1979 = vmul.f32 %v715, %v1324
        %v1980 = vmul.f32 %v716, %v1334
        %v1981 = vmul.f32 %v717, %v1344
        %v1982 = vmul.f32 %v718, %v1354
        %v1983 = vmul.f32 %v719, %v1364
        %v1984 = vmul.f32 %v720, %v1374
        %v1985 = vmul.f32 %v721, %v1384
        %v1986 = vmul.f32 %v722, %v1394
        %v1987 = vmul.f32 %v723, %v1404
        %v1988 = vmul.f32 %v724, %v1414
        %v1989 = vmul.f32 %v725, %v1424
        %v1990 = vmul.f32 %v726, %v1434
        %v1991 = vmul.f32 %v727, %v1444
        %v1992 = vmul.f32 %v728, %v1454
        %v1993 = vmul.f32 %v729, %v1464
        %v1994 = vmul.f32 %v730, %v1474
        %v1995 = vmul.f32 %v731, %v1484
        %v1996 = vmul.f32 %v732, %v1494
        %v1997 = vmul.f32 %v733, %v1504
        %v1998 = vmul.f32 %v734, %v1514
        %v1999 = vmul.f32 %v735, %v1524
        %v2000 = vmul.f32 %v736, %v1534
        %v2001 = vmul.f32 %v737, %v1544
        %v2002 = vmul.f32 %v738, %v1554
        %v2003 = vmul.f32 %v739, %v1564
        %v2004 = vmul.f32 %v740, %v1574
        %v2005 = vmul.f32 %v741, %v1584
        %v2006 = vmul.f32 %v742, %v1594
        %v2007 = vmul.f32 %v743, %v1604
        %v2008 = vmul.f32 %v744, %v1614
        %v2009 = vmul.f32 %v745, %v1624
        %v2010 = vmul.f32 %v746, %v1634
        %v2011 = vmul.f32 %v747, %v1644
        %v2012 = vmul.f32 %v748, %v1654
        %v2013 = vmul.f32 %v749, %v1664
        %v2014 = vmul.f32 %v750, %v1674
        %v2015 = vmul.f32 %v751, %v1684
        %v2016 = vmul.f32 %v752, %v1694
        %v2017 = vmul.f32 %v753, %v1704
        %v2018 = vmul.f32 %v754, %v1714
        %v2019 = vmul.f32 %v755, %v1724
        %v2020 = vmul.f32 %v756, %v1734
        %v2021 = vmul.f32 %v757, %v1744
        %v2022 = vmul.f32 %v758, %v1754
        %v2023 = vmul.f32 %v759, %v1764
        %v2024 = vmul.f32 %v760, %v1774
        %v2025 = vmul.f32 %v761, %v1784
        %v2026 = vmul.f32 %v762, %v1794
        %v2027 = vmul.f32 %v763, %v1804
        %v2028 = vmul.f32 %v764, %v1814
        %v2029 = vmul.f32 %v765, %v1824
        %v2030 = vmul.f32 %v766, %v1834
        %v2031 = vmul.f32 %v767, %v1844
        %v2032 = vmul.f32 %v768, %v1854
        %v2033 = vmul.f32 %v769, %v1864
        %v2034 = vmul.f32 %v770, %v1874
        %v2035 = vmul.f32 %v771, %v1884
        %v2036 = vmul.f32 %v772, %v1894
        %v2037 = vmul.f32 %v773, %v1904
        %v2038 = vmul.f32 %v774, %v1914
        %v2039 = vmul.f32 %v775, %v1924
        %v2040 = vmul.f32 %v776, %v1934
        %v2041 = vmul.f32 %v777, %v1944
        %v2042 = vmul.f32 %v778, %v1954
        %v2043 = vmul.f32 %v779, %v1964
        %v2044 = vld [vmem:[#allocation5] sm:$0x1]
        %v2046 = vperm.slane %v2044, 0
        %v2048 = vmul.f32 %v1965, %v2046
        %v2049 = vmul.f32 %v1966, %v2046
        %v2050 = vmul.f32 %v1967, %v2046
        %v2051 = vmul.f32 %v1968, %v2046
        %v2052 = vmul.f32 %v1969, %v2046
        %v2053 = vmul.f32 %v1970, %v2046
        %v2054 = vmul.f32 %v1971, %v2046
        %v2055 = vmul.f32 %v1972, %v2046
        %v2056 = vmul.f32 %v1973, %v2046
        %v2057 = vmul.f32 %v1974, %v2046
        %v2058 = vmul.f32 %v1975, %v2046
        %v2059 = vmul.f32 %v1976, %v2046
        %v2060 = vmul.f32 %v1977, %v2046
        %v2061 = vmul.f32 %v1978, %v2046
        %v2062 = vmul.f32 %v1979, %v2046
        %v2063 = vmul.f32 %v1980, %v2046
        %v2064 = vmul.f32 %v1981, %v2046
        %v2065 = vmul.f32 %v1982, %v2046
        %v2066 = vmul.f32 %v1983, %v2046
        %v2067 = vmul.f32 %v1984, %v2046
        %v2068 = vmul.f32 %v1985, %v2046
        %v2069 = vmul.f32 %v1986, %v2046
        %v2070 = vmul.f32 %v1987, %v2046
        %v2071 = vmul.f32 %v1988, %v2046
        %v2072 = vmul.f32 %v1989, %v2046
        %v2073 = vmul.f32 %v1990, %v2046
        %v2074 = vmul.f32 %v1991, %v2046
        %v2075 = vmul.f32 %v1992, %v2046
        %v2076 = vmul.f32 %v1993, %v2046
        %v2077 = vmul.f32 %v1994, %v2046
        %v2078 = vmul.f32 %v1995, %v2046
        %v2079 = vmul.f32 %v1996, %v2046
        %v2080 = vmul.f32 %v1997, %v2046
        %v2081 = vmul.f32 %v1998, %v2046
        %v2082 = vmul.f32 %v1999, %v2046
        %v2083 = vmul.f32 %v2000, %v2046
        %v2084 = vmul.f32 %v2001, %v2046
        %v2085 = vmul.f32 %v2002, %v2046
        %v2086 = vmul.f32 %v2003, %v2046
        %v2087 = vmul.f32 %v2004, %v2046
        %v2088 = vmul.f32 %v2005, %v2046
        %v2089 = vmul.f32 %v2006, %v2046
        %v2090 = vmul.f32 %v2007, %v2046
        %v2091 = vmul.f32 %v2008, %v2046
        %v2092 = vmul.f32 %v2009, %v2046
        %v2093 = vmul.f32 %v2010, %v2046
        %v2094 = vmul.f32 %v2011, %v2046
        %v2095 = vmul.f32 %v2012, %v2046
        %v2096 = vmul.f32 %v2013, %v2046
        %v2097 = vmul.f32 %v2014, %v2046
        %v2098 = vmul.f32 %v2015, %v2046
        %v2099 = vmul.f32 %v2016, %v2046
        %v2100 = vmul.f32 %v2017, %v2046
        %v2101 = vmul.f32 %v2018, %v2046
        %v2102 = vmul.f32 %v2019, %v2046
        %v2103 = vmul.f32 %v2020, %v2046
        %v2104 = vmul.f32 %v2021, %v2046
        %v2105 = vmul.f32 %v2022, %v2046
        %v2106 = vmul.f32 %v2023, %v2046
        %v2107 = vmul.f32 %v2024, %v2046
        %v2108 = vmul.f32 %v2025, %v2046
        %v2109 = vmul.f32 %v2026, %v2046
        %v2110 = vmul.f32 %v2027, %v2046
        %v2111 = vmul.f32 %v2028, %v2046
        %v2112 = vmul.f32 %v2029, %v2046
        %v2113 = vmul.f32 %v2030, %v2046
        %v2114 = vmul.f32 %v2031, %v2046
        %v2115 = vmul.f32 %v2032, %v2046
        %v2116 = vmul.f32 %v2033, %v2046
        %v2117 = vmul.f32 %v2034, %v2046
        %v2118 = vmul.f32 %v2035, %v2046
        %v2119 = vmul.f32 %v2036, %v2046
        %v2120 = vmul.f32 %v2037, %v2046
        %v2121 = vmul.f32 %v2038, %v2046
        %v2122 = vmul.f32 %v2039, %v2046
        %v2123 = vmul.f32 %v2040, %v2046
        %v2124 = vmul.f32 %v2041, %v2046
        %v2125 = vmul.f32 %v2042, %v2046
        %v2126 = vmul.f32 %v2043, %v2046
        %v2127 = vld [vmem:[%s2] sm:$0x1]
        %v2129 = vperm.slane %v2127, 0
        %v2131 = vadd.f32 %v2048, %v2129
        %v2132 = vadd.f32 %v2049, %v2129
        %v2133 = vadd.f32 %v2050, %v2129
        %v2134 = vadd.f32 %v2051, %v2129
        %v2135 = vadd.f32 %v2052, %v2129
        %v2136 = vadd.f32 %v2053, %v2129
        %v2137 = vadd.f32 %v2054, %v2129
        %v2138 = vadd.f32 %v2055, %v2129
        %v2139 = vadd.f32 %v2056, %v2129
        %v2140 = vadd.f32 %v2057, %v2129
        %v2141 = vadd.f32 %v2058, %v2129
        %v2142 = vadd.f32 %v2059, %v2129
        %v2143 = vadd.f32 %v2060, %v2129
        %v2144 = vadd.f32 %v2061, %v2129
        %v2145 = vadd.f32 %v2062, %v2129
        %v2146 = vadd.f32 %v2063, %v2129
        %v2147 = vadd.f32 %v2064, %v2129
        %v2148 = vadd.f32 %v2065, %v2129
        %v2149 = vadd.f32 %v2066, %v2129
        %v2150 = vadd.f32 %v2067, %v2129
        %v2151 = vadd.f32 %v2068, %v2129
        %v2152 = vadd.f32 %v2069, %v2129
        %v2153 = vadd.f32 %v2070, %v2129
        %v2154 = vadd.f32 %v2071, %v2129
        %v2155 = vadd.f32 %v2072, %v2129
        %v2156 = vadd.f32 %v2073, %v2129
        %v2157 = vadd.f32 %v2074, %v2129
        %v2158 = vadd.f32 %v2075, %v2129
        %v2159 = vadd.f32 %v2076, %v2129
        %v2160 = vadd.f32 %v2077, %v2129
        %v2161 = vadd.f32 %v2078, %v2129
        %v2162 = vadd.f32 %v2079, %v2129
        %v2163 = vadd.f32 %v2080, %v2129
        %v2164 = vadd.f32 %v2081, %v2129
        %v2165 = vadd.f32 %v2082, %v2129
        %v2166 = vadd.f32 %v2083, %v2129
        %v2167 = vadd.f32 %v2084, %v2129
        %v2168 = vadd.f32 %v2085, %v2129
        %v2169 = vadd.f32 %v2086, %v2129
        %v2170 = vadd.f32 %v2087, %v2129
        %v2171 = vadd.f32 %v2088, %v2129
        %v2172 = vadd.f32 %v2089, %v2129
        %v2173 = vadd.f32 %v2090, %v2129
        %v2174 = vadd.f32 %v2091, %v2129
        %v2175 = vadd.f32 %v2092, %v2129
        %v2176 = vadd.f32 %v2093, %v2129
        %v2177 = vadd.f32 %v2094, %v2129
        %v2178 = vadd.f32 %v2095, %v2129
        %v2179 = vadd.f32 %v2096, %v2129
        %v2180 = vadd.f32 %v2097, %v2129
        %v2181 = vadd.f32 %v2098, %v2129
        %v2182 = vadd.f32 %v2099, %v2129
        %v2183 = vadd.f32 %v2100, %v2129
        %v2184 = vadd.f32 %v2101, %v2129
        %v2185 = vadd.f32 %v2102, %v2129
        %v2186 = vadd.f32 %v2103, %v2129
        %v2187 = vadd.f32 %v2104, %v2129
        %v2188 = vadd.f32 %v2105, %v2129
        %v2189 = vadd.f32 %v2106, %v2129
        %v2190 = vadd.f32 %v2107, %v2129
        %v2191 = vadd.f32 %v2108, %v2129
        %v2192 = vadd.f32 %v2109, %v2129
        %v2193 = vadd.f32 %v2110, %v2129
        %v2194 = vadd.f32 %v2111, %v2129
        %v2195 = vadd.f32 %v2112, %v2129
        %v2196 = vadd.f32 %v2113, %v2129
        %v2197 = vadd.f32 %v2114, %v2129
        %v2198 = vadd.f32 %v2115, %v2129
        %v2199 = vadd.f32 %v2116, %v2129
        %v2200 = vadd.f32 %v2117, %v2129
        %v2201 = vadd.f32 %v2118, %v2129
        %v2202 = vadd.f32 %v2119, %v2129
        %v2203 = vadd.f32 %v2120, %v2129
        %v2204 = vadd.f32 %v2121, %v2129
        %v2205 = vadd.f32 %v2122, %v2129
        %v2206 = vadd.f32 %v2123, %v2129
        %v2207 = vadd.f32 %v2124, %v2129
        %v2208 = vadd.f32 %v2125, %v2129
        %v2209 = vadd.f32 %v2126, %v2129
        %v2210 = vpack.c.bf16 %v2132, %v2131
        %v2211 = vpack.c.bf16 %v2134, %v2133
        %v2212 = vpack.c.bf16 %v2136, %v2135
        %v2213 = vpack.c.bf16 %v2138, %v2137
        %v2214 = vpack.c.bf16 %v2140, %v2139
        %v2215 = vpack.c.bf16 %v2142, %v2141
        %v2216 = vpack.c.bf16 %v2144, %v2143
        %v2217 = vpack.c.bf16 %v2146, %v2145
        %v2218 = vpack.c.bf16 %v2148, %v2147
        %v2219 = vpack.c.bf16 %v2150, %v2149
        %v2220 = vpack.c.bf16 %v2152, %v2151
        %v2221 = vpack.c.bf16 %v2154, %v2153
        %v2222 = vpack.c.bf16 %v2156, %v2155
        %v2223 = vpack.c.bf16 %v2158, %v2157
        %v2224 = vpack.c.bf16 %v2160, %v2159
        %v2225 = vpack.c.bf16 %v2162, %v2161
        %v2226 = vpack.c.bf16 %v2164, %v2163
        %v2227 = vpack.c.bf16 %v2166, %v2165
        %v2228 = vpack.c.bf16 %v2168, %v2167
        %v2229 = vpack.c.bf16 %v2170, %v2169
        %v2230 = vpack.c.bf16 %v2172, %v2171
        %v2231 = vpack.c.bf16 %v2174, %v2173
        %v2232 = vpack.c.bf16 %v2176, %v2175
        %v2233 = vpack.c.bf16 %v2178, %v2177
        %v2234 = vpack.c.bf16 %v2180, %v2179
        %v2235 = vpack.c.bf16 %v2182, %v2181
        %v2236 = vpack.c.bf16 %v2184, %v2183
        %v2237 = vpack.c.bf16 %v2186, %v2185
        %v2238 = vpack.c.bf16 %v2188, %v2187
        %v2239 = vpack.c.bf16 %v2190, %v2189
        %v2240 = vpack.c.bf16 %v2192, %v2191
        %v2241 = vpack.c.bf16 %v2194, %v2193
        %v2242 = vpack.c.bf16 %v2196, %v2195
        %v2243 = vpack.c.bf16 %v2198, %v2197
        %v2244 = vpack.c.bf16 %v2200, %v2199
        %v2245 = vpack.c.bf16 %v2202, %v2201
        %v2246 = vpack.c.bf16 %v2204, %v2203
        %v2247 = vpack.c.bf16 %v2206, %v2205
        %v2248 = vpack.c.bf16 %v2208, %v2207
        %v2249 = vpack.c.bf16 %v2209, %v2209
        %v2250 = vld [vmem:[#allocation7] sm:$0xff]
        %v2251 = vld [vmem:[#allocation7 + $0x8] sm:$0xff]
        %v2252 = vld [vmem:[#allocation7 + $0x10] sm:$0xff]
        %v2253 = vld [vmem:[#allocation7 + $0x18] sm:$0xff]
        %v2254 = vld [vmem:[#allocation7 + $0x20] sm:$0xff]
        %v2255 = vld [vmem:[#allocation7 + $0x28] sm:$0xff]
        %v2256 = vld [vmem:[#allocation7 + $0x30] sm:$0xff]
        %v2257 = vld [vmem:[#allocation7 + $0x38] sm:$0xff]
        %v2258 = vld [vmem:[#allocation7 + $0x40] sm:$0xff]
        %v2259 = vld [vmem:[#allocation7 + $0x48] sm:$0xff]
        %v2260 = vld [vmem:[#allocation7 + $0x50] sm:$0xff]
        %v2261 = vld [vmem:[#allocation7 + $0x58] sm:$0xff]
        %v2262 = vld [vmem:[#allocation7 + $0x60] sm:$0xff]
        %v2263 = vld [vmem:[#allocation7 + $0x68] sm:$0xff]
        %v2264 = vld [vmem:[#allocation7 + $0x70] sm:$0xff]
        %v2265 = vld [vmem:[#allocation7 + $0x78] sm:$0xff]
        %v2266 = vld [vmem:[#allocation7 + $0x80] sm:$0xff]
        %v2267 = vld [vmem:[#allocation7 + $0x88] sm:$0xff]
        %v2268 = vld [vmem:[#allocation7 + $0x90] sm:$0xff]
        %v2269 = vld [vmem:[#allocation7 + $0x98] sm:$0xff]
        %v2270 = vld [vmem:[#allocation7 + $0xa0] sm:$0xff]
        %v2271 = vld [vmem:[#allocation7 + $0xa8] sm:$0xff]
        %v2272 = vld [vmem:[#allocation7 + $0xb0] sm:$0xff]
        %v2273 = vld [vmem:[#allocation7 + $0xb8] sm:$0xff]
        %v2274 = vld [vmem:[#allocation7 + $0xc0] sm:$0xff]
        %v2275 = vld [vmem:[#allocation7 + $0xc8] sm:$0xff]
        %v2276 = vld [vmem:[#allocation7 + $0xd0] sm:$0xff]
        %v2277 = vld [vmem:[#allocation7 + $0xd8] sm:$0xff]
        %v2278 = vld [vmem:[#allocation7 + $0xe0] sm:$0xff]
        %v2279 = vld [vmem:[#allocation7 + $0xe8] sm:$0xff]
        %v2280 = vld [vmem:[#allocation7 + $0xf0] sm:$0xff]
        %v2281 = vld [vmem:[#allocation7 + $0xf8] sm:$0xff]
        %v2282 = vld [vmem:[#allocation8] sm:$0xf]
        %v2284 = vperm.slane %v2282, 0
        %v2285 = vperm.slane %v2282, 1
        %v2286 = vperm.slane %v2282, 2
        %v2287 = vperm.slane %v2282, 3
        %v2324 = vunpack.c.l.b16 %v2250
        %v2325 = vunpack.c.h.b16 %v2250
        %v2326 = vunpack.c.l.b16 %v2251
        %v2327 = vunpack.c.h.b16 %v2251
        %v2328 = vunpack.c.l.b16 %v2252
        %v2329 = vunpack.c.h.b16 %v2252
        %v2330 = vunpack.c.l.b16 %v2253
        %v2331 = vunpack.c.h.b16 %v2253
        %v2332 = vunpack.c.l.b16 %v2254
        %v2333 = vunpack.c.h.b16 %v2254
        %v2334 = vunpack.c.l.b16 %v2255
        %v2335 = vunpack.c.h.b16 %v2255
        %v2336 = vunpack.c.l.b16 %v2256
        %v2337 = vunpack.c.h.b16 %v2256
        %v2338 = vunpack.c.l.b16 %v2257
        %v2339 = vunpack.c.h.b16 %v2257
        %v2340 = vunpack.c.l.b16 %v2258
        %v2341 = vunpack.c.h.b16 %v2258
        %v2342 = vunpack.c.l.b16 %v2259
        %v2343 = vunpack.c.h.b16 %v2259
        %v2344 = vunpack.c.l.b16 %v2260
        %v2345 = vunpack.c.h.b16 %v2260
        %v2346 = vunpack.c.l.b16 %v2261
        %v2347 = vunpack.c.h.b16 %v2261
        %v2348 = vunpack.c.l.b16 %v2262
        %v2349 = vunpack.c.h.b16 %v2262
        %v2350 = vunpack.c.l.b16 %v2263
        %v2351 = vunpack.c.h.b16 %v2263
        %v2352 = vunpack.c.l.b16 %v2264
        %v2353 = vunpack.c.h.b16 %v2264
        %v2354 = vunpack.c.l.b16 %v2265
        %v2355 = vunpack.c.h.b16 %v2265
        %v2356 = vunpack.c.l.b16 %v2266
        %v2357 = vunpack.c.h.b16 %v2266
        %v2358 = vunpack.c.l.b16 %v2267
        %v2359 = vunpack.c.h.b16 %v2267
        %v2360 = vunpack.c.l.b16 %v2268
        %v2361 = vunpack.c.h.b16 %v2268
        %v2362 = vunpack.c.l.b16 %v2269
        %v2363 = vunpack.c.h.b16 %v2269
        %v2364 = vunpack.c.l.b16 %v2270
        %v2365 = vunpack.c.h.b16 %v2270
        %v2366 = vunpack.c.l.b16 %v2271
        %v2367 = vunpack.c.h.b16 %v2271
        %v2368 = vunpack.c.l.b16 %v2272
        %v2369 = vunpack.c.h.b16 %v2272
        %v2370 = vunpack.c.l.b16 %v2273
        %v2371 = vunpack.c.h.b16 %v2273
        %v2372 = vunpack.c.l.b16 %v2274
        %v2373 = vunpack.c.h.b16 %v2274
        %v2374 = vunpack.c.l.b16 %v2275
        %v2375 = vunpack.c.h.b16 %v2275
        %v2376 = vunpack.c.l.b16 %v2276
        %v2377 = vunpack.c.h.b16 %v2276
        %v2378 = vunpack.c.l.b16 %v2277
        %v2379 = vunpack.c.h.b16 %v2277
        %v2380 = vunpack.c.l.b16 %v2278
        %v2381 = vunpack.c.h.b16 %v2278
        %v2382 = vunpack.c.l.b16 %v2279
        %v2383 = vunpack.c.h.b16 %v2279
        %v2384 = vunpack.c.l.b16 %v2280
        %v2385 = vunpack.c.h.b16 %v2280
        %v2386 = vunpack.c.l.b16 %v2281
        %v2387 = vunpack.c.h.b16 %v2281
        %v2388 = vpack.c.b16 %v2328, %v2324
        %v2389 = vpack.c.b16 %v2329, %v2325
        %v2390 = vpack.c.b16 %v2330, %v2326
        %v2391 = vpack.c.b16 %v2331, %v2327
        %v2392 = vpack.c.b16 %v2336, %v2332
        %v2393 = vpack.c.b16 %v2337, %v2333
        %v2394 = vpack.c.b16 %v2338, %v2334
        %v2395 = vpack.c.b16 %v2339, %v2335
        %v2396 = vpack.c.b16 %v2344, %v2340
        %v2397 = vpack.c.b16 %v2345, %v2341
        %v2398 = vpack.c.b16 %v2346, %v2342
        %v2399 = vpack.c.b16 %v2347, %v2343
        %v2400 = vpack.c.b16 %v2352, %v2348
        %v2401 = vpack.c.b16 %v2353, %v2349
        %v2402 = vpack.c.b16 %v2354, %v2350
        %v2403 = vpack.c.b16 %v2355, %v2351
        %v2404 = vpack.c.b16 %v2360, %v2356
        %v2405 = vpack.c.b16 %v2361, %v2357
        %v2406 = vpack.c.b16 %v2362, %v2358
        %v2407 = vpack.c.b16 %v2363, %v2359
        %v2408 = vpack.c.b16 %v2368, %v2364
        %v2409 = vpack.c.b16 %v2369, %v2365
        %v2410 = vpack.c.b16 %v2370, %v2366
        %v2411 = vpack.c.b16 %v2371, %v2367
        %v2412 = vpack.c.b16 %v2376, %v2372
        %v2413 = vpack.c.b16 %v2377, %v2373
        %v2414 = vpack.c.b16 %v2378, %v2374
        %v2415 = vpack.c.b16 %v2379, %v2375
        %v2416 = vpack.c.b16 %v2384, %v2380
        %v2417 = vpack.c.b16 %v2385, %v2381
        %v2418 = vpack.c.b16 %v2386, %v2382
        %v2419 = vpack.c.b16 %v2387, %v2383
        %2452 = vmatpush.bf16.msra.mxu0 %v2416
        %2453 = vmatpush.bf16.msra.mxu0 %v2412
        %2454 = vmatpush.bf16.msra.mxu0 %v2408
        %2455 = vmatpush.bf16.msra.mxu0 %v2404
        %2456 = vmatpush.bf16.msra.mxu0 %v2400
        %2457 = vmatpush.bf16.msra.mxu0 %v2396
        %2458 = vmatpush.bf16.msra.mxu0 %v2392
        %2459 = vmatpush.bf16.msra.mxu0 %v2388
        %2460 = vmatmul.bf16.gmra.mxu0 %v2210
        %v2461 = vpop.f32.mrf.mxu0
        %v2462 = vadd.f32 %v2284, %v2461
        %v2463 = vpop.f32.mrf.mxu0
        %v2464 = vadd.f32 %v2284, %v2463
        %2465 = vmatmul.bf16.gmra.mxu0 %v2211
        %v2466 = vpop.f32.mrf.mxu0
        %v2467 = vadd.f32 %v2284, %v2466
        %v2468 = vpop.f32.mrf.mxu0
        %v2469 = vadd.f32 %v2284, %v2468
        %2470 = vmatmul.bf16.gmra.mxu0 %v2212
        %v2471 = vpop.f32.mrf.mxu0
        %v2472 = vadd.f32 %v2284, %v2471
        %v2473 = vpop.f32.mrf.mxu0
        %v2474 = vadd.f32 %v2284, %v2473
        %2475 = vmatmul.bf16.gmra.mxu0 %v2213
        %v2476 = vpop.f32.mrf.mxu0
        %v2477 = vadd.f32 %v2284, %v2476
        %v2478 = vpop.f32.mrf.mxu0
        %v2479 = vadd.f32 %v2284, %v2478
        %2480 = vmatmul.bf16.gmra.mxu0 %v2214
        %v2481 = vpop.f32.mrf.mxu0
        %v2482 = vadd.f32 %v2284, %v2481
        %v2483 = vpop.f32.mrf.mxu0
        %v2484 = vadd.f32 %v2284, %v2483
        %2485 = vmatmul.bf16.gmra.mxu0 %v2215
        %v2486 = vpop.f32.mrf.mxu0
        %v2487 = vadd.f32 %v2284, %v2486
        %v2488 = vpop.f32.mrf.mxu0
        %v2489 = vadd.f32 %v2284, %v2488
        %2490 = vmatmul.bf16.gmra.mxu0 %v2216
        %v2491 = vpop.f32.mrf.mxu0
        %v2492 = vadd.f32 %v2284, %v2491
        %v2493 = vpop.f32.mrf.mxu0
        %v2494 = vadd.f32 %v2284, %v2493
        %2495 = vmatmul.bf16.gmra.mxu0 %v2217
        %v2496 = vpop.f32.mrf.mxu0
        %v2497 = vadd.f32 %v2284, %v2496
        %v2498 = vpop.f32.mrf.mxu0
        %v2499 = vadd.f32 %v2284, %v2498
        %2500 = vmatmul.bf16.gmra.mxu0 %v2218
        %v2501 = vpop.f32.mrf.mxu0
        %v2502 = vadd.f32 %v2284, %v2501
        %v2503 = vpop.f32.mrf.mxu0
        %v2504 = vadd.f32 %v2284, %v2503
        %2505 = vmatmul.bf16.gmra.mxu0 %v2219
        %v2506 = vpop.f32.mrf.mxu0
        %v2507 = vadd.f32 %v2284, %v2506
        %v2508 = vpop.f32.mrf.mxu0
        %v2509 = vadd.f32 %v2284, %v2508
        %2510 = vmatmul.bf16.gmra.mxu0 %v2220
        %v2511 = vpop.f32.mrf.mxu0
        %v2512 = vadd.f32 %v2284, %v2511
        %v2513 = vpop.f32.mrf.mxu0
        %v2514 = vadd.f32 %v2284, %v2513
        %2515 = vmatmul.bf16.gmra.mxu0 %v2221
        %v2516 = vpop.f32.mrf.mxu0
        %v2517 = vadd.f32 %v2284, %v2516
        %v2518 = vpop.f32.mrf.mxu0
        %v2519 = vadd.f32 %v2284, %v2518
        %2520 = vmatmul.bf16.gmra.mxu0 %v2222
        %v2521 = vpop.f32.mrf.mxu0
        %v2522 = vadd.f32 %v2284, %v2521
        %v2523 = vpop.f32.mrf.mxu0
        %v2524 = vadd.f32 %v2284, %v2523
        %2525 = vmatmul.bf16.gmra.mxu0 %v2223
        %v2526 = vpop.f32.mrf.mxu0
        %v2527 = vadd.f32 %v2284, %v2526
        %v2528 = vpop.f32.mrf.mxu0
        %v2529 = vadd.f32 %v2284, %v2528
        %2530 = vmatmul.bf16.gmra.mxu0 %v2224
        %v2531 = vpop.f32.mrf.mxu0
        %v2532 = vadd.f32 %v2284, %v2531
        %v2533 = vpop.f32.mrf.mxu0
        %v2534 = vadd.f32 %v2284, %v2533
        %2535 = vmatmul.bf16.gmra.mxu0 %v2225
        %v2536 = vpop.f32.mrf.mxu0
        %v2537 = vadd.f32 %v2284, %v2536
        %v2538 = vpop.f32.mrf.mxu0
        %v2539 = vadd.f32 %v2284, %v2538
        %2540 = vmatmul.bf16.gmra.mxu0 %v2226
        %v2541 = vpop.f32.mrf.mxu0
        %v2542 = vadd.f32 %v2284, %v2541
        %v2543 = vpop.f32.mrf.mxu0
        %v2544 = vadd.f32 %v2284, %v2543
        %2545 = vmatmul.bf16.gmra.mxu0 %v2227
        %v2546 = vpop.f32.mrf.mxu0
        %v2547 = vadd.f32 %v2284, %v2546
        %v2548 = vpop.f32.mrf.mxu0
        %v2549 = vadd.f32 %v2284, %v2548
        %2550 = vmatmul.bf16.gmra.mxu0 %v2228
        %v2551 = vpop.f32.mrf.mxu0
        %v2552 = vadd.f32 %v2284, %v2551
        %v2553 = vpop.f32.mrf.mxu0
        %v2554 = vadd.f32 %v2284, %v2553
        %2555 = vmatmul.bf16.gmra.mxu0 %v2229
        %v2556 = vpop.f32.mrf.mxu0
        %v2557 = vadd.f32 %v2284, %v2556
        %v2558 = vpop.f32.mrf.mxu0
        %v2559 = vadd.f32 %v2284, %v2558
        %2560 = vmatmul.bf16.gmra.mxu0 %v2230
        %v2561 = vpop.f32.mrf.mxu0
        %v2562 = vadd.f32 %v2284, %v2561
        %v2563 = vpop.f32.mrf.mxu0
        %v2564 = vadd.f32 %v2284, %v2563
        %2565 = vmatmul.bf16.gmra.mxu0 %v2231
        %v2566 = vpop.f32.mrf.mxu0
        %v2567 = vadd.f32 %v2284, %v2566
        %v2568 = vpop.f32.mrf.mxu0
        %v2569 = vadd.f32 %v2284, %v2568
        %2570 = vmatmul.bf16.gmra.mxu0 %v2232
        %v2571 = vpop.f32.mrf.mxu0
        %v2572 = vadd.f32 %v2284, %v2571
        %v2573 = vpop.f32.mrf.mxu0
        %v2574 = vadd.f32 %v2284, %v2573
        %2575 = vmatmul.bf16.gmra.mxu0 %v2233
        %v2576 = vpop.f32.mrf.mxu0
        %v2577 = vadd.f32 %v2284, %v2576
        %v2578 = vpop.f32.mrf.mxu0
        %v2579 = vadd.f32 %v2284, %v2578
        %2580 = vmatmul.bf16.gmra.mxu0 %v2234
        %v2581 = vpop.f32.mrf.mxu0
        %v2582 = vadd.f32 %v2284, %v2581
        %v2583 = vpop.f32.mrf.mxu0
        %v2584 = vadd.f32 %v2284, %v2583
        %2585 = vmatmul.bf16.gmra.mxu0 %v2235
        %v2586 = vpop.f32.mrf.mxu0
        %v2587 = vadd.f32 %v2284, %v2586
        %v2588 = vpop.f32.mrf.mxu0
        %v2589 = vadd.f32 %v2284, %v2588
        %2590 = vmatmul.bf16.gmra.mxu0 %v2236
        %v2591 = vpop.f32.mrf.mxu0
        %v2592 = vadd.f32 %v2284, %v2591
        %v2593 = vpop.f32.mrf.mxu0
        %v2594 = vadd.f32 %v2284, %v2593
        %2595 = vmatmul.bf16.gmra.mxu0 %v2237
        %v2596 = vpop.f32.mrf.mxu0
        %v2597 = vadd.f32 %v2284, %v2596
        %v2598 = vpop.f32.mrf.mxu0
        %v2599 = vadd.f32 %v2284, %v2598
        %2600 = vmatmul.bf16.gmra.mxu0 %v2238
        %v2601 = vpop.f32.mrf.mxu0
        %v2602 = vadd.f32 %v2284, %v2601
        %v2603 = vpop.f32.mrf.mxu0
        %v2604 = vadd.f32 %v2284, %v2603
        %2605 = vmatmul.bf16.gmra.mxu0 %v2239
        %v2606 = vpop.f32.mrf.mxu0
        %v2607 = vadd.f32 %v2284, %v2606
        %v2608 = vpop.f32.mrf.mxu0
        %v2609 = vadd.f32 %v2284, %v2608
        %2610 = vmatmul.bf16.gmra.mxu0 %v2240
        %v2611 = vpop.f32.mrf.mxu0
        %v2612 = vadd.f32 %v2284, %v2611
        %v2613 = vpop.f32.mrf.mxu0
        %v2614 = vadd.f32 %v2284, %v2613
        %2615 = vmatmul.bf16.gmra.mxu0 %v2241
        %v2616 = vpop.f32.mrf.mxu0
        %v2617 = vadd.f32 %v2284, %v2616
        %v2618 = vpop.f32.mrf.mxu0
        %v2619 = vadd.f32 %v2284, %v2618
        %2620 = vmatmul.bf16.gmra.mxu0 %v2242
        %v2621 = vpop.f32.mrf.mxu0
        %v2622 = vadd.f32 %v2284, %v2621
        %v2623 = vpop.f32.mrf.mxu0
        %v2624 = vadd.f32 %v2284, %v2623
        %2625 = vmatmul.bf16.gmra.mxu0 %v2243
        %v2626 = vpop.f32.mrf.mxu0
        %v2627 = vadd.f32 %v2284, %v2626
        %v2628 = vpop.f32.mrf.mxu0
        %v2629 = vadd.f32 %v2284, %v2628
        %2630 = vmatmul.bf16.gmra.mxu0 %v2244
        %v2631 = vpop.f32.mrf.mxu0
        %v2632 = vadd.f32 %v2284, %v2631
        %v2633 = vpop.f32.mrf.mxu0
        %v2634 = vadd.f32 %v2284, %v2633
        %2635 = vmatmul.bf16.gmra.mxu0 %v2245
        %v2636 = vpop.f32.mrf.mxu0
        %v2637 = vadd.f32 %v2284, %v2636
        %v2638 = vpop.f32.mrf.mxu0
        %v2639 = vadd.f32 %v2284, %v2638
        %2640 = vmatmul.bf16.gmra.mxu0 %v2246
        %v2641 = vpop.f32.mrf.mxu0
        %v2642 = vadd.f32 %v2284, %v2641
        %v2643 = vpop.f32.mrf.mxu0
        %v2644 = vadd.f32 %v2284, %v2643
        %2645 = vmatmul.bf16.gmra.mxu0 %v2247
        %v2646 = vpop.f32.mrf.mxu0
        %v2647 = vadd.f32 %v2284, %v2646
        %v2648 = vpop.f32.mrf.mxu0
        %v2649 = vadd.f32 %v2284, %v2648
        %2650 = vmatmul.bf16.gmra.mxu0 %v2248
        %v2651 = vpop.f32.mrf.mxu0
        %v2652 = vadd.f32 %v2284, %v2651
        %v2653 = vpop.f32.mrf.mxu0
        %v2654 = vadd.f32 %v2284, %v2653
        %2655 = vmatmul.bf16.gmra.mxu0 %v2249
        %v2656 = vpop.f32.mrf.mxu0
        %v2657 = vadd.f32 %v2284, %v2656
        %v2658 = vpop.f32.mrf.mxu0
        %2659 = vdwg.mxu0
        %2660 = vmatpush.bf16.msra.mxu0 %v2417
        %2661 = vmatpush.bf16.msra.mxu0 %v2413
        %2662 = vmatpush.bf16.msra.mxu0 %v2409
        %2663 = vmatpush.bf16.msra.mxu0 %v2405
        %2664 = vmatpush.bf16.msra.mxu0 %v2401
        %2665 = vmatpush.bf16.msra.mxu0 %v2397
        %2666 = vmatpush.bf16.msra.mxu0 %v2393
        %2667 = vmatpush.bf16.msra.mxu0 %v2389
        %2668 = vmatmul.bf16.gmra.mxu0 %v2210
        %v2669 = vpop.f32.mrf.mxu0
        %v2670 = vadd.f32 %v2285, %v2669
        %v2671 = vpop.f32.mrf.mxu0
        %v2672 = vadd.f32 %v2285, %v2671
        %2673 = vmatmul.bf16.gmra.mxu0 %v2211
        %v2674 = vpop.f32.mrf.mxu0
        %v2675 = vadd.f32 %v2285, %v2674
        %v2676 = vpop.f32.mrf.mxu0
        %v2677 = vadd.f32 %v2285, %v2676
        %2678 = vmatmul.bf16.gmra.mxu0 %v2212
        %v2679 = vpop.f32.mrf.mxu0
        %v2680 = vadd.f32 %v2285, %v2679
        %v2681 = vpop.f32.mrf.mxu0
        %v2682 = vadd.f32 %v2285, %v2681
        %2683 = vmatmul.bf16.gmra.mxu0 %v2213
        %v2684 = vpop.f32.mrf.mxu0
        %v2685 = vadd.f32 %v2285, %v2684
        %v2686 = vpop.f32.mrf.mxu0
        %v2687 = vadd.f32 %v2285, %v2686
        %2688 = vmatmul.bf16.gmra.mxu0 %v2214
        %v2689 = vpop.f32.mrf.mxu0
        %v2690 = vadd.f32 %v2285, %v2689
        %v2691 = vpop.f32.mrf.mxu0
        %v2692 = vadd.f32 %v2285, %v2691
        %2693 = vmatmul.bf16.gmra.mxu0 %v2215
        %v2694 = vpop.f32.mrf.mxu0
        %v2695 = vadd.f32 %v2285, %v2694
        %v2696 = vpop.f32.mrf.mxu0
        %v2697 = vadd.f32 %v2285, %v2696
        %2698 = vmatmul.bf16.gmra.mxu0 %v2216
        %v2699 = vpop.f32.mrf.mxu0
        %v2700 = vadd.f32 %v2285, %v2699
        %v2701 = vpop.f32.mrf.mxu0
        %v2702 = vadd.f32 %v2285, %v2701
        %2703 = vmatmul.bf16.gmra.mxu0 %v2217
        %v2704 = vpop.f32.mrf.mxu0
        %v2705 = vadd.f32 %v2285, %v2704
        %v2706 = vpop.f32.mrf.mxu0
        %v2707 = vadd.f32 %v2285, %v2706
        %2708 = vmatmul.bf16.gmra.mxu0 %v2218
        %v2709 = vpop.f32.mrf.mxu0
        %v2710 = vadd.f32 %v2285, %v2709
        %v2711 = vpop.f32.mrf.mxu0
        %v2712 = vadd.f32 %v2285, %v2711
        %2713 = vmatmul.bf16.gmra.mxu0 %v2219
        %v2714 = vpop.f32.mrf.mxu0
        %v2715 = vadd.f32 %v2285, %v2714
        %v2716 = vpop.f32.mrf.mxu0
        %v2717 = vadd.f32 %v2285, %v2716
        %2718 = vmatmul.bf16.gmra.mxu0 %v2220
        %v2719 = vpop.f32.mrf.mxu0
        %v2720 = vadd.f32 %v2285, %v2719
        %v2721 = vpop.f32.mrf.mxu0
        %v2722 = vadd.f32 %v2285, %v2721
        %2723 = vmatmul.bf16.gmra.mxu0 %v2221
        %v2724 = vpop.f32.mrf.mxu0
        %v2725 = vadd.f32 %v2285, %v2724
        %v2726 = vpop.f32.mrf.mxu0
        %v2727 = vadd.f32 %v2285, %v2726
        %2728 = vmatmul.bf16.gmra.mxu0 %v2222
        %v2729 = vpop.f32.mrf.mxu0
        %v2730 = vadd.f32 %v2285, %v2729
        %v2731 = vpop.f32.mrf.mxu0
        %v2732 = vadd.f32 %v2285, %v2731
        %2733 = vmatmul.bf16.gmra.mxu0 %v2223
        %v2734 = vpop.f32.mrf.mxu0
        %v2735 = vadd.f32 %v2285, %v2734
        %v2736 = vpop.f32.mrf.mxu0
        %v2737 = vadd.f32 %v2285, %v2736
        %2738 = vmatmul.bf16.gmra.mxu0 %v2224
        %v2739 = vpop.f32.mrf.mxu0
        %v2740 = vadd.f32 %v2285, %v2739
        %v2741 = vpop.f32.mrf.mxu0
        %v2742 = vadd.f32 %v2285, %v2741
        %2743 = vmatmul.bf16.gmra.mxu0 %v2225
        %v2744 = vpop.f32.mrf.mxu0
        %v2745 = vadd.f32 %v2285, %v2744
        %v2746 = vpop.f32.mrf.mxu0
        %v2747 = vadd.f32 %v2285, %v2746
        %2748 = vmatmul.bf16.gmra.mxu0 %v2226
        %v2749 = vpop.f32.mrf.mxu0
        %v2750 = vadd.f32 %v2285, %v2749
        %v2751 = vpop.f32.mrf.mxu0
        %v2752 = vadd.f32 %v2285, %v2751
        %2753 = vmatmul.bf16.gmra.mxu0 %v2227
        %v2754 = vpop.f32.mrf.mxu0
        %v2755 = vadd.f32 %v2285, %v2754
        %v2756 = vpop.f32.mrf.mxu0
        %v2757 = vadd.f32 %v2285, %v2756
        %2758 = vmatmul.bf16.gmra.mxu0 %v2228
        %v2759 = vpop.f32.mrf.mxu0
        %v2760 = vadd.f32 %v2285, %v2759
        %v2761 = vpop.f32.mrf.mxu0
        %v2762 = vadd.f32 %v2285, %v2761
        %2763 = vmatmul.bf16.gmra.mxu0 %v2229
        %v2764 = vpop.f32.mrf.mxu0
        %v2765 = vadd.f32 %v2285, %v2764
        %v2766 = vpop.f32.mrf.mxu0
        %v2767 = vadd.f32 %v2285, %v2766
        %2768 = vmatmul.bf16.gmra.mxu0 %v2230
        %v2769 = vpop.f32.mrf.mxu0
        %v2770 = vadd.f32 %v2285, %v2769
        %v2771 = vpop.f32.mrf.mxu0
        %v2772 = vadd.f32 %v2285, %v2771
        %2773 = vmatmul.bf16.gmra.mxu0 %v2231
        %v2774 = vpop.f32.mrf.mxu0
        %v2775 = vadd.f32 %v2285, %v2774
        %v2776 = vpop.f32.mrf.mxu0
        %v2777 = vadd.f32 %v2285, %v2776
        %2778 = vmatmul.bf16.gmra.mxu0 %v2232
        %v2779 = vpop.f32.mrf.mxu0
        %v2780 = vadd.f32 %v2285, %v2779
        %v2781 = vpop.f32.mrf.mxu0
        %v2782 = vadd.f32 %v2285, %v2781
        %2783 = vmatmul.bf16.gmra.mxu0 %v2233
        %v2784 = vpop.f32.mrf.mxu0
        %v2785 = vadd.f32 %v2285, %v2784
        %v2786 = vpop.f32.mrf.mxu0
        %v2787 = vadd.f32 %v2285, %v2786
        %2788 = vmatmul.bf16.gmra.mxu0 %v2234
        %v2789 = vpop.f32.mrf.mxu0
        %v2790 = vadd.f32 %v2285, %v2789
        %v2791 = vpop.f32.mrf.mxu0
        %v2792 = vadd.f32 %v2285, %v2791
        %2793 = vmatmul.bf16.gmra.mxu0 %v2235
        %v2794 = vpop.f32.mrf.mxu0
        %v2795 = vadd.f32 %v2285, %v2794
        %v2796 = vpop.f32.mrf.mxu0
        %v2797 = vadd.f32 %v2285, %v2796
        %2798 = vmatmul.bf16.gmra.mxu0 %v2236
        %v2799 = vpop.f32.mrf.mxu0
        %v2800 = vadd.f32 %v2285, %v2799
        %v2801 = vpop.f32.mrf.mxu0
        %v2802 = vadd.f32 %v2285, %v2801
        %2803 = vmatmul.bf16.gmra.mxu0 %v2237
        %v2804 = vpop.f32.mrf.mxu0
        %v2805 = vadd.f32 %v2285, %v2804
        %v2806 = vpop.f32.mrf.mxu0
        %v2807 = vadd.f32 %v2285, %v2806
        %2808 = vmatmul.bf16.gmra.mxu0 %v2238
        %v2809 = vpop.f32.mrf.mxu0
        %v2810 = vadd.f32 %v2285, %v2809
        %v2811 = vpop.f32.mrf.mxu0
        %v2812 = vadd.f32 %v2285, %v2811
        %2813 = vmatmul.bf16.gmra.mxu0 %v2239
        %v2814 = vpop.f32.mrf.mxu0
        %v2815 = vadd.f32 %v2285, %v2814
        %v2816 = vpop.f32.mrf.mxu0
        %v2817 = vadd.f32 %v2285, %v2816
        %2818 = vmatmul.bf16.gmra.mxu0 %v2240
        %v2819 = vpop.f32.mrf.mxu0
        %v2820 = vadd.f32 %v2285, %v2819
        %v2821 = vpop.f32.mrf.mxu0
        %v2822 = vadd.f32 %v2285, %v2821
        %2823 = vmatmul.bf16.gmra.mxu0 %v2241
        %v2824 = vpop.f32.mrf.mxu0
        %v2825 = vadd.f32 %v2285, %v2824
        %v2826 = vpop.f32.mrf.mxu0
        %v2827 = vadd.f32 %v2285, %v2826
        %2828 = vmatmul.bf16.gmra.mxu0 %v2242
        %v2829 = vpop.f32.mrf.mxu0
        %v2830 = vadd.f32 %v2285, %v2829
        %v2831 = vpop.f32.mrf.mxu0
        %v2832 = vadd.f32 %v2285, %v2831
        %2833 = vmatmul.bf16.gmra.mxu0 %v2243
        %v2834 = vpop.f32.mrf.mxu0
        %v2835 = vadd.f32 %v2285, %v2834
        %v2836 = vpop.f32.mrf.mxu0
        %v2837 = vadd.f32 %v2285, %v2836
        %2838 = vmatmul.bf16.gmra.mxu0 %v2244
        %v2839 = vpop.f32.mrf.mxu0
        %v2840 = vadd.f32 %v2285, %v2839
        %v2841 = vpop.f32.mrf.mxu0
        %v2842 = vadd.f32 %v2285, %v2841
        %2843 = vmatmul.bf16.gmra.mxu0 %v2245
        %v2844 = vpop.f32.mrf.mxu0
        %v2845 = vadd.f32 %v2285, %v2844
        %v2846 = vpop.f32.mrf.mxu0
        %v2847 = vadd.f32 %v2285, %v2846
        %2848 = vmatmul.bf16.gmra.mxu0 %v2246
        %v2849 = vpop.f32.mrf.mxu0
        %v2850 = vadd.f32 %v2285, %v2849
        %v2851 = vpop.f32.mrf.mxu0
        %v2852 = vadd.f32 %v2285, %v2851
        %2853 = vmatmul.bf16.gmra.mxu0 %v2247
        %v2854 = vpop.f32.mrf.mxu0
        %v2855 = vadd.f32 %v2285, %v2854
        %v2856 = vpop.f32.mrf.mxu0
        %v2857 = vadd.f32 %v2285, %v2856
        %2858 = vmatmul.bf16.gmra.mxu0 %v2248
        %v2859 = vpop.f32.mrf.mxu0
        %v2860 = vadd.f32 %v2285, %v2859
        %v2861 = vpop.f32.mrf.mxu0
        %v2862 = vadd.f32 %v2285, %v2861
        %2863 = vmatmul.bf16.gmra.mxu0 %v2249
        %v2864 = vpop.f32.mrf.mxu0
        %v2865 = vadd.f32 %v2285, %v2864
        %v2866 = vpop.f32.mrf.mxu0
        %2867 = vdwg.mxu0
        %2868 = vmatpush.bf16.msra.mxu0 %v2418
        %2869 = vmatpush.bf16.msra.mxu0 %v2414
        %2870 = vmatpush.bf16.msra.mxu0 %v2410
        %2871 = vmatpush.bf16.msra.mxu0 %v2406
        %2872 = vmatpush.bf16.msra.mxu0 %v2402
        %2873 = vmatpush.bf16.msra.mxu0 %v2398
        %2874 = vmatpush.bf16.msra.mxu0 %v2394
        %2875 = vmatpush.bf16.msra.mxu0 %v2390
        %2876 = vmatmul.bf16.gmra.mxu0 %v2210
        %v2877 = vpop.f32.mrf.mxu0
        %v2878 = vadd.f32 %v2286, %v2877
        %v2879 = vpop.f32.mrf.mxu0
        %v2880 = vadd.f32 %v2286, %v2879
        %2881 = vmatmul.bf16.gmra.mxu0 %v2211
        %v2882 = vpop.f32.mrf.mxu0
        %v2883 = vadd.f32 %v2286, %v2882
        %v2884 = vpop.f32.mrf.mxu0
        %v2885 = vadd.f32 %v2286, %v2884
        %2886 = vmatmul.bf16.gmra.mxu0 %v2212
        %v2887 = vpop.f32.mrf.mxu0
        %v2888 = vadd.f32 %v2286, %v2887
        %v2889 = vpop.f32.mrf.mxu0
        %v2890 = vadd.f32 %v2286, %v2889
        %2891 = vmatmul.bf16.gmra.mxu0 %v2213
        %v2892 = vpop.f32.mrf.mxu0
        %v2893 = vadd.f32 %v2286, %v2892
        %v2894 = vpop.f32.mrf.mxu0
        %v2895 = vadd.f32 %v2286, %v2894
        %2896 = vmatmul.bf16.gmra.mxu0 %v2214
        %v2897 = vpop.f32.mrf.mxu0
        %v2898 = vadd.f32 %v2286, %v2897
        %v2899 = vpop.f32.mrf.mxu0
        %v2900 = vadd.f32 %v2286, %v2899
        %2901 = vmatmul.bf16.gmra.mxu0 %v2215
        %v2902 = vpop.f32.mrf.mxu0
        %v2903 = vadd.f32 %v2286, %v2902
        %v2904 = vpop.f32.mrf.mxu0
        %v2905 = vadd.f32 %v2286, %v2904
        %2906 = vmatmul.bf16.gmra.mxu0 %v2216
        %v2907 = vpop.f32.mrf.mxu0
        %v2908 = vadd.f32 %v2286, %v2907
        %v2909 = vpop.f32.mrf.mxu0
        %v2910 = vadd.f32 %v2286, %v2909
        %2911 = vmatmul.bf16.gmra.mxu0 %v2217
        %v2912 = vpop.f32.mrf.mxu0
        %v2913 = vadd.f32 %v2286, %v2912
        %v2914 = vpop.f32.mrf.mxu0
        %v2915 = vadd.f32 %v2286, %v2914
        %2916 = vmatmul.bf16.gmra.mxu0 %v2218
        %v2917 = vpop.f32.mrf.mxu0
        %v2918 = vadd.f32 %v2286, %v2917
        %v2919 = vpop.f32.mrf.mxu0
        %v2920 = vadd.f32 %v2286, %v2919
        %2921 = vmatmul.bf16.gmra.mxu0 %v2219
        %v2922 = vpop.f32.mrf.mxu0
        %v2923 = vadd.f32 %v2286, %v2922
        %v2924 = vpop.f32.mrf.mxu0
        %v2925 = vadd.f32 %v2286, %v2924
        %2926 = vmatmul.bf16.gmra.mxu0 %v2220
        %v2927 = vpop.f32.mrf.mxu0
        %v2928 = vadd.f32 %v2286, %v2927
        %v2929 = vpop.f32.mrf.mxu0
        %v2930 = vadd.f32 %v2286, %v2929
        %2931 = vmatmul.bf16.gmra.mxu0 %v2221
        %v2932 = vpop.f32.mrf.mxu0
        %v2933 = vadd.f32 %v2286, %v2932
        %v2934 = vpop.f32.mrf.mxu0
        %v2935 = vadd.f32 %v2286, %v2934
        %2936 = vmatmul.bf16.gmra.mxu0 %v2222
        %v2937 = vpop.f32.mrf.mxu0
        %v2938 = vadd.f32 %v2286, %v2937
        %v2939 = vpop.f32.mrf.mxu0
        %v2940 = vadd.f32 %v2286, %v2939
        %2941 = vmatmul.bf16.gmra.mxu0 %v2223
        %v2942 = vpop.f32.mrf.mxu0
        %v2943 = vadd.f32 %v2286, %v2942
        %v2944 = vpop.f32.mrf.mxu0
        %v2945 = vadd.f32 %v2286, %v2944
        %2946 = vmatmul.bf16.gmra.mxu0 %v2224
        %v2947 = vpop.f32.mrf.mxu0
        %v2948 = vadd.f32 %v2286, %v2947
        %v2949 = vpop.f32.mrf.mxu0
        %v2950 = vadd.f32 %v2286, %v2949
        %2951 = vmatmul.bf16.gmra.mxu0 %v2225
        %v2952 = vpop.f32.mrf.mxu0
        %v2953 = vadd.f32 %v2286, %v2952
        %v2954 = vpop.f32.mrf.mxu0
        %v2955 = vadd.f32 %v2286, %v2954
        %2956 = vmatmul.bf16.gmra.mxu0 %v2226
        %v2957 = vpop.f32.mrf.mxu0
        %v2958 = vadd.f32 %v2286, %v2957
        %v2959 = vpop.f32.mrf.mxu0
        %v2960 = vadd.f32 %v2286, %v2959
        %2961 = vmatmul.bf16.gmra.mxu0 %v2227
        %v2962 = vpop.f32.mrf.mxu0
        %v2963 = vadd.f32 %v2286, %v2962
        %v2964 = vpop.f32.mrf.mxu0
        %v2965 = vadd.f32 %v2286, %v2964
        %2966 = vmatmul.bf16.gmra.mxu0 %v2228
        %v2967 = vpop.f32.mrf.mxu0
        %v2968 = vadd.f32 %v2286, %v2967
        %v2969 = vpop.f32.mrf.mxu0
        %v2970 = vadd.f32 %v2286, %v2969
        %2971 = vmatmul.bf16.gmra.mxu0 %v2229
        %v2972 = vpop.f32.mrf.mxu0
        %v2973 = vadd.f32 %v2286, %v2972
        %v2974 = vpop.f32.mrf.mxu0
        %v2975 = vadd.f32 %v2286, %v2974
        %2976 = vmatmul.bf16.gmra.mxu0 %v2230
        %v2977 = vpop.f32.mrf.mxu0
        %v2978 = vadd.f32 %v2286, %v2977
        %v2979 = vpop.f32.mrf.mxu0
        %v2980 = vadd.f32 %v2286, %v2979
        %2981 = vmatmul.bf16.gmra.mxu0 %v2231
        %v2982 = vpop.f32.mrf.mxu0
        %v2983 = vadd.f32 %v2286, %v2982
        %v2984 = vpop.f32.mrf.mxu0
        %v2985 = vadd.f32 %v2286, %v2984
        %2986 = vmatmul.bf16.gmra.mxu0 %v2232
        %v2987 = vpop.f32.mrf.mxu0
        %v2988 = vadd.f32 %v2286, %v2987
        %v2989 = vpop.f32.mrf.mxu0
        %v2990 = vadd.f32 %v2286, %v2989
        %2991 = vmatmul.bf16.gmra.mxu0 %v2233
        %v2992 = vpop.f32.mrf.mxu0
        %v2993 = vadd.f32 %v2286, %v2992
        %v2994 = vpop.f32.mrf.mxu0
        %v2995 = vadd.f32 %v2286, %v2994
        %2996 = vmatmul.bf16.gmra.mxu0 %v2234
        %v2997 = vpop.f32.mrf.mxu0
        %v2998 = vadd.f32 %v2286, %v2997
        %v2999 = vpop.f32.mrf.mxu0
        %v3000 = vadd.f32 %v2286, %v2999
        %3001 = vmatmul.bf16.gmra.mxu0 %v2235
        %v3002 = vpop.f32.mrf.mxu0
        %v3003 = vadd.f32 %v2286, %v3002
        %v3004 = vpop.f32.mrf.mxu0
        %v3005 = vadd.f32 %v2286, %v3004
        %3006 = vmatmul.bf16.gmra.mxu0 %v2236
        %v3007 = vpop.f32.mrf.mxu0
        %v3008 = vadd.f32 %v2286, %v3007
        %v3009 = vpop.f32.mrf.mxu0
        %v3010 = vadd.f32 %v2286, %v3009
        %3011 = vmatmul.bf16.gmra.mxu0 %v2237
        %v3012 = vpop.f32.mrf.mxu0
        %v3013 = vadd.f32 %v2286, %v3012
        %v3014 = vpop.f32.mrf.mxu0
        %v3015 = vadd.f32 %v2286, %v3014
        %3016 = vmatmul.bf16.gmra.mxu0 %v2238
        %v3017 = vpop.f32.mrf.mxu0
        %v3018 = vadd.f32 %v2286, %v3017
        %v3019 = vpop.f32.mrf.mxu0
        %v3020 = vadd.f32 %v2286, %v3019
        %3021 = vmatmul.bf16.gmra.mxu0 %v2239
        %v3022 = vpop.f32.mrf.mxu0
        %v3023 = vadd.f32 %v2286, %v3022
        %v3024 = vpop.f32.mrf.mxu0
        %v3025 = vadd.f32 %v2286, %v3024
        %3026 = vmatmul.bf16.gmra.mxu0 %v2240
        %v3027 = vpop.f32.mrf.mxu0
        %v3028 = vadd.f32 %v2286, %v3027
        %v3029 = vpop.f32.mrf.mxu0
        %v3030 = vadd.f32 %v2286, %v3029
        %3031 = vmatmul.bf16.gmra.mxu0 %v2241
        %v3032 = vpop.f32.mrf.mxu0
        %v3033 = vadd.f32 %v2286, %v3032
        %v3034 = vpop.f32.mrf.mxu0
        %v3035 = vadd.f32 %v2286, %v3034
        %3036 = vmatmul.bf16.gmra.mxu0 %v2242
        %v3037 = vpop.f32.mrf.mxu0
        %v3038 = vadd.f32 %v2286, %v3037
        %v3039 = vpop.f32.mrf.mxu0
        %v3040 = vadd.f32 %v2286, %v3039
        %3041 = vmatmul.bf16.gmra.mxu0 %v2243
        %v3042 = vpop.f32.mrf.mxu0
        %v3043 = vadd.f32 %v2286, %v3042
        %v3044 = vpop.f32.mrf.mxu0
        %v3045 = vadd.f32 %v2286, %v3044
        %3046 = vmatmul.bf16.gmra.mxu0 %v2244
        %v3047 = vpop.f32.mrf.mxu0
        %v3048 = vadd.f32 %v2286, %v3047
        %v3049 = vpop.f32.mrf.mxu0
        %v3050 = vadd.f32 %v2286, %v3049
        %3051 = vmatmul.bf16.gmra.mxu0 %v2245
        %v3052 = vpop.f32.mrf.mxu0
        %v3053 = vadd.f32 %v2286, %v3052
        %v3054 = vpop.f32.mrf.mxu0
        %v3055 = vadd.f32 %v2286, %v3054
        %3056 = vmatmul.bf16.gmra.mxu0 %v2246
        %v3057 = vpop.f32.mrf.mxu0
        %v3058 = vadd.f32 %v2286, %v3057
        %v3059 = vpop.f32.mrf.mxu0
        %v3060 = vadd.f32 %v2286, %v3059
        %3061 = vmatmul.bf16.gmra.mxu0 %v2247
        %v3062 = vpop.f32.mrf.mxu0
        %v3063 = vadd.f32 %v2286, %v3062
        %v3064 = vpop.f32.mrf.mxu0
        %v3065 = vadd.f32 %v2286, %v3064
        %3066 = vmatmul.bf16.gmra.mxu0 %v2248
        %v3067 = vpop.f32.mrf.mxu0
        %v3068 = vadd.f32 %v2286, %v3067
        %v3069 = vpop.f32.mrf.mxu0
        %v3070 = vadd.f32 %v2286, %v3069
        %3071 = vmatmul.bf16.gmra.mxu0 %v2249
        %v3072 = vpop.f32.mrf.mxu0
        %v3073 = vadd.f32 %v2286, %v3072
        %v3074 = vpop.f32.mrf.mxu0
        %3075 = vdwg.mxu0
        %3076 = vmatpush.bf16.msra.mxu0 %v2419
        %3077 = vmatpush.bf16.msra.mxu0 %v2415
        %3078 = vmatpush.bf16.msra.mxu0 %v2411
        %3079 = vmatpush.bf16.msra.mxu0 %v2407
        %3080 = vmatpush.bf16.msra.mxu0 %v2403
        %3081 = vmatpush.bf16.msra.mxu0 %v2399
        %3082 = vmatpush.bf16.msra.mxu0 %v2395
        %3083 = vmatpush.bf16.msra.mxu0 %v2391
        %3084 = vmatmul.bf16.gmra.mxu0 %v2210
        %v3085 = vpop.f32.mrf.mxu0
        %v3086 = vadd.f32 %v2287, %v3085
        %v3087 = vpop.f32.mrf.mxu0
        %v3088 = vadd.f32 %v2287, %v3087
        %3089 = vmatmul.bf16.gmra.mxu0 %v2211
        %v3090 = vpop.f32.mrf.mxu0
        %v3091 = vadd.f32 %v2287, %v3090
        %v3092 = vpop.f32.mrf.mxu0
        %v3093 = vadd.f32 %v2287, %v3092
        %3094 = vmatmul.bf16.gmra.mxu0 %v2212
        %v3095 = vpop.f32.mrf.mxu0
        %v3096 = vadd.f32 %v2287, %v3095
        %v3097 = vpop.f32.mrf.mxu0
        %v3098 = vadd.f32 %v2287, %v3097
        %3099 = vmatmul.bf16.gmra.mxu0 %v2213
        %v3100 = vpop.f32.mrf.mxu0
        %v3101 = vadd.f32 %v2287, %v3100
        %v3102 = vpop.f32.mrf.mxu0
        %v3103 = vadd.f32 %v2287, %v3102
        %3104 = vmatmul.bf16.gmra.mxu0 %v2214
        %v3105 = vpop.f32.mrf.mxu0
        %v3106 = vadd.f32 %v2287, %v3105
        %v3107 = vpop.f32.mrf.mxu0
        %v3108 = vadd.f32 %v2287, %v3107
        %3109 = vmatmul.bf16.gmra.mxu0 %v2215
        %v3110 = vpop.f32.mrf.mxu0
        %v3111 = vadd.f32 %v2287, %v3110
        %v3112 = vpop.f32.mrf.mxu0
        %v3113 = vadd.f32 %v2287, %v3112
        %3114 = vmatmul.bf16.gmra.mxu0 %v2216
        %v3115 = vpop.f32.mrf.mxu0
        %v3116 = vadd.f32 %v2287, %v3115
        %v3117 = vpop.f32.mrf.mxu0
        %v3118 = vadd.f32 %v2287, %v3117
        %3119 = vmatmul.bf16.gmra.mxu0 %v2217
        %v3120 = vpop.f32.mrf.mxu0
        %v3121 = vadd.f32 %v2287, %v3120
        %v3122 = vpop.f32.mrf.mxu0
        %v3123 = vadd.f32 %v2287, %v3122
        %3124 = vmatmul.bf16.gmra.mxu0 %v2218
        %v3125 = vpop.f32.mrf.mxu0
        %v3126 = vadd.f32 %v2287, %v3125
        %v3127 = vpop.f32.mrf.mxu0
        %v3128 = vadd.f32 %v2287, %v3127
        %3129 = vmatmul.bf16.gmra.mxu0 %v2219
        %v3130 = vpop.f32.mrf.mxu0
        %v3131 = vadd.f32 %v2287, %v3130
        %v3132 = vpop.f32.mrf.mxu0
        %v3133 = vadd.f32 %v2287, %v3132
        %3134 = vmatmul.bf16.gmra.mxu0 %v2220
        %v3135 = vpop.f32.mrf.mxu0
        %v3136 = vadd.f32 %v2287, %v3135
        %v3137 = vpop.f32.mrf.mxu0
        %v3138 = vadd.f32 %v2287, %v3137
        %3139 = vmatmul.bf16.gmra.mxu0 %v2221
        %v3140 = vpop.f32.mrf.mxu0
        %v3141 = vadd.f32 %v2287, %v3140
        %v3142 = vpop.f32.mrf.mxu0
        %v3143 = vadd.f32 %v2287, %v3142
        %3144 = vmatmul.bf16.gmra.mxu0 %v2222
        %v3145 = vpop.f32.mrf.mxu0
        %v3146 = vadd.f32 %v2287, %v3145
        %v3147 = vpop.f32.mrf.mxu0
        %v3148 = vadd.f32 %v2287, %v3147
        %3149 = vmatmul.bf16.gmra.mxu0 %v2223
        %v3150 = vpop.f32.mrf.mxu0
        %v3151 = vadd.f32 %v2287, %v3150
        %v3152 = vpop.f32.mrf.mxu0
        %v3153 = vadd.f32 %v2287, %v3152
        %3154 = vmatmul.bf16.gmra.mxu0 %v2224
        %v3155 = vpop.f32.mrf.mxu0
        %v3156 = vadd.f32 %v2287, %v3155
        %v3157 = vpop.f32.mrf.mxu0
        %v3158 = vadd.f32 %v2287, %v3157
        %3159 = vmatmul.bf16.gmra.mxu0 %v2225
        %v3160 = vpop.f32.mrf.mxu0
        %v3161 = vadd.f32 %v2287, %v3160
        %v3162 = vpop.f32.mrf.mxu0
        %v3163 = vadd.f32 %v2287, %v3162
        %3164 = vmatmul.bf16.gmra.mxu0 %v2226
        %v3165 = vpop.f32.mrf.mxu0
        %v3166 = vadd.f32 %v2287, %v3165
        %v3167 = vpop.f32.mrf.mxu0
        %v3168 = vadd.f32 %v2287, %v3167
        %3169 = vmatmul.bf16.gmra.mxu0 %v2227
        %v3170 = vpop.f32.mrf.mxu0
        %v3171 = vadd.f32 %v2287, %v3170
        %v3172 = vpop.f32.mrf.mxu0
        %v3173 = vadd.f32 %v2287, %v3172
        %3174 = vmatmul.bf16.gmra.mxu0 %v2228
        %v3175 = vpop.f32.mrf.mxu0
        %v3176 = vadd.f32 %v2287, %v3175
        %v3177 = vpop.f32.mrf.mxu0
        %v3178 = vadd.f32 %v2287, %v3177
        %3179 = vmatmul.bf16.gmra.mxu0 %v2229
        %v3180 = vpop.f32.mrf.mxu0
        %v3181 = vadd.f32 %v2287, %v3180
        %v3182 = vpop.f32.mrf.mxu0
        %v3183 = vadd.f32 %v2287, %v3182
        %3184 = vmatmul.bf16.gmra.mxu0 %v2230
        %v3185 = vpop.f32.mrf.mxu0
        %v3186 = vadd.f32 %v2287, %v3185
        %v3187 = vpop.f32.mrf.mxu0
        %v3188 = vadd.f32 %v2287, %v3187
        %3189 = vmatmul.bf16.gmra.mxu0 %v2231
        %v3190 = vpop.f32.mrf.mxu0
        %v3191 = vadd.f32 %v2287, %v3190
        %v3192 = vpop.f32.mrf.mxu0
        %v3193 = vadd.f32 %v2287, %v3192
        %3194 = vmatmul.bf16.gmra.mxu0 %v2232
        %v3195 = vpop.f32.mrf.mxu0
        %v3196 = vadd.f32 %v2287, %v3195
        %v3197 = vpop.f32.mrf.mxu0
        %v3198 = vadd.f32 %v2287, %v3197
        %3199 = vmatmul.bf16.gmra.mxu0 %v2233
        %v3200 = vpop.f32.mrf.mxu0
        %v3201 = vadd.f32 %v2287, %v3200
        %v3202 = vpop.f32.mrf.mxu0
        %v3203 = vadd.f32 %v2287, %v3202
        %3204 = vmatmul.bf16.gmra.mxu0 %v2234
        %v3205 = vpop.f32.mrf.mxu0
        %v3206 = vadd.f32 %v2287, %v3205
        %v3207 = vpop.f32.mrf.mxu0
        %v3208 = vadd.f32 %v2287, %v3207
        %3209 = vmatmul.bf16.gmra.mxu0 %v2235
        %v3210 = vpop.f32.mrf.mxu0
        %v3211 = vadd.f32 %v2287, %v3210
        %v3212 = vpop.f32.mrf.mxu0
        %v3213 = vadd.f32 %v2287, %v3212
        %3214 = vmatmul.bf16.gmra.mxu0 %v2236
        %v3215 = vpop.f32.mrf.mxu0
        %v3216 = vadd.f32 %v2287, %v3215
        %v3217 = vpop.f32.mrf.mxu0
        %v3218 = vadd.f32 %v2287, %v3217
        %3219 = vmatmul.bf16.gmra.mxu0 %v2237
        %v3220 = vpop.f32.mrf.mxu0
        %v3221 = vadd.f32 %v2287, %v3220
        %v3222 = vpop.f32.mrf.mxu0
        %v3223 = vadd.f32 %v2287, %v3222
        %3224 = vmatmul.bf16.gmra.mxu0 %v2238
        %v3225 = vpop.f32.mrf.mxu0
        %v3226 = vadd.f32 %v2287, %v3225
        %v3227 = vpop.f32.mrf.mxu0
        %v3228 = vadd.f32 %v2287, %v3227
        %3229 = vmatmul.bf16.gmra.mxu0 %v2239
        %v3230 = vpop.f32.mrf.mxu0
        %v3231 = vadd.f32 %v2287, %v3230
        %v3232 = vpop.f32.mrf.mxu0
        %v3233 = vadd.f32 %v2287, %v3232
        %3234 = vmatmul.bf16.gmra.mxu0 %v2240
        %v3235 = vpop.f32.mrf.mxu0
        %v3236 = vadd.f32 %v2287, %v3235
        %v3237 = vpop.f32.mrf.mxu0
        %v3238 = vadd.f32 %v2287, %v3237
        %3239 = vmatmul.bf16.gmra.mxu0 %v2241
        %v3240 = vpop.f32.mrf.mxu0
        %v3241 = vadd.f32 %v2287, %v3240
        %v3242 = vpop.f32.mrf.mxu0
        %v3243 = vadd.f32 %v2287, %v3242
        %3244 = vmatmul.bf16.gmra.mxu0 %v2242
        %v3245 = vpop.f32.mrf.mxu0
        %v3246 = vadd.f32 %v2287, %v3245
        %v3247 = vpop.f32.mrf.mxu0
        %v3248 = vadd.f32 %v2287, %v3247
        %3249 = vmatmul.bf16.gmra.mxu0 %v2243
        %v3250 = vpop.f32.mrf.mxu0
        %v3251 = vadd.f32 %v2287, %v3250
        %v3252 = vpop.f32.mrf.mxu0
        %v3253 = vadd.f32 %v2287, %v3252
        %3254 = vmatmul.bf16.gmra.mxu0 %v2244
        %v3255 = vpop.f32.mrf.mxu0
        %v3256 = vadd.f32 %v2287, %v3255
        %v3257 = vpop.f32.mrf.mxu0
        %v3258 = vadd.f32 %v2287, %v3257
        %3259 = vmatmul.bf16.gmra.mxu0 %v2245
        %v3260 = vpop.f32.mrf.mxu0
        %v3261 = vadd.f32 %v2287, %v3260
        %v3262 = vpop.f32.mrf.mxu0
        %v3263 = vadd.f32 %v2287, %v3262
        %3264 = vmatmul.bf16.gmra.mxu0 %v2246
        %v3265 = vpop.f32.mrf.mxu0
        %v3266 = vadd.f32 %v2287, %v3265
        %v3267 = vpop.f32.mrf.mxu0
        %v3268 = vadd.f32 %v2287, %v3267
        %3269 = vmatmul.bf16.gmra.mxu0 %v2247
        %v3270 = vpop.f32.mrf.mxu0
        %v3271 = vadd.f32 %v2287, %v3270
        %v3272 = vpop.f32.mrf.mxu0
        %v3273 = vadd.f32 %v2287, %v3272
        %3274 = vmatmul.bf16.gmra.mxu0 %v2248
        %v3275 = vpop.f32.mrf.mxu0
        %v3276 = vadd.f32 %v2287, %v3275
        %v3277 = vpop.f32.mrf.mxu0
        %v3278 = vadd.f32 %v2287, %v3277
        %3279 = vmatmul.bf16.gmra.mxu0 %v2249
        %v3280 = vpop.f32.mrf.mxu0
        %v3281 = vadd.f32 %v2287, %v3280
        %v3282 = vpop.f32.mrf.mxu0
        %3283 = vdwg.mxu0
        %v3284 = vmax.f32 %v2462, 0.0
        %v3285 = vmax.f32 %v2670, 0.0
        %v3286 = vmax.f32 %v2878, 0.0
        %v3287 = vmax.f32 %v3086, 0.0
        %v3288 = vmax.f32 %v2464, 0.0
        %v3289 = vmax.f32 %v2672, 0.0
        %v3290 = vmax.f32 %v2880, 0.0
        %v3291 = vmax.f32 %v3088, 0.0
        %v3292 = vmax.f32 %v2467, 0.0
        %v3293 = vmax.f32 %v2675, 0.0
        %v3294 = vmax.f32 %v2883, 0.0
        %v3295 = vmax.f32 %v3091, 0.0
        %v3296 = vmax.f32 %v2469, 0.0
        %v3297 = vmax.f32 %v2677, 0.0
        %v3298 = vmax.f32 %v2885, 0.0
        %v3299 = vmax.f32 %v3093, 0.0
        %v3300 = vmax.f32 %v2472, 0.0
        %v3301 = vmax.f32 %v2680, 0.0
        %v3302 = vmax.f32 %v2888, 0.0
        %v3303 = vmax.f32 %v3096, 0.0
        %v3304 = vmax.f32 %v2474, 0.0
        %v3305 = vmax.f32 %v2682, 0.0
        %v3306 = vmax.f32 %v2890, 0.0
        %v3307 = vmax.f32 %v3098, 0.0
        %v3308 = vmax.f32 %v2477, 0.0
        %v3309 = vmax.f32 %v2685, 0.0
        %v3310 = vmax.f32 %v2893, 0.0
        %v3311 = vmax.f32 %v3101, 0.0
        %v3312 = vmax.f32 %v2479, 0.0
        %v3313 = vmax.f32 %v2687, 0.0
        %v3314 = vmax.f32 %v2895, 0.0
        %v3315 = vmax.f32 %v3103, 0.0
        %v3316 = vmax.f32 %v2482, 0.0
        %v3317 = vmax.f32 %v2690, 0.0
        %v3318 = vmax.f32 %v2898, 0.0
        %v3319 = vmax.f32 %v3106, 0.0
        %v3320 = vmax.f32 %v2484, 0.0
        %v3321 = vmax.f32 %v2692, 0.0
        %v3322 = vmax.f32 %v2900, 0.0
        %v3323 = vmax.f32 %v3108, 0.0
        %v3324 = vmax.f32 %v2487, 0.0
        %v3325 = vmax.f32 %v2695, 0.0
        %v3326 = vmax.f32 %v2903, 0.0
        %v3327 = vmax.f32 %v3111, 0.0
        %v3328 = vmax.f32 %v2489, 0.0
        %v3329 = vmax.f32 %v2697, 0.0
        %v3330 = vmax.f32 %v2905, 0.0
        %v3331 = vmax.f32 %v3113, 0.0
        %v3332 = vmax.f32 %v2492, 0.0
        %v3333 = vmax.f32 %v2700, 0.0
        %v3334 = vmax.f32 %v2908, 0.0
        %v3335 = vmax.f32 %v3116, 0.0
        %v3336 = vmax.f32 %v2494, 0.0
        %v3337 = vmax.f32 %v2702, 0.0
        %v3338 = vmax.f32 %v2910, 0.0
        %v3339 = vmax.f32 %v3118, 0.0
        %v3340 = vmax.f32 %v2497, 0.0
        %v3341 = vmax.f32 %v2705, 0.0
        %v3342 = vmax.f32 %v2913, 0.0
        %v3343 = vmax.f32 %v3121, 0.0
        %v3344 = vmax.f32 %v2499, 0.0
        %v3345 = vmax.f32 %v2707, 0.0
        %v3346 = vmax.f32 %v2915, 0.0
        %v3347 = vmax.f32 %v3123, 0.0
        %v3348 = vmax.f32 %v2502, 0.0
        %v3349 = vmax.f32 %v2710, 0.0
        %v3350 = vmax.f32 %v2918, 0.0
        %v3351 = vmax.f32 %v3126, 0.0
        %v3352 = vmax.f32 %v2504, 0.0
        %v3353 = vmax.f32 %v2712, 0.0
        %v3354 = vmax.f32 %v2920, 0.0
        %v3355 = vmax.f32 %v3128, 0.0
        %v3356 = vmax.f32 %v2507, 0.0
        %v3357 = vmax.f32 %v2715, 0.0
        %v3358 = vmax.f32 %v2923, 0.0
        %v3359 = vmax.f32 %v3131, 0.0
        %v3360 = vmax.f32 %v2509, 0.0
        %v3361 = vmax.f32 %v2717, 0.0
        %v3362 = vmax.f32 %v2925, 0.0
        %v3363 = vmax.f32 %v3133, 0.0
        %v3364 = vmax.f32 %v2512, 0.0
        %v3365 = vmax.f32 %v2720, 0.0
        %v3366 = vmax.f32 %v2928, 0.0
        %v3367 = vmax.f32 %v3136, 0.0
        %v3368 = vmax.f32 %v2514, 0.0
        %v3369 = vmax.f32 %v2722, 0.0
        %v3370 = vmax.f32 %v2930, 0.0
        %v3371 = vmax.f32 %v3138, 0.0
        %v3372 = vmax.f32 %v2517, 0.0
        %v3373 = vmax.f32 %v2725, 0.0
        %v3374 = vmax.f32 %v2933, 0.0
        %v3375 = vmax.f32 %v3141, 0.0
        %v3376 = vmax.f32 %v2519, 0.0
        %v3377 = vmax.f32 %v2727, 0.0
        %v3378 = vmax.f32 %v2935, 0.0
        %v3379 = vmax.f32 %v3143, 0.0
        %v3380 = vmax.f32 %v2522, 0.0
        %v3381 = vmax.f32 %v2730, 0.0
        %v3382 = vmax.f32 %v2938, 0.0
        %v3383 = vmax.f32 %v3146, 0.0
        %v3384 = vmax.f32 %v2524, 0.0
        %v3385 = vmax.f32 %v2732, 0.0
        %v3386 = vmax.f32 %v2940, 0.0
        %v3387 = vmax.f32 %v3148, 0.0
        %v3388 = vmax.f32 %v2527, 0.0
        %v3389 = vmax.f32 %v2735, 0.0
        %v3390 = vmax.f32 %v2943, 0.0
        %v3391 = vmax.f32 %v3151, 0.0
        %v3392 = vmax.f32 %v2529, 0.0
        %v3393 = vmax.f32 %v2737, 0.0
        %v3394 = vmax.f32 %v2945, 0.0
        %v3395 = vmax.f32 %v3153, 0.0
        %v3396 = vmax.f32 %v2532, 0.0
        %v3397 = vmax.f32 %v2740, 0.0
        %v3398 = vmax.f32 %v2948, 0.0
        %v3399 = vmax.f32 %v3156, 0.0
        %v3400 = vmax.f32 %v2534, 0.0
        %v3401 = vmax.f32 %v2742, 0.0
        %v3402 = vmax.f32 %v2950, 0.0
        %v3403 = vmax.f32 %v3158, 0.0
        %v3404 = vmax.f32 %v2537, 0.0
        %v3405 = vmax.f32 %v2745, 0.0
        %v3406 = vmax.f32 %v2953, 0.0
        %v3407 = vmax.f32 %v3161, 0.0
        %v3408 = vmax.f32 %v2539, 0.0
        %v3409 = vmax.f32 %v2747, 0.0
        %v3410 = vmax.f32 %v2955, 0.0
        %v3411 = vmax.f32 %v3163, 0.0
        %v3412 = vmax.f32 %v2542, 0.0
        %v3413 = vmax.f32 %v2750, 0.0
        %v3414 = vmax.f32 %v2958, 0.0
        %v3415 = vmax.f32 %v3166, 0.0
        %v3416 = vmax.f32 %v2544, 0.0
        %v3417 = vmax.f32 %v2752, 0.0
        %v3418 = vmax.f32 %v2960, 0.0
        %v3419 = vmax.f32 %v3168, 0.0
        %v3420 = vmax.f32 %v2547, 0.0
        %v3421 = vmax.f32 %v2755, 0.0
        %v3422 = vmax.f32 %v2963, 0.0
        %v3423 = vmax.f32 %v3171, 0.0
        %v3424 = vmax.f32 %v2549, 0.0
        %v3425 = vmax.f32 %v2757, 0.0
        %v3426 = vmax.f32 %v2965, 0.0
        %v3427 = vmax.f32 %v3173, 0.0
        %v3428 = vmax.f32 %v2552, 0.0
        %v3429 = vmax.f32 %v2760, 0.0
        %v3430 = vmax.f32 %v2968, 0.0
        %v3431 = vmax.f32 %v3176, 0.0
        %v3432 = vmax.f32 %v2554, 0.0
        %v3433 = vmax.f32 %v2762, 0.0
        %v3434 = vmax.f32 %v2970, 0.0
        %v3435 = vmax.f32 %v3178, 0.0
        %v3436 = vmax.f32 %v2557, 0.0
        %v3437 = vmax.f32 %v2765, 0.0
        %v3438 = vmax.f32 %v2973, 0.0
        %v3439 = vmax.f32 %v3181, 0.0
        %v3440 = vmax.f32 %v2559, 0.0
        %v3441 = vmax.f32 %v2767, 0.0
        %v3442 = vmax.f32 %v2975, 0.0
        %v3443 = vmax.f32 %v3183, 0.0
        %v3444 = vmax.f32 %v2562, 0.0
        %v3445 = vmax.f32 %v2770, 0.0
        %v3446 = vmax.f32 %v2978, 0.0
        %v3447 = vmax.f32 %v3186, 0.0
        %v3448 = vmax.f32 %v2564, 0.0
        %v3449 = vmax.f32 %v2772, 0.0
        %v3450 = vmax.f32 %v2980, 0.0
        %v3451 = vmax.f32 %v3188, 0.0
        %v3452 = vmax.f32 %v2567, 0.0
        %v3453 = vmax.f32 %v2775, 0.0
        %v3454 = vmax.f32 %v2983, 0.0
        %v3455 = vmax.f32 %v3191, 0.0
        %v3456 = vmax.f32 %v2569, 0.0
        %v3457 = vmax.f32 %v2777, 0.0
        %v3458 = vmax.f32 %v2985, 0.0
        %v3459 = vmax.f32 %v3193, 0.0
        %v3460 = vmax.f32 %v2572, 0.0
        %v3461 = vmax.f32 %v2780, 0.0
        %v3462 = vmax.f32 %v2988, 0.0
        %v3463 = vmax.f32 %v3196, 0.0
        %v3464 = vmax.f32 %v2574, 0.0
        %v3465 = vmax.f32 %v2782, 0.0
        %v3466 = vmax.f32 %v2990, 0.0
        %v3467 = vmax.f32 %v3198, 0.0
        %v3468 = vmax.f32 %v2577, 0.0
        %v3469 = vmax.f32 %v2785, 0.0
        %v3470 = vmax.f32 %v2993, 0.0
        %v3471 = vmax.f32 %v3201, 0.0
        %v3472 = vmax.f32 %v2579, 0.0
        %v3473 = vmax.f32 %v2787, 0.0
        %v3474 = vmax.f32 %v2995, 0.0
        %v3475 = vmax.f32 %v3203, 0.0
        %v3476 = vmax.f32 %v2582, 0.0
        %v3477 = vmax.f32 %v2790, 0.0
        %v3478 = vmax.f32 %v2998, 0.0
        %v3479 = vmax.f32 %v3206, 0.0
        %v3480 = vmax.f32 %v2584, 0.0
        %v3481 = vmax.f32 %v2792, 0.0
        %v3482 = vmax.f32 %v3000, 0.0
        %v3483 = vmax.f32 %v3208, 0.0
        %v3484 = vmax.f32 %v2587, 0.0
        %v3485 = vmax.f32 %v2795, 0.0
        %v3486 = vmax.f32 %v3003, 0.0
        %v3487 = vmax.f32 %v3211, 0.0
        %v3488 = vmax.f32 %v2589, 0.0
        %v3489 = vmax.f32 %v2797, 0.0
        %v3490 = vmax.f32 %v3005, 0.0
        %v3491 = vmax.f32 %v3213, 0.0
        %v3492 = vmax.f32 %v2592, 0.0
        %v3493 = vmax.f32 %v2800, 0.0
        %v3494 = vmax.f32 %v3008, 0.0
        %v3495 = vmax.f32 %v3216, 0.0
        %v3496 = vmax.f32 %v2594, 0.0
        %v3497 = vmax.f32 %v2802, 0.0
        %v3498 = vmax.f32 %v3010, 0.0
        %v3499 = vmax.f32 %v3218, 0.0
        %v3500 = vmax.f32 %v2597, 0.0
        %v3501 = vmax.f32 %v2805, 0.0
        %v3502 = vmax.f32 %v3013, 0.0
        %v3503 = vmax.f32 %v3221, 0.0
        %v3504 = vmax.f32 %v2599, 0.0
        %v3505 = vmax.f32 %v2807, 0.0
        %v3506 = vmax.f32 %v3015, 0.0
        %v3507 = vmax.f32 %v3223, 0.0
        %v3508 = vmax.f32 %v2602, 0.0
        %v3509 = vmax.f32 %v2810, 0.0
        %v3510 = vmax.f32 %v3018, 0.0
        %v3511 = vmax.f32 %v3226, 0.0
        %v3512 = vmax.f32 %v2604, 0.0
        %v3513 = vmax.f32 %v2812, 0.0
        %v3514 = vmax.f32 %v3020, 0.0
        %v3515 = vmax.f32 %v3228, 0.0
        %v3516 = vmax.f32 %v2607, 0.0
        %v3517 = vmax.f32 %v2815, 0.0
        %v3518 = vmax.f32 %v3023, 0.0
        %v3519 = vmax.f32 %v3231, 0.0
        %v3520 = vmax.f32 %v2609, 0.0
        %v3521 = vmax.f32 %v2817, 0.0
        %v3522 = vmax.f32 %v3025, 0.0
        %v3523 = vmax.f32 %v3233, 0.0
        %v3524 = vmax.f32 %v2612, 0.0
        %v3525 = vmax.f32 %v2820, 0.0
        %v3526 = vmax.f32 %v3028, 0.0
        %v3527 = vmax.f32 %v3236, 0.0
        %v3528 = vmax.f32 %v2614, 0.0
        %v3529 = vmax.f32 %v2822, 0.0
        %v3530 = vmax.f32 %v3030, 0.0
        %v3531 = vmax.f32 %v3238, 0.0
        %v3532 = vmax.f32 %v2617, 0.0
        %v3533 = vmax.f32 %v2825, 0.0
        %v3534 = vmax.f32 %v3033, 0.0
        %v3535 = vmax.f32 %v3241, 0.0
        %v3536 = vmax.f32 %v2619, 0.0
        %v3537 = vmax.f32 %v2827, 0.0
        %v3538 = vmax.f32 %v3035, 0.0
        %v3539 = vmax.f32 %v3243, 0.0
        %v3540 = vmax.f32 %v2622, 0.0
        %v3541 = vmax.f32 %v2830, 0.0
        %v3542 = vmax.f32 %v3038, 0.0
        %v3543 = vmax.f32 %v3246, 0.0
        %v3544 = vmax.f32 %v2624, 0.0
        %v3545 = vmax.f32 %v2832, 0.0
        %v3546 = vmax.f32 %v3040, 0.0
        %v3547 = vmax.f32 %v3248, 0.0
        %v3548 = vmax.f32 %v2627, 0.0
        %v3549 = vmax.f32 %v2835, 0.0
        %v3550 = vmax.f32 %v3043, 0.0
        %v3551 = vmax.f32 %v3251, 0.0
        %v3552 = vmax.f32 %v2629, 0.0
        %v3553 = vmax.f32 %v2837, 0.0
        %v3554 = vmax.f32 %v3045, 0.0
        %v3555 = vmax.f32 %v3253, 0.0
        %v3556 = vmax.f32 %v2632, 0.0
        %v3557 = vmax.f32 %v2840, 0.0
        %v3558 = vmax.f32 %v3048, 0.0
        %v3559 = vmax.f32 %v3256, 0.0
        %v3560 = vmax.f32 %v2634, 0.0
        %v3561 = vmax.f32 %v2842, 0.0
        %v3562 = vmax.f32 %v3050, 0.0
        %v3563 = vmax.f32 %v3258, 0.0
        %v3564 = vmax.f32 %v2637, 0.0
        %v3565 = vmax.f32 %v2845, 0.0
        %v3566 = vmax.f32 %v3053, 0.0
        %v3567 = vmax.f32 %v3261, 0.0
        %v3568 = vmax.f32 %v2639, 0.0
        %v3569 = vmax.f32 %v2847, 0.0
        %v3570 = vmax.f32 %v3055, 0.0
        %v3571 = vmax.f32 %v3263, 0.0
        %v3572 = vmax.f32 %v2642, 0.0
        %v3573 = vmax.f32 %v2850, 0.0
        %v3574 = vmax.f32 %v3058, 0.0
        %v3575 = vmax.f32 %v3266, 0.0
        %v3576 = vmax.f32 %v2644, 0.0
        %v3577 = vmax.f32 %v2852, 0.0
        %v3578 = vmax.f32 %v3060, 0.0
        %v3579 = vmax.f32 %v3268, 0.0
        %v3580 = vmax.f32 %v2647, 0.0
        %v3581 = vmax.f32 %v2855, 0.0
        %v3582 = vmax.f32 %v3063, 0.0
        %v3583 = vmax.f32 %v3271, 0.0
        %v3584 = vmax.f32 %v2649, 0.0
        %v3585 = vmax.f32 %v2857, 0.0
        %v3586 = vmax.f32 %v3065, 0.0
        %v3587 = vmax.f32 %v3273, 0.0
        %v3588 = vmax.f32 %v2652, 0.0
        %v3589 = vmax.f32 %v2860, 0.0
        %v3590 = vmax.f32 %v3068, 0.0
        %v3591 = vmax.f32 %v3276, 0.0
        %v3592 = vmax.f32 %v2654, 0.0
        %v3593 = vmax.f32 %v2862, 0.0
        %v3594 = vmax.f32 %v3070, 0.0
        %v3595 = vmax.f32 %v3278, 0.0
        %v3596 = vmax.f32 %v2657, 0.0
        %v3597 = vmax.f32 %v2865, 0.0
        %v3598 = vmax.f32 %v3073, 0.0
        %v3599 = vmax.f32 %v3281, 0.0
        %v3600 = vpack.c.bf16 %v3288, %v3284
        %v3601 = vpack.c.bf16 %v3289, %v3285
        %v3602 = vpack.c.bf16 %v3290, %v3286
        %v3603 = vpack.c.bf16 %v3291, %v3287
        %v3604 = vpack.c.bf16 %v3296, %v3292
        %v3605 = vpack.c.bf16 %v3297, %v3293
        %v3606 = vpack.c.bf16 %v3298, %v3294
        %v3607 = vpack.c.bf16 %v3299, %v3295
        %v3608 = vpack.c.bf16 %v3304, %v3300
        %v3609 = vpack.c.bf16 %v3305, %v3301
        %v3610 = vpack.c.bf16 %v3306, %v3302
        %v3611 = vpack.c.bf16 %v3307, %v3303
        %v3612 = vpack.c.bf16 %v3312, %v3308
        %v3613 = vpack.c.bf16 %v3313, %v3309
        %v3614 = vpack.c.bf16 %v3314, %v3310
        %v3615 = vpack.c.bf16 %v3315, %v3311
        %v3616 = vpack.c.bf16 %v3320, %v3316
        %v3617 = vpack.c.bf16 %v3321, %v3317
        %v3618 = vpack.c.bf16 %v3322, %v3318
        %v3619 = vpack.c.bf16 %v3323, %v3319
        %v3620 = vpack.c.bf16 %v3328, %v3324
        %v3621 = vpack.c.bf16 %v3329, %v3325
        %v3622 = vpack.c.bf16 %v3330, %v3326
        %v3623 = vpack.c.bf16 %v3331, %v3327
        %v3624 = vpack.c.bf16 %v3336, %v3332
        %v3625 = vpack.c.bf16 %v3337, %v3333
        %v3626 = vpack.c.bf16 %v3338, %v3334
        %v3627 = vpack.c.bf16 %v3339, %v3335
        %v3628 = vpack.c.bf16 %v3344, %v3340
        %v3629 = vpack.c.bf16 %v3345, %v3341
        %v3630 = vpack.c.bf16 %v3346, %v3342
        %v3631 = vpack.c.bf16 %v3347, %v3343
        %v3632 = vpack.c.bf16 %v3352, %v3348
        %v3633 = vpack.c.bf16 %v3353, %v3349
        %v3634 = vpack.c.bf16 %v3354, %v3350
        %v3635 = vpack.c.bf16 %v3355, %v3351
        %v3636 = vpack.c.bf16 %v3360, %v3356
        %v3637 = vpack.c.bf16 %v3361, %v3357
        %v3638 = vpack.c.bf16 %v3362, %v3358
        %v3639 = vpack.c.bf16 %v3363, %v3359
        %v3640 = vpack.c.bf16 %v3368, %v3364
        %v3641 = vpack.c.bf16 %v3369, %v3365
        %v3642 = vpack.c.bf16 %v3370, %v3366
        %v3643 = vpack.c.bf16 %v3371, %v3367
        %v3644 = vpack.c.bf16 %v3376, %v3372
        %v3645 = vpack.c.bf16 %v3377, %v3373
        %v3646 = vpack.c.bf16 %v3378, %v3374
        %v3647 = vpack.c.bf16 %v3379, %v3375
        %v3648 = vpack.c.bf16 %v3384, %v3380
        %v3649 = vpack.c.bf16 %v3385, %v3381
        %v3650 = vpack.c.bf16 %v3386, %v3382
        %v3651 = vpack.c.bf16 %v3387, %v3383
        %v3652 = vpack.c.bf16 %v3392, %v3388
        %v3653 = vpack.c.bf16 %v3393, %v3389
        %v3654 = vpack.c.bf16 %v3394, %v3390
        %v3655 = vpack.c.bf16 %v3395, %v3391
        %v3656 = vpack.c.bf16 %v3400, %v3396
        %v3657 = vpack.c.bf16 %v3401, %v3397
        %v3658 = vpack.c.bf16 %v3402, %v3398
        %v3659 = vpack.c.bf16 %v3403, %v3399
        %v3660 = vpack.c.bf16 %v3408, %v3404
        %v3661 = vpack.c.bf16 %v3409, %v3405
        %v3662 = vpack.c.bf16 %v3410, %v3406
        %v3663 = vpack.c.bf16 %v3411, %v3407
        %v3664 = vpack.c.bf16 %v3416, %v3412
        %v3665 = vpack.c.bf16 %v3417, %v3413
        %v3666 = vpack.c.bf16 %v3418, %v3414
        %v3667 = vpack.c.bf16 %v3419, %v3415
        %v3668 = vpack.c.bf16 %v3424, %v3420
        %v3669 = vpack.c.bf16 %v3425, %v3421
        %v3670 = vpack.c.bf16 %v3426, %v3422
        %v3671 = vpack.c.bf16 %v3427, %v3423
        %v3672 = vpack.c.bf16 %v3432, %v3428
        %v3673 = vpack.c.bf16 %v3433, %v3429
        %v3674 = vpack.c.bf16 %v3434, %v3430
        %v3675 = vpack.c.bf16 %v3435, %v3431
        %v3676 = vpack.c.bf16 %v3440, %v3436
        %v3677 = vpack.c.bf16 %v3441, %v3437
        %v3678 = vpack.c.bf16 %v3442, %v3438
        %v3679 = vpack.c.bf16 %v3443, %v3439
        %v3680 = vpack.c.bf16 %v3448, %v3444
        %v3681 = vpack.c.bf16 %v3449, %v3445
        %v3682 = vpack.c.bf16 %v3450, %v3446
        %v3683 = vpack.c.bf16 %v3451, %v3447
        %v3684 = vpack.c.bf16 %v3456, %v3452
        %v3685 = vpack.c.bf16 %v3457, %v3453
        %v3686 = vpack.c.bf16 %v3458, %v3454
        %v3687 = vpack.c.bf16 %v3459, %v3455
        %v3688 = vpack.c.bf16 %v3464, %v3460
        %v3689 = vpack.c.bf16 %v3465, %v3461
        %v3690 = vpack.c.bf16 %v3466, %v3462
        %v3691 = vpack.c.bf16 %v3467, %v3463
        %v3692 = vpack.c.bf16 %v3472, %v3468
        %v3693 = vpack.c.bf16 %v3473, %v3469
        %v3694 = vpack.c.bf16 %v3474, %v3470
        %v3695 = vpack.c.bf16 %v3475, %v3471
        %v3696 = vpack.c.bf16 %v3480, %v3476
        %v3697 = vpack.c.bf16 %v3481, %v3477
        %v3698 = vpack.c.bf16 %v3482, %v3478
        %v3699 = vpack.c.bf16 %v3483, %v3479
        %v3700 = vpack.c.bf16 %v3488, %v3484
        %v3701 = vpack.c.bf16 %v3489, %v3485
        %v3702 = vpack.c.bf16 %v3490, %v3486
        %v3703 = vpack.c.bf16 %v3491, %v3487
        %v3704 = vpack.c.bf16 %v3496, %v3492
        %v3705 = vpack.c.bf16 %v3497, %v3493
        %v3706 = vpack.c.bf16 %v3498, %v3494
        %v3707 = vpack.c.bf16 %v3499, %v3495
        %v3708 = vpack.c.bf16 %v3504, %v3500
        %v3709 = vpack.c.bf16 %v3505, %v3501
        %v3710 = vpack.c.bf16 %v3506, %v3502
        %v3711 = vpack.c.bf16 %v3507, %v3503
        %v3712 = vpack.c.bf16 %v3512, %v3508
        %v3713 = vpack.c.bf16 %v3513, %v3509
        %v3714 = vpack.c.bf16 %v3514, %v3510
        %v3715 = vpack.c.bf16 %v3515, %v3511
        %v3716 = vpack.c.bf16 %v3520, %v3516
        %v3717 = vpack.c.bf16 %v3521, %v3517
        %v3718 = vpack.c.bf16 %v3522, %v3518
        %v3719 = vpack.c.bf16 %v3523, %v3519
        %v3720 = vpack.c.bf16 %v3528, %v3524
        %v3721 = vpack.c.bf16 %v3529, %v3525
        %v3722 = vpack.c.bf16 %v3530, %v3526
        %v3723 = vpack.c.bf16 %v3531, %v3527
        %v3724 = vpack.c.bf16 %v3536, %v3532
        %v3725 = vpack.c.bf16 %v3537, %v3533
        %v3726 = vpack.c.bf16 %v3538, %v3534
        %v3727 = vpack.c.bf16 %v3539, %v3535
        %v3728 = vpack.c.bf16 %v3544, %v3540
        %v3729 = vpack.c.bf16 %v3545, %v3541
        %v3730 = vpack.c.bf16 %v3546, %v3542
        %v3731 = vpack.c.bf16 %v3547, %v3543
        %v3732 = vpack.c.bf16 %v3552, %v3548
        %v3733 = vpack.c.bf16 %v3553, %v3549
        %v3734 = vpack.c.bf16 %v3554, %v3550
        %v3735 = vpack.c.bf16 %v3555, %v3551
        %v3736 = vpack.c.bf16 %v3560, %v3556
        %v3737 = vpack.c.bf16 %v3561, %v3557
        %v3738 = vpack.c.bf16 %v3562, %v3558
        %v3739 = vpack.c.bf16 %v3563, %v3559
        %v3740 = vpack.c.bf16 %v3568, %v3564
        %v3741 = vpack.c.bf16 %v3569, %v3565
        %v3742 = vpack.c.bf16 %v3570, %v3566
        %v3743 = vpack.c.bf16 %v3571, %v3567
        %v3744 = vpack.c.bf16 %v3576, %v3572
        %v3745 = vpack.c.bf16 %v3577, %v3573
        %v3746 = vpack.c.bf16 %v3578, %v3574
        %v3747 = vpack.c.bf16 %v3579, %v3575
        %v3748 = vpack.c.bf16 %v3584, %v3580
        %v3749 = vpack.c.bf16 %v3585, %v3581
        %v3750 = vpack.c.bf16 %v3586, %v3582
        %v3751 = vpack.c.bf16 %v3587, %v3583
        %v3752 = vpack.c.bf16 %v3592, %v3588
        %v3753 = vpack.c.bf16 %v3593, %v3589
        %v3754 = vpack.c.bf16 %v3594, %v3590
        %v3755 = vpack.c.bf16 %v3595, %v3591
        %v3756 = vpack.c.bf16 %v3596, %v3596
        %v3757 = vpack.c.bf16 %v3597, %v3597
        %v3758 = vpack.c.bf16 %v3598, %v3598
        %v3759 = vpack.c.bf16 %v3599, %v3599
        %v3760 = vld [vmem:[#allocation10] sm:$0xf]
        %v3761 = vld [vmem:[#allocation10 + $0x4] sm:$0xf]
        %v3762 = vld [vmem:[#allocation10 + $0x8] sm:$0xf]
        %v3763 = vld [vmem:[#allocation10 + $0xc] sm:$0xf]
        %v3764 = vld [vmem:[#allocation10 + $0x10] sm:$0xf]
        %v3765 = vld [vmem:[#allocation10 + $0x14] sm:$0xf]
        %v3766 = vld [vmem:[#allocation10 + $0x18] sm:$0xf]
        %v3767 = vld [vmem:[#allocation10 + $0x1c] sm:$0xf]
        %v3768 = vld [vmem:[#allocation10 + $0x20] sm:$0xf]
        %v3769 = vld [vmem:[#allocation10 + $0x24] sm:$0xf]
        %v3770 = vld [vmem:[#allocation10 + $0x28] sm:$0xf]
        %v3771 = vld [vmem:[#allocation10 + $0x2c] sm:$0xf]
        %v3772 = vld [vmem:[#allocation10 + $0x30] sm:$0xf]
        %v3773 = vld [vmem:[#allocation10 + $0x34] sm:$0xf]
        %v3774 = vld [vmem:[#allocation10 + $0x38] sm:$0xf]
        %v3775 = vld [vmem:[#allocation10 + $0x3c] sm:$0xf]
        %v3776 = vld [vmem:[#allocation10 + $0x40] sm:$0xf]
        %v3777 = vld [vmem:[#allocation10 + $0x44] sm:$0xf]
        %v3778 = vld [vmem:[#allocation10 + $0x48] sm:$0xf]
        %v3779 = vld [vmem:[#allocation10 + $0x4c] sm:$0xf]
        %v3780 = vld [vmem:[#allocation10 + $0x50] sm:$0xf]
        %v3781 = vld [vmem:[#allocation10 + $0x54] sm:$0xf]
        %v3782 = vld [vmem:[#allocation10 + $0x58] sm:$0xf]
        %v3783 = vld [vmem:[#allocation10 + $0x5c] sm:$0xf]
        %v3784 = vld [vmem:[#allocation10 + $0x60] sm:$0xf]
        %v3785 = vld [vmem:[#allocation10 + $0x64] sm:$0xf]
        %v3786 = vld [vmem:[#allocation10 + $0x68] sm:$0xf]
        %v3787 = vld [vmem:[#allocation10 + $0x6c] sm:$0xf]
        %v3788 = vld [vmem:[#allocation10 + $0x70] sm:$0xf]
        %v3789 = vld [vmem:[#allocation10 + $0x74] sm:$0xf]
        %v3790 = vld [vmem:[#allocation10 + $0x78] sm:$0xf]
        %v3791 = vld [vmem:[#allocation10 + $0x7c] sm:$0xf]
        %v3792 = vld [vmem:[#allocation10 + $0x80] sm:$0xf]
        %v3793 = vld [vmem:[#allocation10 + $0x84] sm:$0xf]
        %v3794 = vld [vmem:[#allocation10 + $0x88] sm:$0xf]
        %v3795 = vld [vmem:[#allocation10 + $0x8c] sm:$0xf]
        %v3796 = vld [vmem:[#allocation10 + $0x90] sm:$0xf]
        %v3797 = vld [vmem:[#allocation10 + $0x94] sm:$0xf]
        %v3798 = vld [vmem:[#allocation10 + $0x98] sm:$0xf]
        %v3799 = vld [vmem:[#allocation10 + $0x9c] sm:$0xf]
        %v3800 = vld [vmem:[#allocation10 + $0xa0] sm:$0xf]
        %v3801 = vld [vmem:[#allocation10 + $0xa4] sm:$0xf]
        %v3802 = vld [vmem:[#allocation10 + $0xa8] sm:$0xf]
        %v3803 = vld [vmem:[#allocation10 + $0xac] sm:$0xf]
        %v3804 = vld [vmem:[#allocation10 + $0xb0] sm:$0xf]
        %v3805 = vld [vmem:[#allocation10 + $0xb4] sm:$0xf]
        %v3806 = vld [vmem:[#allocation10 + $0xb8] sm:$0xf]
        %v3807 = vld [vmem:[#allocation10 + $0xbc] sm:$0xf]
        %v3808 = vld [vmem:[#allocation10 + $0xc0] sm:$0xf]
        %v3809 = vld [vmem:[#allocation10 + $0xc4] sm:$0xf]
        %v3810 = vld [vmem:[#allocation10 + $0xc8] sm:$0xf]
        %v3811 = vld [vmem:[#allocation10 + $0xcc] sm:$0xf]
        %v3812 = vld [vmem:[#allocation10 + $0xd0] sm:$0xf]
        %v3813 = vld [vmem:[#allocation10 + $0xd4] sm:$0xf]
        %v3814 = vld [vmem:[#allocation10 + $0xd8] sm:$0xf]
        %v3815 = vld [vmem:[#allocation10 + $0xdc] sm:$0xf]
        %v3816 = vld [vmem:[#allocation10 + $0xe0] sm:$0xf]
        %v3817 = vld [vmem:[#allocation10 + $0xe4] sm:$0xf]
        %v3818 = vld [vmem:[#allocation10 + $0xe8] sm:$0xf]
        %v3819 = vld [vmem:[#allocation10 + $0xec] sm:$0xf]
        %v3820 = vld [vmem:[#allocation10 + $0xf0] sm:$0xf]
        %v3821 = vld [vmem:[#allocation10 + $0xf4] sm:$0xf]
        %v3822 = vld [vmem:[#allocation10 + $0xf8] sm:$0xf]
        %v3823 = vld [vmem:[#allocation10 + $0xfc] sm:$0xf]
        %v3824 = vld [vmem:[%s6] sm:$0x1]
        %v3826 = vperm.slane %v3824, 0
        %v3892 = vunpack.c.l.b16 %v3760
        %v3893 = vunpack.c.l.b16 %v3761
        %v3894 = vunpack.c.l.b16 %v3762
        %v3895 = vunpack.c.l.b16 %v3763
        %v3896 = vunpack.c.l.b16 %v3764
        %v3897 = vunpack.c.l.b16 %v3765
        %v3898 = vunpack.c.l.b16 %v3766
        %v3899 = vunpack.c.l.b16 %v3767
        %v3900 = vunpack.c.l.b16 %v3768
        %v3901 = vunpack.c.l.b16 %v3769
        %v3902 = vunpack.c.l.b16 %v3770
        %v3903 = vunpack.c.l.b16 %v3771
        %v3904 = vunpack.c.l.b16 %v3772
        %v3905 = vunpack.c.l.b16 %v3773
        %v3906 = vunpack.c.l.b16 %v3774
        %v3907 = vunpack.c.l.b16 %v3775
        %v3908 = vunpack.c.l.b16 %v3776
        %v3909 = vunpack.c.l.b16 %v3777
        %v3910 = vunpack.c.l.b16 %v3778
        %v3911 = vunpack.c.l.b16 %v3779
        %v3912 = vunpack.c.l.b16 %v3780
        %v3913 = vunpack.c.l.b16 %v3781
        %v3914 = vunpack.c.l.b16 %v3782
        %v3915 = vunpack.c.l.b16 %v3783
        %v3916 = vunpack.c.l.b16 %v3784
        %v3917 = vunpack.c.l.b16 %v3785
        %v3918 = vunpack.c.l.b16 %v3786
        %v3919 = vunpack.c.l.b16 %v3787
        %v3920 = vunpack.c.l.b16 %v3788
        %v3921 = vunpack.c.l.b16 %v3789
        %v3922 = vunpack.c.l.b16 %v3790
        %v3923 = vunpack.c.l.b16 %v3791
        %v3924 = vunpack.c.l.b16 %v3792
        %v3925 = vunpack.c.l.b16 %v3793
        %v3926 = vunpack.c.l.b16 %v3794
        %v3927 = vunpack.c.l.b16 %v3795
        %v3928 = vunpack.c.l.b16 %v3796
        %v3929 = vunpack.c.l.b16 %v3797
        %v3930 = vunpack.c.l.b16 %v3798
        %v3931 = vunpack.c.l.b16 %v3799
        %v3932 = vunpack.c.l.b16 %v3800
        %v3933 = vunpack.c.l.b16 %v3801
        %v3934 = vunpack.c.l.b16 %v3802
        %v3935 = vunpack.c.l.b16 %v3803
        %v3936 = vunpack.c.l.b16 %v3804
        %v3937 = vunpack.c.l.b16 %v3805
        %v3938 = vunpack.c.l.b16 %v3806
        %v3939 = vunpack.c.l.b16 %v3807
        %v3940 = vunpack.c.l.b16 %v3808
        %v3941 = vunpack.c.l.b16 %v3809
        %v3942 = vunpack.c.l.b16 %v3810
        %v3943 = vunpack.c.l.b16 %v3811
        %v3944 = vunpack.c.l.b16 %v3812
        %v3945 = vunpack.c.l.b16 %v3813
        %v3946 = vunpack.c.l.b16 %v3814
        %v3947 = vunpack.c.l.b16 %v3815
        %v3948 = vunpack.c.l.b16 %v3816
        %v3949 = vunpack.c.l.b16 %v3817
        %v3950 = vunpack.c.l.b16 %v3818
        %v3951 = vunpack.c.l.b16 %v3819
        %v3952 = vunpack.c.l.b16 %v3820
        %v3953 = vunpack.c.l.b16 %v3821
        %v3954 = vunpack.c.l.b16 %v3822
        %v3955 = vunpack.c.l.b16 %v3823
        %v3956 = vpack.c.b16 %v3893, %v3892
        %v3957 = vpack.c.b16 %v3895, %v3894
        %v3958 = vpack.c.b16 %v3897, %v3896
        %v3959 = vpack.c.b16 %v3899, %v3898
        %v3960 = vpack.c.b16 %v3901, %v3900
        %v3961 = vpack.c.b16 %v3903, %v3902
        %v3962 = vpack.c.b16 %v3905, %v3904
        %v3963 = vpack.c.b16 %v3907, %v3906
        %v3964 = vpack.c.b16 %v3909, %v3908
        %v3965 = vpack.c.b16 %v3911, %v3910
        %v3966 = vpack.c.b16 %v3913, %v3912
        %v3967 = vpack.c.b16 %v3915, %v3914
        %v3968 = vpack.c.b16 %v3917, %v3916
        %v3969 = vpack.c.b16 %v3919, %v3918
        %v3970 = vpack.c.b16 %v3921, %v3920
        %v3971 = vpack.c.b16 %v3923, %v3922
        %v3972 = vpack.c.b16 %v3925, %v3924
        %v3973 = vpack.c.b16 %v3927, %v3926
        %v3974 = vpack.c.b16 %v3929, %v3928
        %v3975 = vpack.c.b16 %v3931, %v3930
        %v3976 = vpack.c.b16 %v3933, %v3932
        %v3977 = vpack.c.b16 %v3935, %v3934
        %v3978 = vpack.c.b16 %v3937, %v3936
        %v3979 = vpack.c.b16 %v3939, %v3938
        %v3980 = vpack.c.b16 %v3941, %v3940
        %v3981 = vpack.c.b16 %v3943, %v3942
        %v3982 = vpack.c.b16 %v3945, %v3944
        %v3983 = vpack.c.b16 %v3947, %v3946
        %v3984 = vpack.c.b16 %v3949, %v3948
        %v3985 = vpack.c.b16 %v3951, %v3950
        %v3986 = vpack.c.b16 %v3953, %v3952
        %v3987 = vpack.c.b16 %v3955, %v3954
        %4020 = vmatpush.bf16.msra.mxu0 %v3963
        %4021 = vmatpush.bf16.msra.mxu0 %v3962
        %4022 = vmatpush.bf16.msra.mxu0 %v3961
        %4023 = vmatpush.bf16.msra.mxu0 %v3960
        %4024 = vmatpush.bf16.msra.mxu0 %v3959
        %4025 = vmatpush.bf16.msra.mxu0 %v3958
        %4026 = vmatpush.bf16.msra.mxu0 %v3957
        %4027 = vmatpush.bf16.msra.mxu0 %v3956
        %4028 = vmatmul.bf16.gmra.mxu0 %v3600
        %v4029 = vpop.f32.mrf.mxu0
        %v4030 = vadd.f32 %v3826, %v4029
        %v4031 = vpop.f32.mrf.mxu0
        %v4032 = vadd.f32 %v3826, %v4031
        %4033 = vmatmul.bf16.gmra.mxu0 %v3604
        %v4034 = vpop.f32.mrf.mxu0
        %v4035 = vadd.f32 %v3826, %v4034
        %v4036 = vpop.f32.mrf.mxu0
        %v4037 = vadd.f32 %v3826, %v4036
        %4038 = vmatmul.bf16.gmra.mxu0 %v3608
        %v4039 = vpop.f32.mrf.mxu0
        %v4040 = vadd.f32 %v3826, %v4039
        %v4041 = vpop.f32.mrf.mxu0
        %v4042 = vadd.f32 %v3826, %v4041
        %4043 = vmatmul.bf16.gmra.mxu0 %v3612
        %v4044 = vpop.f32.mrf.mxu0
        %v4045 = vadd.f32 %v3826, %v4044
        %v4046 = vpop.f32.mrf.mxu0
        %v4047 = vadd.f32 %v3826, %v4046
        %4048 = vmatmul.bf16.gmra.mxu0 %v3616
        %v4049 = vpop.f32.mrf.mxu0
        %v4050 = vadd.f32 %v3826, %v4049
        %v4051 = vpop.f32.mrf.mxu0
        %v4052 = vadd.f32 %v3826, %v4051
        %4053 = vmatmul.bf16.gmra.mxu0 %v3620
        %v4054 = vpop.f32.mrf.mxu0
        %v4055 = vadd.f32 %v3826, %v4054
        %v4056 = vpop.f32.mrf.mxu0
        %v4057 = vadd.f32 %v3826, %v4056
        %4058 = vmatmul.bf16.gmra.mxu0 %v3624
        %v4059 = vpop.f32.mrf.mxu0
        %v4060 = vadd.f32 %v3826, %v4059
        %v4061 = vpop.f32.mrf.mxu0
        %v4062 = vadd.f32 %v3826, %v4061
        %4063 = vmatmul.bf16.gmra.mxu0 %v3628
        %v4064 = vpop.f32.mrf.mxu0
        %v4065 = vadd.f32 %v3826, %v4064
        %v4066 = vpop.f32.mrf.mxu0
        %v4067 = vadd.f32 %v3826, %v4066
        %4068 = vmatmul.bf16.gmra.mxu0 %v3632
        %v4069 = vpop.f32.mrf.mxu0
        %v4070 = vadd.f32 %v3826, %v4069
        %v4071 = vpop.f32.mrf.mxu0
        %v4072 = vadd.f32 %v3826, %v4071
        %4073 = vmatmul.bf16.gmra.mxu0 %v3636
        %v4074 = vpop.f32.mrf.mxu0
        %v4075 = vadd.f32 %v3826, %v4074
        %v4076 = vpop.f32.mrf.mxu0
        %v4077 = vadd.f32 %v3826, %v4076
        %4078 = vmatmul.bf16.gmra.mxu0 %v3640
        %v4079 = vpop.f32.mrf.mxu0
        %v4080 = vadd.f32 %v3826, %v4079
        %v4081 = vpop.f32.mrf.mxu0
        %v4082 = vadd.f32 %v3826, %v4081
        %4083 = vmatmul.bf16.gmra.mxu0 %v3644
        %v4084 = vpop.f32.mrf.mxu0
        %v4085 = vadd.f32 %v3826, %v4084
        %v4086 = vpop.f32.mrf.mxu0
        %v4087 = vadd.f32 %v3826, %v4086
        %4088 = vmatmul.bf16.gmra.mxu0 %v3648
        %v4089 = vpop.f32.mrf.mxu0
        %v4090 = vadd.f32 %v3826, %v4089
        %v4091 = vpop.f32.mrf.mxu0
        %v4092 = vadd.f32 %v3826, %v4091
        %4093 = vmatmul.bf16.gmra.mxu0 %v3652
        %v4094 = vpop.f32.mrf.mxu0
        %v4095 = vadd.f32 %v3826, %v4094
        %v4096 = vpop.f32.mrf.mxu0
        %v4097 = vadd.f32 %v3826, %v4096
        %4098 = vmatmul.bf16.gmra.mxu0 %v3656
        %v4099 = vpop.f32.mrf.mxu0
        %v4100 = vadd.f32 %v3826, %v4099
        %v4101 = vpop.f32.mrf.mxu0
        %v4102 = vadd.f32 %v3826, %v4101
        %4103 = vmatmul.bf16.gmra.mxu0 %v3660
        %v4104 = vpop.f32.mrf.mxu0
        %v4105 = vadd.f32 %v3826, %v4104
        %v4106 = vpop.f32.mrf.mxu0
        %v4107 = vadd.f32 %v3826, %v4106
        %4108 = vmatmul.bf16.gmra.mxu0 %v3664
        %v4109 = vpop.f32.mrf.mxu0
        %v4110 = vadd.f32 %v3826, %v4109
        %v4111 = vpop.f32.mrf.mxu0
        %v4112 = vadd.f32 %v3826, %v4111
        %4113 = vmatmul.bf16.gmra.mxu0 %v3668
        %v4114 = vpop.f32.mrf.mxu0
        %v4115 = vadd.f32 %v3826, %v4114
        %v4116 = vpop.f32.mrf.mxu0
        %v4117 = vadd.f32 %v3826, %v4116
        %4118 = vmatmul.bf16.gmra.mxu0 %v3672
        %v4119 = vpop.f32.mrf.mxu0
        %v4120 = vadd.f32 %v3826, %v4119
        %v4121 = vpop.f32.mrf.mxu0
        %v4122 = vadd.f32 %v3826, %v4121
        %4123 = vmatmul.bf16.gmra.mxu0 %v3676
        %v4124 = vpop.f32.mrf.mxu0
        %v4125 = vadd.f32 %v3826, %v4124
        %v4126 = vpop.f32.mrf.mxu0
        %v4127 = vadd.f32 %v3826, %v4126
        %4128 = vmatmul.bf16.gmra.mxu0 %v3680
        %v4129 = vpop.f32.mrf.mxu0
        %v4130 = vadd.f32 %v3826, %v4129
        %v4131 = vpop.f32.mrf.mxu0
        %v4132 = vadd.f32 %v3826, %v4131
        %4133 = vmatmul.bf16.gmra.mxu0 %v3684
        %v4134 = vpop.f32.mrf.mxu0
        %v4135 = vadd.f32 %v3826, %v4134
        %v4136 = vpop.f32.mrf.mxu0
        %v4137 = vadd.f32 %v3826, %v4136
        %4138 = vmatmul.bf16.gmra.mxu0 %v3688
        %v4139 = vpop.f32.mrf.mxu0
        %v4140 = vadd.f32 %v3826, %v4139
        %v4141 = vpop.f32.mrf.mxu0
        %v4142 = vadd.f32 %v3826, %v4141
        %4143 = vmatmul.bf16.gmra.mxu0 %v3692
        %v4144 = vpop.f32.mrf.mxu0
        %v4145 = vadd.f32 %v3826, %v4144
        %v4146 = vpop.f32.mrf.mxu0
        %v4147 = vadd.f32 %v3826, %v4146
        %4148 = vmatmul.bf16.gmra.mxu0 %v3696
        %v4149 = vpop.f32.mrf.mxu0
        %v4150 = vadd.f32 %v3826, %v4149
        %v4151 = vpop.f32.mrf.mxu0
        %v4152 = vadd.f32 %v3826, %v4151
        %4153 = vmatmul.bf16.gmra.mxu0 %v3700
        %v4154 = vpop.f32.mrf.mxu0
        %v4155 = vadd.f32 %v3826, %v4154
        %v4156 = vpop.f32.mrf.mxu0
        %v4157 = vadd.f32 %v3826, %v4156
        %4158 = vmatmul.bf16.gmra.mxu0 %v3704
        %v4159 = vpop.f32.mrf.mxu0
        %v4160 = vadd.f32 %v3826, %v4159
        %v4161 = vpop.f32.mrf.mxu0
        %v4162 = vadd.f32 %v3826, %v4161
        %4163 = vmatmul.bf16.gmra.mxu0 %v3708
        %v4164 = vpop.f32.mrf.mxu0
        %v4165 = vadd.f32 %v3826, %v4164
        %v4166 = vpop.f32.mrf.mxu0
        %v4167 = vadd.f32 %v3826, %v4166
        %4168 = vmatmul.bf16.gmra.mxu0 %v3712
        %v4169 = vpop.f32.mrf.mxu0
        %v4170 = vadd.f32 %v3826, %v4169
        %v4171 = vpop.f32.mrf.mxu0
        %v4172 = vadd.f32 %v3826, %v4171
        %4173 = vmatmul.bf16.gmra.mxu0 %v3716
        %v4174 = vpop.f32.mrf.mxu0
        %v4175 = vadd.f32 %v3826, %v4174
        %v4176 = vpop.f32.mrf.mxu0
        %v4177 = vadd.f32 %v3826, %v4176
        %4178 = vmatmul.bf16.gmra.mxu0 %v3720
        %v4179 = vpop.f32.mrf.mxu0
        %v4180 = vadd.f32 %v3826, %v4179
        %v4181 = vpop.f32.mrf.mxu0
        %v4182 = vadd.f32 %v3826, %v4181
        %4183 = vmatmul.bf16.gmra.mxu0 %v3724
        %v4184 = vpop.f32.mrf.mxu0
        %v4185 = vadd.f32 %v3826, %v4184
        %v4186 = vpop.f32.mrf.mxu0
        %v4187 = vadd.f32 %v3826, %v4186
        %4188 = vmatmul.bf16.gmra.mxu0 %v3728
        %v4189 = vpop.f32.mrf.mxu0
        %v4190 = vadd.f32 %v3826, %v4189
        %v4191 = vpop.f32.mrf.mxu0
        %v4192 = vadd.f32 %v3826, %v4191
        %4193 = vmatmul.bf16.gmra.mxu0 %v3732
        %v4194 = vpop.f32.mrf.mxu0
        %v4195 = vadd.f32 %v3826, %v4194
        %v4196 = vpop.f32.mrf.mxu0
        %v4197 = vadd.f32 %v3826, %v4196
        %4198 = vmatmul.bf16.gmra.mxu0 %v3736
        %v4199 = vpop.f32.mrf.mxu0
        %v4200 = vadd.f32 %v3826, %v4199
        %v4201 = vpop.f32.mrf.mxu0
        %v4202 = vadd.f32 %v3826, %v4201
        %4203 = vmatmul.bf16.gmra.mxu0 %v3740
        %v4204 = vpop.f32.mrf.mxu0
        %v4205 = vadd.f32 %v3826, %v4204
        %v4206 = vpop.f32.mrf.mxu0
        %v4207 = vadd.f32 %v3826, %v4206
        %4208 = vmatmul.bf16.gmra.mxu0 %v3744
        %v4209 = vpop.f32.mrf.mxu0
        %v4210 = vadd.f32 %v3826, %v4209
        %v4211 = vpop.f32.mrf.mxu0
        %v4212 = vadd.f32 %v3826, %v4211
        %4213 = vmatmul.bf16.gmra.mxu0 %v3748
        %v4214 = vpop.f32.mrf.mxu0
        %v4215 = vadd.f32 %v3826, %v4214
        %v4216 = vpop.f32.mrf.mxu0
        %v4217 = vadd.f32 %v3826, %v4216
        %4218 = vmatmul.bf16.gmra.mxu0 %v3752
        %v4219 = vpop.f32.mrf.mxu0
        %v4220 = vadd.f32 %v3826, %v4219
        %v4221 = vpop.f32.mrf.mxu0
        %v4222 = vadd.f32 %v3826, %v4221
        %4223 = vmatmul.bf16.gmra.mxu0 %v3756
        %v4224 = vpop.f32.mrf.mxu0
        %v4225 = vadd.f32 %v3826, %v4224
        %v4226 = vpop.f32.mrf.mxu0
        %4227 = vdwg.mxu0
        %4228 = vmatpush.bf16.msra.mxu0 %v3971
        %4229 = vmatpush.bf16.msra.mxu0 %v3970
        %4230 = vmatpush.bf16.msra.mxu0 %v3969
        %4231 = vmatpush.bf16.msra.mxu0 %v3968
        %4232 = vmatpush.bf16.msra.mxu0 %v3967
        %4233 = vmatpush.bf16.msra.mxu0 %v3966
        %4234 = vmatpush.bf16.msra.mxu0 %v3965
        %4235 = vmatpush.bf16.msra.mxu0 %v3964
        %4236 = vmatmul.bf16.gmra.mxu0 %v3601
        %v4237 = vpop.f32.mrf.mxu0
        %v4238 = vadd.f32 %v4030, %v4237
        %v4239 = vpop.f32.mrf.mxu0
        %v4240 = vadd.f32 %v4032, %v4239
        %4241 = vmatmul.bf16.gmra.mxu0 %v3605
        %v4242 = vpop.f32.mrf.mxu0
        %v4243 = vadd.f32 %v4035, %v4242
        %v4244 = vpop.f32.mrf.mxu0
        %v4245 = vadd.f32 %v4037, %v4244
        %4246 = vmatmul.bf16.gmra.mxu0 %v3609
        %v4247 = vpop.f32.mrf.mxu0
        %v4248 = vadd.f32 %v4040, %v4247
        %v4249 = vpop.f32.mrf.mxu0
        %v4250 = vadd.f32 %v4042, %v4249
        %4251 = vmatmul.bf16.gmra.mxu0 %v3613
        %v4252 = vpop.f32.mrf.mxu0
        %v4253 = vadd.f32 %v4045, %v4252
        %v4254 = vpop.f32.mrf.mxu0
        %v4255 = vadd.f32 %v4047, %v4254
        %4256 = vmatmul.bf16.gmra.mxu0 %v3617
        %v4257 = vpop.f32.mrf.mxu0
        %v4258 = vadd.f32 %v4050, %v4257
        %v4259 = vpop.f32.mrf.mxu0
        %v4260 = vadd.f32 %v4052, %v4259
        %4261 = vmatmul.bf16.gmra.mxu0 %v3621
        %v4262 = vpop.f32.mrf.mxu0
        %v4263 = vadd.f32 %v4055, %v4262
        %v4264 = vpop.f32.mrf.mxu0
        %v4265 = vadd.f32 %v4057, %v4264
        %4266 = vmatmul.bf16.gmra.mxu0 %v3625
        %v4267 = vpop.f32.mrf.mxu0
        %v4268 = vadd.f32 %v4060, %v4267
        %v4269 = vpop.f32.mrf.mxu0
        %v4270 = vadd.f32 %v4062, %v4269
        %4271 = vmatmul.bf16.gmra.mxu0 %v3629
        %v4272 = vpop.f32.mrf.mxu0
        %v4273 = vadd.f32 %v4065, %v4272
        %v4274 = vpop.f32.mrf.mxu0
        %v4275 = vadd.f32 %v4067, %v4274
        %4276 = vmatmul.bf16.gmra.mxu0 %v3633
        %v4277 = vpop.f32.mrf.mxu0
        %v4278 = vadd.f32 %v4070, %v4277
        %v4279 = vpop.f32.mrf.mxu0
        %v4280 = vadd.f32 %v4072, %v4279
        %4281 = vmatmul.bf16.gmra.mxu0 %v3637
        %v4282 = vpop.f32.mrf.mxu0
        %v4283 = vadd.f32 %v4075, %v4282
        %v4284 = vpop.f32.mrf.mxu0
        %v4285 = vadd.f32 %v4077, %v4284
        %4286 = vmatmul.bf16.gmra.mxu0 %v3641
        %v4287 = vpop.f32.mrf.mxu0
        %v4288 = vadd.f32 %v4080, %v4287
        %v4289 = vpop.f32.mrf.mxu0
        %v4290 = vadd.f32 %v4082, %v4289
        %4291 = vmatmul.bf16.gmra.mxu0 %v3645
        %v4292 = vpop.f32.mrf.mxu0
        %v4293 = vadd.f32 %v4085, %v4292
        %v4294 = vpop.f32.mrf.mxu0
        %v4295 = vadd.f32 %v4087, %v4294
        %4296 = vmatmul.bf16.gmra.mxu0 %v3649
        %v4297 = vpop.f32.mrf.mxu0
        %v4298 = vadd.f32 %v4090, %v4297
        %v4299 = vpop.f32.mrf.mxu0
        %v4300 = vadd.f32 %v4092, %v4299
        %4301 = vmatmul.bf16.gmra.mxu0 %v3653
        %v4302 = vpop.f32.mrf.mxu0
        %v4303 = vadd.f32 %v4095, %v4302
        %v4304 = vpop.f32.mrf.mxu0
        %v4305 = vadd.f32 %v4097, %v4304
        %4306 = vmatmul.bf16.gmra.mxu0 %v3657
        %v4307 = vpop.f32.mrf.mxu0
        %v4308 = vadd.f32 %v4100, %v4307
        %v4309 = vpop.f32.mrf.mxu0
        %v4310 = vadd.f32 %v4102, %v4309
        %4311 = vmatmul.bf16.gmra.mxu0 %v3661
        %v4312 = vpop.f32.mrf.mxu0
        %v4313 = vadd.f32 %v4105, %v4312
        %v4314 = vpop.f32.mrf.mxu0
        %v4315 = vadd.f32 %v4107, %v4314
        %4316 = vmatmul.bf16.gmra.mxu0 %v3665
        %v4317 = vpop.f32.mrf.mxu0
        %v4318 = vadd.f32 %v4110, %v4317
        %v4319 = vpop.f32.mrf.mxu0
        %v4320 = vadd.f32 %v4112, %v4319
        %4321 = vmatmul.bf16.gmra.mxu0 %v3669
        %v4322 = vpop.f32.mrf.mxu0
        %v4323 = vadd.f32 %v4115, %v4322
        %v4324 = vpop.f32.mrf.mxu0
        %v4325 = vadd.f32 %v4117, %v4324
        %4326 = vmatmul.bf16.gmra.mxu0 %v3673
        %v4327 = vpop.f32.mrf.mxu0
        %v4328 = vadd.f32 %v4120, %v4327
        %v4329 = vpop.f32.mrf.mxu0
        %v4330 = vadd.f32 %v4122, %v4329
        %4331 = vmatmul.bf16.gmra.mxu0 %v3677
        %v4332 = vpop.f32.mrf.mxu0
        %v4333 = vadd.f32 %v4125, %v4332
        %v4334 = vpop.f32.mrf.mxu0
        %v4335 = vadd.f32 %v4127, %v4334
        %4336 = vmatmul.bf16.gmra.mxu0 %v3681
        %v4337 = vpop.f32.mrf.mxu0
        %v4338 = vadd.f32 %v4130, %v4337
        %v4339 = vpop.f32.mrf.mxu0
        %v4340 = vadd.f32 %v4132, %v4339
        %4341 = vmatmul.bf16.gmra.mxu0 %v3685
        %v4342 = vpop.f32.mrf.mxu0
        %v4343 = vadd.f32 %v4135, %v4342
        %v4344 = vpop.f32.mrf.mxu0
        %v4345 = vadd.f32 %v4137, %v4344
        %4346 = vmatmul.bf16.gmra.mxu0 %v3689
        %v4347 = vpop.f32.mrf.mxu0
        %v4348 = vadd.f32 %v4140, %v4347
        %v4349 = vpop.f32.mrf.mxu0
        %v4350 = vadd.f32 %v4142, %v4349
        %4351 = vmatmul.bf16.gmra.mxu0 %v3693
        %v4352 = vpop.f32.mrf.mxu0
        %v4353 = vadd.f32 %v4145, %v4352
        %v4354 = vpop.f32.mrf.mxu0
        %v4355 = vadd.f32 %v4147, %v4354
        %4356 = vmatmul.bf16.gmra.mxu0 %v3697
        %v4357 = vpop.f32.mrf.mxu0
        %v4358 = vadd.f32 %v4150, %v4357
        %v4359 = vpop.f32.mrf.mxu0
        %v4360 = vadd.f32 %v4152, %v4359
        %4361 = vmatmul.bf16.gmra.mxu0 %v3701
        %v4362 = vpop.f32.mrf.mxu0
        %v4363 = vadd.f32 %v4155, %v4362
        %v4364 = vpop.f32.mrf.mxu0
        %v4365 = vadd.f32 %v4157, %v4364
        %4366 = vmatmul.bf16.gmra.mxu0 %v3705
        %v4367 = vpop.f32.mrf.mxu0
        %v4368 = vadd.f32 %v4160, %v4367
        %v4369 = vpop.f32.mrf.mxu0
        %v4370 = vadd.f32 %v4162, %v4369
        %4371 = vmatmul.bf16.gmra.mxu0 %v3709
        %v4372 = vpop.f32.mrf.mxu0
        %v4373 = vadd.f32 %v4165, %v4372
        %v4374 = vpop.f32.mrf.mxu0
        %v4375 = vadd.f32 %v4167, %v4374
        %4376 = vmatmul.bf16.gmra.mxu0 %v3713
        %v4377 = vpop.f32.mrf.mxu0
        %v4378 = vadd.f32 %v4170, %v4377
        %v4379 = vpop.f32.mrf.mxu0
        %v4380 = vadd.f32 %v4172, %v4379
        %4381 = vmatmul.bf16.gmra.mxu0 %v3717
        %v4382 = vpop.f32.mrf.mxu0
        %v4383 = vadd.f32 %v4175, %v4382
        %v4384 = vpop.f32.mrf.mxu0
        %v4385 = vadd.f32 %v4177, %v4384
        %4386 = vmatmul.bf16.gmra.mxu0 %v3721
        %v4387 = vpop.f32.mrf.mxu0
        %v4388 = vadd.f32 %v4180, %v4387
        %v4389 = vpop.f32.mrf.mxu0
        %v4390 = vadd.f32 %v4182, %v4389
        %4391 = vmatmul.bf16.gmra.mxu0 %v3725
        %v4392 = vpop.f32.mrf.mxu0
        %v4393 = vadd.f32 %v4185, %v4392
        %v4394 = vpop.f32.mrf.mxu0
        %v4395 = vadd.f32 %v4187, %v4394
        %4396 = vmatmul.bf16.gmra.mxu0 %v3729
        %v4397 = vpop.f32.mrf.mxu0
        %v4398 = vadd.f32 %v4190, %v4397
        %v4399 = vpop.f32.mrf.mxu0
        %v4400 = vadd.f32 %v4192, %v4399
        %4401 = vmatmul.bf16.gmra.mxu0 %v3733
        %v4402 = vpop.f32.mrf.mxu0
        %v4403 = vadd.f32 %v4195, %v4402
        %v4404 = vpop.f32.mrf.mxu0
        %v4405 = vadd.f32 %v4197, %v4404
        %4406 = vmatmul.bf16.gmra.mxu0 %v3737
        %v4407 = vpop.f32.mrf.mxu0
        %v4408 = vadd.f32 %v4200, %v4407
        %v4409 = vpop.f32.mrf.mxu0
        %v4410 = vadd.f32 %v4202, %v4409
        %4411 = vmatmul.bf16.gmra.mxu0 %v3741
        %v4412 = vpop.f32.mrf.mxu0
        %v4413 = vadd.f32 %v4205, %v4412
        %v4414 = vpop.f32.mrf.mxu0
        %v4415 = vadd.f32 %v4207, %v4414
        %4416 = vmatmul.bf16.gmra.mxu0 %v3745
        %v4417 = vpop.f32.mrf.mxu0
        %v4418 = vadd.f32 %v4210, %v4417
        %v4419 = vpop.f32.mrf.mxu0
        %v4420 = vadd.f32 %v4212, %v4419
        %4421 = vmatmul.bf16.gmra.mxu0 %v3749
        %v4422 = vpop.f32.mrf.mxu0
        %v4423 = vadd.f32 %v4215, %v4422
        %v4424 = vpop.f32.mrf.mxu0
        %v4425 = vadd.f32 %v4217, %v4424
        %4426 = vmatmul.bf16.gmra.mxu0 %v3753
        %v4427 = vpop.f32.mrf.mxu0
        %v4428 = vadd.f32 %v4220, %v4427
        %v4429 = vpop.f32.mrf.mxu0
        %v4430 = vadd.f32 %v4222, %v4429
        %4431 = vmatmul.bf16.gmra.mxu0 %v3757
        %v4432 = vpop.f32.mrf.mxu0
        %v4433 = vadd.f32 %v4225, %v4432
        %v4434 = vpop.f32.mrf.mxu0
        %4435 = vdwg.mxu0
        %4436 = vmatpush.bf16.msra.mxu0 %v3979
        %4437 = vmatpush.bf16.msra.mxu0 %v3978
        %4438 = vmatpush.bf16.msra.mxu0 %v3977
        %4439 = vmatpush.bf16.msra.mxu0 %v3976
        %4440 = vmatpush.bf16.msra.mxu0 %v3975
        %4441 = vmatpush.bf16.msra.mxu0 %v3974
        %4442 = vmatpush.bf16.msra.mxu0 %v3973
        %4443 = vmatpush.bf16.msra.mxu0 %v3972
        %4444 = vmatmul.bf16.gmra.mxu0 %v3602
        %v4445 = vpop.f32.mrf.mxu0
        %v4446 = vadd.f32 %v4238, %v4445
        %v4447 = vpop.f32.mrf.mxu0
        %v4448 = vadd.f32 %v4240, %v4447
        %4449 = vmatmul.bf16.gmra.mxu0 %v3606
        %v4450 = vpop.f32.mrf.mxu0
        %v4451 = vadd.f32 %v4243, %v4450
        %v4452 = vpop.f32.mrf.mxu0
        %v4453 = vadd.f32 %v4245, %v4452
        %4454 = vmatmul.bf16.gmra.mxu0 %v3610
        %v4455 = vpop.f32.mrf.mxu0
        %v4456 = vadd.f32 %v4248, %v4455
        %v4457 = vpop.f32.mrf.mxu0
        %v4458 = vadd.f32 %v4250, %v4457
        %4459 = vmatmul.bf16.gmra.mxu0 %v3614
        %v4460 = vpop.f32.mrf.mxu0
        %v4461 = vadd.f32 %v4253, %v4460
        %v4462 = vpop.f32.mrf.mxu0
        %v4463 = vadd.f32 %v4255, %v4462
        %4464 = vmatmul.bf16.gmra.mxu0 %v3618
        %v4465 = vpop.f32.mrf.mxu0
        %v4466 = vadd.f32 %v4258, %v4465
        %v4467 = vpop.f32.mrf.mxu0
        %v4468 = vadd.f32 %v4260, %v4467
        %4469 = vmatmul.bf16.gmra.mxu0 %v3622
        %v4470 = vpop.f32.mrf.mxu0
        %v4471 = vadd.f32 %v4263, %v4470
        %v4472 = vpop.f32.mrf.mxu0
        %v4473 = vadd.f32 %v4265, %v4472
        %4474 = vmatmul.bf16.gmra.mxu0 %v3626
        %v4475 = vpop.f32.mrf.mxu0
        %v4476 = vadd.f32 %v4268, %v4475
        %v4477 = vpop.f32.mrf.mxu0
        %v4478 = vadd.f32 %v4270, %v4477
        %4479 = vmatmul.bf16.gmra.mxu0 %v3630
        %v4480 = vpop.f32.mrf.mxu0
        %v4481 = vadd.f32 %v4273, %v4480
        %v4482 = vpop.f32.mrf.mxu0
        %v4483 = vadd.f32 %v4275, %v4482
        %4484 = vmatmul.bf16.gmra.mxu0 %v3634
        %v4485 = vpop.f32.mrf.mxu0
        %v4486 = vadd.f32 %v4278, %v4485
        %v4487 = vpop.f32.mrf.mxu0
        %v4488 = vadd.f32 %v4280, %v4487
        %4489 = vmatmul.bf16.gmra.mxu0 %v3638
        %v4490 = vpop.f32.mrf.mxu0
        %v4491 = vadd.f32 %v4283, %v4490
        %v4492 = vpop.f32.mrf.mxu0
        %v4493 = vadd.f32 %v4285, %v4492
        %4494 = vmatmul.bf16.gmra.mxu0 %v3642
        %v4495 = vpop.f32.mrf.mxu0
        %v4496 = vadd.f32 %v4288, %v4495
        %v4497 = vpop.f32.mrf.mxu0
        %v4498 = vadd.f32 %v4290, %v4497
        %4499 = vmatmul.bf16.gmra.mxu0 %v3646
        %v4500 = vpop.f32.mrf.mxu0
        %v4501 = vadd.f32 %v4293, %v4500
        %v4502 = vpop.f32.mrf.mxu0
        %v4503 = vadd.f32 %v4295, %v4502
        %4504 = vmatmul.bf16.gmra.mxu0 %v3650
        %v4505 = vpop.f32.mrf.mxu0
        %v4506 = vadd.f32 %v4298, %v4505
        %v4507 = vpop.f32.mrf.mxu0
        %v4508 = vadd.f32 %v4300, %v4507
        %4509 = vmatmul.bf16.gmra.mxu0 %v3654
        %v4510 = vpop.f32.mrf.mxu0
        %v4511 = vadd.f32 %v4303, %v4510
        %v4512 = vpop.f32.mrf.mxu0
        %v4513 = vadd.f32 %v4305, %v4512
        %4514 = vmatmul.bf16.gmra.mxu0 %v3658
        %v4515 = vpop.f32.mrf.mxu0
        %v4516 = vadd.f32 %v4308, %v4515
        %v4517 = vpop.f32.mrf.mxu0
        %v4518 = vadd.f32 %v4310, %v4517
        %4519 = vmatmul.bf16.gmra.mxu0 %v3662
        %v4520 = vpop.f32.mrf.mxu0
        %v4521 = vadd.f32 %v4313, %v4520
        %v4522 = vpop.f32.mrf.mxu0
        %v4523 = vadd.f32 %v4315, %v4522
        %4524 = vmatmul.bf16.gmra.mxu0 %v3666
        %v4525 = vpop.f32.mrf.mxu0
        %v4526 = vadd.f32 %v4318, %v4525
        %v4527 = vpop.f32.mrf.mxu0
        %v4528 = vadd.f32 %v4320, %v4527
        %4529 = vmatmul.bf16.gmra.mxu0 %v3670
        %v4530 = vpop.f32.mrf.mxu0
        %v4531 = vadd.f32 %v4323, %v4530
        %v4532 = vpop.f32.mrf.mxu0
        %v4533 = vadd.f32 %v4325, %v4532
        %4534 = vmatmul.bf16.gmra.mxu0 %v3674
        %v4535 = vpop.f32.mrf.mxu0
        %v4536 = vadd.f32 %v4328, %v4535
        %v4537 = vpop.f32.mrf.mxu0
        %v4538 = vadd.f32 %v4330, %v4537
        %4539 = vmatmul.bf16.gmra.mxu0 %v3678
        %v4540 = vpop.f32.mrf.mxu0
        %v4541 = vadd.f32 %v4333, %v4540
        %v4542 = vpop.f32.mrf.mxu0
        %v4543 = vadd.f32 %v4335, %v4542
        %4544 = vmatmul.bf16.gmra.mxu0 %v3682
        %v4545 = vpop.f32.mrf.mxu0
        %v4546 = vadd.f32 %v4338, %v4545
        %v4547 = vpop.f32.mrf.mxu0
        %v4548 = vadd.f32 %v4340, %v4547
        %4549 = vmatmul.bf16.gmra.mxu0 %v3686
        %v4550 = vpop.f32.mrf.mxu0
        %v4551 = vadd.f32 %v4343, %v4550
        %v4552 = vpop.f32.mrf.mxu0
        %v4553 = vadd.f32 %v4345, %v4552
        %4554 = vmatmul.bf16.gmra.mxu0 %v3690
        %v4555 = vpop.f32.mrf.mxu0
        %v4556 = vadd.f32 %v4348, %v4555
        %v4557 = vpop.f32.mrf.mxu0
        %v4558 = vadd.f32 %v4350, %v4557
        %4559 = vmatmul.bf16.gmra.mxu0 %v3694
        %v4560 = vpop.f32.mrf.mxu0
        %v4561 = vadd.f32 %v4353, %v4560
        %v4562 = vpop.f32.mrf.mxu0
        %v4563 = vadd.f32 %v4355, %v4562
        %4564 = vmatmul.bf16.gmra.mxu0 %v3698
        %v4565 = vpop.f32.mrf.mxu0
        %v4566 = vadd.f32 %v4358, %v4565
        %v4567 = vpop.f32.mrf.mxu0
        %v4568 = vadd.f32 %v4360, %v4567
        %4569 = vmatmul.bf16.gmra.mxu0 %v3702
        %v4570 = vpop.f32.mrf.mxu0
        %v4571 = vadd.f32 %v4363, %v4570
        %v4572 = vpop.f32.mrf.mxu0
        %v4573 = vadd.f32 %v4365, %v4572
        %4574 = vmatmul.bf16.gmra.mxu0 %v3706
        %v4575 = vpop.f32.mrf.mxu0
        %v4576 = vadd.f32 %v4368, %v4575
        %v4577 = vpop.f32.mrf.mxu0
        %v4578 = vadd.f32 %v4370, %v4577
        %4579 = vmatmul.bf16.gmra.mxu0 %v3710
        %v4580 = vpop.f32.mrf.mxu0
        %v4581 = vadd.f32 %v4373, %v4580
        %v4582 = vpop.f32.mrf.mxu0
        %v4583 = vadd.f32 %v4375, %v4582
        %4584 = vmatmul.bf16.gmra.mxu0 %v3714
        %v4585 = vpop.f32.mrf.mxu0
        %v4586 = vadd.f32 %v4378, %v4585
        %v4587 = vpop.f32.mrf.mxu0
        %v4588 = vadd.f32 %v4380, %v4587
        %4589 = vmatmul.bf16.gmra.mxu0 %v3718
        %v4590 = vpop.f32.mrf.mxu0
        %v4591 = vadd.f32 %v4383, %v4590
        %v4592 = vpop.f32.mrf.mxu0
        %v4593 = vadd.f32 %v4385, %v4592
        %4594 = vmatmul.bf16.gmra.mxu0 %v3722
        %v4595 = vpop.f32.mrf.mxu0
        %v4596 = vadd.f32 %v4388, %v4595
        %v4597 = vpop.f32.mrf.mxu0
        %v4598 = vadd.f32 %v4390, %v4597
        %4599 = vmatmul.bf16.gmra.mxu0 %v3726
        %v4600 = vpop.f32.mrf.mxu0
        %v4601 = vadd.f32 %v4393, %v4600
        %v4602 = vpop.f32.mrf.mxu0
        %v4603 = vadd.f32 %v4395, %v4602
        %4604 = vmatmul.bf16.gmra.mxu0 %v3730
        %v4605 = vpop.f32.mrf.mxu0
        %v4606 = vadd.f32 %v4398, %v4605
        %v4607 = vpop.f32.mrf.mxu0
        %v4608 = vadd.f32 %v4400, %v4607
        %4609 = vmatmul.bf16.gmra.mxu0 %v3734
        %v4610 = vpop.f32.mrf.mxu0
        %v4611 = vadd.f32 %v4403, %v4610
        %v4612 = vpop.f32.mrf.mxu0
        %v4613 = vadd.f32 %v4405, %v4612
        %4614 = vmatmul.bf16.gmra.mxu0 %v3738
        %v4615 = vpop.f32.mrf.mxu0
        %v4616 = vadd.f32 %v4408, %v4615
        %v4617 = vpop.f32.mrf.mxu0
        %v4618 = vadd.f32 %v4410, %v4617
        %4619 = vmatmul.bf16.gmra.mxu0 %v3742
        %v4620 = vpop.f32.mrf.mxu0
        %v4621 = vadd.f32 %v4413, %v4620
        %v4622 = vpop.f32.mrf.mxu0
        %v4623 = vadd.f32 %v4415, %v4622
        %4624 = vmatmul.bf16.gmra.mxu0 %v3746
        %v4625 = vpop.f32.mrf.mxu0
        %v4626 = vadd.f32 %v4418, %v4625
        %v4627 = vpop.f32.mrf.mxu0
        %v4628 = vadd.f32 %v4420, %v4627
        %4629 = vmatmul.bf16.gmra.mxu0 %v3750
        %v4630 = vpop.f32.mrf.mxu0
        %v4631 = vadd.f32 %v4423, %v4630
        %v4632 = vpop.f32.mrf.mxu0
        %v4633 = vadd.f32 %v4425, %v4632
        %4634 = vmatmul.bf16.gmra.mxu0 %v3754
        %v4635 = vpop.f32.mrf.mxu0
        %v4636 = vadd.f32 %v4428, %v4635
        %v4637 = vpop.f32.mrf.mxu0
        %v4638 = vadd.f32 %v4430, %v4637
        %4639 = vmatmul.bf16.gmra.mxu0 %v3758
        %v4640 = vpop.f32.mrf.mxu0
        %v4641 = vadd.f32 %v4433, %v4640
        %v4642 = vpop.f32.mrf.mxu0
        %4643 = vdwg.mxu0
        %4644 = vmatpush.bf16.msra.mxu0 %v3987
        %4645 = vmatpush.bf16.msra.mxu0 %v3986
        %4646 = vmatpush.bf16.msra.mxu0 %v3985
        %4647 = vmatpush.bf16.msra.mxu0 %v3984
        %4648 = vmatpush.bf16.msra.mxu0 %v3983
        %4649 = vmatpush.bf16.msra.mxu0 %v3982
        %4650 = vmatpush.bf16.msra.mxu0 %v3981
        %4651 = vmatpush.bf16.msra.mxu0 %v3980
        %4652 = vmatmul.bf16.gmra.mxu0 %v3603
        %v4653 = vpop.f32.mrf.mxu0
        %v4654 = vadd.f32 %v4446, %v4653
        %v4655 = vpop.f32.mrf.mxu0
        %v4656 = vadd.f32 %v4448, %v4655
        %4657 = vmatmul.bf16.gmra.mxu0 %v3607
        %v4658 = vpop.f32.mrf.mxu0
        %v4659 = vadd.f32 %v4451, %v4658
        %v4660 = vpop.f32.mrf.mxu0
        %v4661 = vadd.f32 %v4453, %v4660
        %4662 = vmatmul.bf16.gmra.mxu0 %v3611
        %v4663 = vpop.f32.mrf.mxu0
        %v4664 = vadd.f32 %v4456, %v4663
        %v4665 = vpop.f32.mrf.mxu0
        %v4666 = vadd.f32 %v4458, %v4665
        %4667 = vmatmul.bf16.gmra.mxu0 %v3615
        %v4668 = vpop.f32.mrf.mxu0
        %v4669 = vadd.f32 %v4461, %v4668
        %v4670 = vpop.f32.mrf.mxu0
        %v4671 = vadd.f32 %v4463, %v4670
        %4672 = vmatmul.bf16.gmra.mxu0 %v3619
        %v4673 = vpop.f32.mrf.mxu0
        %v4674 = vadd.f32 %v4466, %v4673
        %v4675 = vpop.f32.mrf.mxu0
        %v4676 = vadd.f32 %v4468, %v4675
        %4677 = vmatmul.bf16.gmra.mxu0 %v3623
        %v4678 = vpop.f32.mrf.mxu0
        %v4679 = vadd.f32 %v4471, %v4678
        %v4680 = vpop.f32.mrf.mxu0
        %v4681 = vadd.f32 %v4473, %v4680
        %4682 = vmatmul.bf16.gmra.mxu0 %v3627
        %v4683 = vpop.f32.mrf.mxu0
        %v4684 = vadd.f32 %v4476, %v4683
        %v4685 = vpop.f32.mrf.mxu0
        %v4686 = vadd.f32 %v4478, %v4685
        %4687 = vmatmul.bf16.gmra.mxu0 %v3631
        %v4688 = vpop.f32.mrf.mxu0
        %v4689 = vadd.f32 %v4481, %v4688
        %v4690 = vpop.f32.mrf.mxu0
        %v4691 = vadd.f32 %v4483, %v4690
        %4692 = vmatmul.bf16.gmra.mxu0 %v3635
        %v4693 = vpop.f32.mrf.mxu0
        %v4694 = vadd.f32 %v4486, %v4693
        %v4695 = vpop.f32.mrf.mxu0
        %v4696 = vadd.f32 %v4488, %v4695
        %4697 = vmatmul.bf16.gmra.mxu0 %v3639
        %v4698 = vpop.f32.mrf.mxu0
        %v4699 = vadd.f32 %v4491, %v4698
        %v4700 = vpop.f32.mrf.mxu0
        %v4701 = vadd.f32 %v4493, %v4700
        %4702 = vmatmul.bf16.gmra.mxu0 %v3643
        %v4703 = vpop.f32.mrf.mxu0
        %v4704 = vadd.f32 %v4496, %v4703
        %v4705 = vpop.f32.mrf.mxu0
        %v4706 = vadd.f32 %v4498, %v4705
        %4707 = vmatmul.bf16.gmra.mxu0 %v3647
        %v4708 = vpop.f32.mrf.mxu0
        %v4709 = vadd.f32 %v4501, %v4708
        %v4710 = vpop.f32.mrf.mxu0
        %v4711 = vadd.f32 %v4503, %v4710
        %4712 = vmatmul.bf16.gmra.mxu0 %v3651
        %v4713 = vpop.f32.mrf.mxu0
        %v4714 = vadd.f32 %v4506, %v4713
        %v4715 = vpop.f32.mrf.mxu0
        %v4716 = vadd.f32 %v4508, %v4715
        %4717 = vmatmul.bf16.gmra.mxu0 %v3655
        %v4718 = vpop.f32.mrf.mxu0
        %v4719 = vadd.f32 %v4511, %v4718
        %v4720 = vpop.f32.mrf.mxu0
        %v4721 = vadd.f32 %v4513, %v4720
        %4722 = vmatmul.bf16.gmra.mxu0 %v3659
        %v4723 = vpop.f32.mrf.mxu0
        %v4724 = vadd.f32 %v4516, %v4723
        %v4725 = vpop.f32.mrf.mxu0
        %v4726 = vadd.f32 %v4518, %v4725
        %4727 = vmatmul.bf16.gmra.mxu0 %v3663
        %v4728 = vpop.f32.mrf.mxu0
        %v4729 = vadd.f32 %v4521, %v4728
        %v4730 = vpop.f32.mrf.mxu0
        %v4731 = vadd.f32 %v4523, %v4730
        %4732 = vmatmul.bf16.gmra.mxu0 %v3667
        %v4733 = vpop.f32.mrf.mxu0
        %v4734 = vadd.f32 %v4526, %v4733
        %v4735 = vpop.f32.mrf.mxu0
        %v4736 = vadd.f32 %v4528, %v4735
        %4737 = vmatmul.bf16.gmra.mxu0 %v3671
        %v4738 = vpop.f32.mrf.mxu0
        %v4739 = vadd.f32 %v4531, %v4738
        %v4740 = vpop.f32.mrf.mxu0
        %v4741 = vadd.f32 %v4533, %v4740
        %4742 = vmatmul.bf16.gmra.mxu0 %v3675
        %v4743 = vpop.f32.mrf.mxu0
        %v4744 = vadd.f32 %v4536, %v4743
        %v4745 = vpop.f32.mrf.mxu0
        %v4746 = vadd.f32 %v4538, %v4745
        %4747 = vmatmul.bf16.gmra.mxu0 %v3679
        %v4748 = vpop.f32.mrf.mxu0
        %v4749 = vadd.f32 %v4541, %v4748
        %v4750 = vpop.f32.mrf.mxu0
        %v4751 = vadd.f32 %v4543, %v4750
        %4752 = vmatmul.bf16.gmra.mxu0 %v3683
        %v4753 = vpop.f32.mrf.mxu0
        %v4754 = vadd.f32 %v4546, %v4753
        %v4755 = vpop.f32.mrf.mxu0
        %v4756 = vadd.f32 %v4548, %v4755
        %4757 = vmatmul.bf16.gmra.mxu0 %v3687
        %v4758 = vpop.f32.mrf.mxu0
        %v4759 = vadd.f32 %v4551, %v4758
        %v4760 = vpop.f32.mrf.mxu0
        %v4761 = vadd.f32 %v4553, %v4760
        %4762 = vmatmul.bf16.gmra.mxu0 %v3691
        %v4763 = vpop.f32.mrf.mxu0
        %v4764 = vadd.f32 %v4556, %v4763
        %v4765 = vpop.f32.mrf.mxu0
        %v4766 = vadd.f32 %v4558, %v4765
        %4767 = vmatmul.bf16.gmra.mxu0 %v3695
        %v4768 = vpop.f32.mrf.mxu0
        %v4769 = vadd.f32 %v4561, %v4768
        %v4770 = vpop.f32.mrf.mxu0
        %v4771 = vadd.f32 %v4563, %v4770
        %4772 = vmatmul.bf16.gmra.mxu0 %v3699
        %v4773 = vpop.f32.mrf.mxu0
        %v4774 = vadd.f32 %v4566, %v4773
        %v4775 = vpop.f32.mrf.mxu0
        %v4776 = vadd.f32 %v4568, %v4775
        %4777 = vmatmul.bf16.gmra.mxu0 %v3703
        %v4778 = vpop.f32.mrf.mxu0
        %v4779 = vadd.f32 %v4571, %v4778
        %v4780 = vpop.f32.mrf.mxu0
        %v4781 = vadd.f32 %v4573, %v4780
        %4782 = vmatmul.bf16.gmra.mxu0 %v3707
        %v4783 = vpop.f32.mrf.mxu0
        %v4784 = vadd.f32 %v4576, %v4783
        %v4785 = vpop.f32.mrf.mxu0
        %v4786 = vadd.f32 %v4578, %v4785
        %4787 = vmatmul.bf16.gmra.mxu0 %v3711
        %v4788 = vpop.f32.mrf.mxu0
        %v4789 = vadd.f32 %v4581, %v4788
        %v4790 = vpop.f32.mrf.mxu0
        %v4791 = vadd.f32 %v4583, %v4790
        %4792 = vmatmul.bf16.gmra.mxu0 %v3715
        %v4793 = vpop.f32.mrf.mxu0
        %v4794 = vadd.f32 %v4586, %v4793
        %v4795 = vpop.f32.mrf.mxu0
        %v4796 = vadd.f32 %v4588, %v4795
        %4797 = vmatmul.bf16.gmra.mxu0 %v3719
        %v4798 = vpop.f32.mrf.mxu0
        %v4799 = vadd.f32 %v4591, %v4798
        %v4800 = vpop.f32.mrf.mxu0
        %v4801 = vadd.f32 %v4593, %v4800
        %4802 = vmatmul.bf16.gmra.mxu0 %v3723
        %v4803 = vpop.f32.mrf.mxu0
        %v4804 = vadd.f32 %v4596, %v4803
        %v4805 = vpop.f32.mrf.mxu0
        %v4806 = vadd.f32 %v4598, %v4805
        %4807 = vmatmul.bf16.gmra.mxu0 %v3727
        %v4808 = vpop.f32.mrf.mxu0
        %v4809 = vadd.f32 %v4601, %v4808
        %v4810 = vpop.f32.mrf.mxu0
        %v4811 = vadd.f32 %v4603, %v4810
        %4812 = vmatmul.bf16.gmra.mxu0 %v3731
        %v4813 = vpop.f32.mrf.mxu0
        %v4814 = vadd.f32 %v4606, %v4813
        %v4815 = vpop.f32.mrf.mxu0
        %v4816 = vadd.f32 %v4608, %v4815
        %4817 = vmatmul.bf16.gmra.mxu0 %v3735
        %v4818 = vpop.f32.mrf.mxu0
        %v4819 = vadd.f32 %v4611, %v4818
        %v4820 = vpop.f32.mrf.mxu0
        %v4821 = vadd.f32 %v4613, %v4820
        %4822 = vmatmul.bf16.gmra.mxu0 %v3739
        %v4823 = vpop.f32.mrf.mxu0
        %v4824 = vadd.f32 %v4616, %v4823
        %v4825 = vpop.f32.mrf.mxu0
        %v4826 = vadd.f32 %v4618, %v4825
        %4827 = vmatmul.bf16.gmra.mxu0 %v3743
        %v4828 = vpop.f32.mrf.mxu0
        %v4829 = vadd.f32 %v4621, %v4828
        %v4830 = vpop.f32.mrf.mxu0
        %v4831 = vadd.f32 %v4623, %v4830
        %4832 = vmatmul.bf16.gmra.mxu0 %v3747
        %v4833 = vpop.f32.mrf.mxu0
        %v4834 = vadd.f32 %v4626, %v4833
        %v4835 = vpop.f32.mrf.mxu0
        %v4836 = vadd.f32 %v4628, %v4835
        %4837 = vmatmul.bf16.gmra.mxu0 %v3751
        %v4838 = vpop.f32.mrf.mxu0
        %v4839 = vadd.f32 %v4631, %v4838
        %v4840 = vpop.f32.mrf.mxu0
        %v4841 = vadd.f32 %v4633, %v4840
        %4842 = vmatmul.bf16.gmra.mxu0 %v3755
        %v4843 = vpop.f32.mrf.mxu0
        %v4844 = vadd.f32 %v4636, %v4843
        %v4845 = vpop.f32.mrf.mxu0
        %v4846 = vadd.f32 %v4638, %v4845
        %4847 = vmatmul.bf16.gmra.mxu0 %v3759
        %v4848 = vpop.f32.mrf.mxu0
        %v4849 = vadd.f32 %v4641, %v4848
        %v4850 = vpop.f32.mrf.mxu0
        %4851 = vdwg.mxu0
        %4852 = vst [vmem:[%s367] sm:$0xff] %v4654
        %4853 = vst [vmem:[%s367 + $0x8] sm:$0xff] %v4656
        %4854 = vst [vmem:[%s367 + $0x10] sm:$0xff] %v4659
        %4855 = vst [vmem:[%s367 + $0x18] sm:$0xff] %v4661
        %4856 = vst [vmem:[%s367 + $0x20] sm:$0xff] %v4664
        %4857 = vst [vmem:[%s367 + $0x28] sm:$0xff] %v4666
        %4858 = vst [vmem:[%s367 + $0x30] sm:$0xff] %v4669
        %4859 = vst [vmem:[%s367 + $0x38] sm:$0xff] %v4671
        %4860 = vst [vmem:[%s367 + $0x40] sm:$0xff] %v4674
        %4861 = vst [vmem:[%s367 + $0x48] sm:$0xff] %v4676
        %4862 = vst [vmem:[%s367 + $0x50] sm:$0xff] %v4679
        %4863 = vst [vmem:[%s367 + $0x58] sm:$0xff] %v4681
        %4864 = vst [vmem:[%s367 + $0x60] sm:$0xff] %v4684
        %4865 = vst [vmem:[%s367 + $0x68] sm:$0xff] %v4686
        %4866 = vst [vmem:[%s367 + $0x70] sm:$0xff] %v4689
        %4867 = vst [vmem:[%s367 + $0x78] sm:$0xff] %v4691
        %4868 = vst [vmem:[%s367 + $0x80] sm:$0xff] %v4694
        %4869 = vst [vmem:[%s367 + $0x88] sm:$0xff] %v4696
        %4870 = vst [vmem:[%s367 + $0x90] sm:$0xff] %v4699
        %4871 = vst [vmem:[%s367 + $0x98] sm:$0xff] %v4701
        %4872 = vst [vmem:[%s367 + $0xa0] sm:$0xff] %v4704
        %4873 = vst [vmem:[%s367 + $0xa8] sm:$0xff] %v4706
        %4874 = vst [vmem:[%s367 + $0xb0] sm:$0xff] %v4709
        %4875 = vst [vmem:[%s367 + $0xb8] sm:$0xff] %v4711
        %4876 = vst [vmem:[%s367 + $0xc0] sm:$0xff] %v4714
        %4877 = vst [vmem:[%s367 + $0xc8] sm:$0xff] %v4716
        %4878 = vst [vmem:[%s367 + $0xd0] sm:$0xff] %v4719
        %4879 = vst [vmem:[%s367 + $0xd8] sm:$0xff] %v4721
        %4880 = vst [vmem:[%s367 + $0xe0] sm:$0xff] %v4724
        %4881 = vst [vmem:[%s367 + $0xe8] sm:$0xff] %v4726
        %4882 = vst [vmem:[%s367 + $0xf0] sm:$0xff] %v4729
        %4883 = vst [vmem:[%s367 + $0xf8] sm:$0xff] %v4731
        %4884 = vst [vmem:[%s367 + $0x100] sm:$0xff] %v4734
        %4885 = vst [vmem:[%s367 + $0x108] sm:$0xff] %v4736
        %4886 = vst [vmem:[%s367 + $0x110] sm:$0xff] %v4739
        %4887 = vst [vmem:[%s367 + $0x118] sm:$0xff] %v4741
        %4888 = vst [vmem:[%s367 + $0x120] sm:$0xff] %v4744
        %4889 = vst [vmem:[%s367 + $0x128] sm:$0xff] %v4746
        %4890 = vst [vmem:[%s367 + $0x130] sm:$0xff] %v4749
        %4891 = vst [vmem:[%s367 + $0x138] sm:$0xff] %v4751
        %4892 = vst [vmem:[%s367 + $0x140] sm:$0xff] %v4754
        %4893 = vst [vmem:[%s367 + $0x148] sm:$0xff] %v4756
        %4894 = vst [vmem:[%s367 + $0x150] sm:$0xff] %v4759
        %4895 = vst [vmem:[%s367 + $0x158] sm:$0xff] %v4761
        %4896 = vst [vmem:[%s367 + $0x160] sm:$0xff] %v4764
        %4897 = vst [vmem:[%s367 + $0x168] sm:$0xff] %v4766
        %4898 = vst [vmem:[%s367 + $0x170] sm:$0xff] %v4769
        %4899 = vst [vmem:[%s367 + $0x178] sm:$0xff] %v4771
        %4900 = vst [vmem:[%s367 + $0x180] sm:$0xff] %v4774
        %4901 = vst [vmem:[%s367 + $0x188] sm:$0xff] %v4776
        %4902 = vst [vmem:[%s367 + $0x190] sm:$0xff] %v4779
        %4903 = vst [vmem:[%s367 + $0x198] sm:$0xff] %v4781
        %4904 = vst [vmem:[%s367 + $0x1a0] sm:$0xff] %v4784
        %4905 = vst [vmem:[%s367 + $0x1a8] sm:$0xff] %v4786
        %4906 = vst [vmem:[%s367 + $0x1b0] sm:$0xff] %v4789
        %4907 = vst [vmem:[%s367 + $0x1b8] sm:$0xff] %v4791
        %4908 = vst [vmem:[%s367 + $0x1c0] sm:$0xff] %v4794
        %4909 = vst [vmem:[%s367 + $0x1c8] sm:$0xff] %v4796
        %4910 = vst [vmem:[%s367 + $0x1d0] sm:$0xff] %v4799
        %4911 = vst [vmem:[%s367 + $0x1d8] sm:$0xff] %v4801
        %4912 = vst [vmem:[%s367 + $0x1e0] sm:$0xff] %v4804
        %4913 = vst [vmem:[%s367 + $0x1e8] sm:$0xff] %v4806
        %4914 = vst [vmem:[%s367 + $0x1f0] sm:$0xff] %v4809
        %4915 = vst [vmem:[%s367 + $0x1f8] sm:$0xff] %v4811
        %4916 = vst [vmem:[%s367 + $0x200] sm:$0xff] %v4814
        %4917 = vst [vmem:[%s367 + $0x208] sm:$0xff] %v4816
        %4918 = vst [vmem:[%s367 + $0x210] sm:$0xff] %v4819
        %4919 = vst [vmem:[%s367 + $0x218] sm:$0xff] %v4821
        %4920 = vst [vmem:[%s367 + $0x220] sm:$0xff] %v4824
        %4921 = vst [vmem:[%s367 + $0x228] sm:$0xff] %v4826
        %4922 = vst [vmem:[%s367 + $0x230] sm:$0xff] %v4829
        %4923 = vst [vmem:[%s367 + $0x238] sm:$0xff] %v4831
        %4924 = vst [vmem:[%s367 + $0x240] sm:$0xff] %v4834
        %4925 = vst [vmem:[%s367 + $0x248] sm:$0xff] %v4836
        %4926 = vst [vmem:[%s367 + $0x250] sm:$0xff] %v4839
        %4927 = vst [vmem:[%s367 + $0x258] sm:$0xff] %v4841
        %4928 = vst [vmem:[%s367 + $0x260] sm:$0xff] %v4844
        %4929 = vst [vmem:[%s367 + $0x268] sm:$0xff] %v4846
        %4930 = vst [vmem:[%s367 + $0x270] sm:$0xff] %v4849
        %s4931 = sand.u32 %s186, 1
        %s4932 = scalar_lea.sflag [#allocation4], %s4931
        %s4933 = sand.u32 %s186, 1
        %s4934 = smul.addr %s4933, 632
        %s4935 = scalar_lea.vmem [#allocation11], %s4934
        // Predicated region
        $region69: #{tpu_custom_call.1} parent=47 // pred_check
          %p4936 = pneg %p196
        $region70: #{tpu_custom_call.1} parent=47 // pred_check_branch
          %4938 = sbr.rel (%p4936) target = $region72
        $region71: #{tpu_custom_call.1} parent=47 // pred_region
          %s4939 = smul.u32 79, %s26
          %s4940 = ssub.s32 157, %s4939
          %p4941 = scmp.lt.s32.totalorder %s4940, 79
          %s4942 = scalar_select %p4941, %s4940, 79
          %s4943 = smul.u32 8, %s4942
          %s4944 = ssub.s32 632, %s4943
          %s4945 = sshll.u32 %s4944, 4
          %4946 = vsyncadd %s4932, %s4945
          %p4947 = scmp.ne.s32.totalorder 0, %s4943
          %s4948 = smul.addr %s4939, 8
          %s4949 = scalar_lea.hbm %s7, %s4948
          %s4950 = smul.u32 8, %s4942
          %s4951 = sshll.u32 %s4935, 4
          %s4952 = int_to_ptr.vmem [resolvable:$true] %s4951
          %s4953 = sshll.u32 %s4949, 4
          %s4954 = int_to_ptr.hbm [resolvable:$true] %s4953
          %s4955 = sshll.u32 %s4950, 4
          %4959 = dma.vmem_to_hbm [thread:$0]  (%p4947), %s4952, %s4955, %s4954, %s4932, 128, 128, 8
        $region72: #{tpu_custom_call.1} parent=47 // pred_fallthru
          _
      $region48: #{tpu_custom_call.1} parent=5 // pred_fallthru
        _
      %p4960 = scmp.le.s32.totalorder 2, %s21
      // Predicated region
      $region73: #{tpu_custom_call.1} parent=5 // pred_check
        %p4961 = pneg %p4960
      $region74: #{tpu_custom_call.1} parent=5 // pred_check_branch
        %4963 = sbr.rel (%p4961) target = $region76
      $region75: #{tpu_custom_call.1} parent=5 // pred_region
        %s4964 = ssub.s32 %s21, 2
        // Predicated region
        $region77: #{tpu_custom_call.1} parent=75 // pred_check
          %p4965 = pneg %p202
        $region78: #{tpu_custom_call.1} parent=75 // pred_check_branch
          %4967 = sbr.rel (%p4965) target = $region80
        $region79: #{tpu_custom_call.1} parent=75 // pred_region
          %s4968 = sand.u32 %s187, 1
          %s4969 = scalar_lea.sflag [#allocation4], %s4968
          %s4970 = sand.u32 %s187, 1
          %s4971 = smul.addr %s4970, 632
          %s4972 = scalar_lea.vmem [#allocation11], %s4971
          %4974 = dma.done %s4969, 10112
        $region80: #{tpu_custom_call.1} parent=75 // pred_fallthru
          _
      $region76: #{tpu_custom_call.1} parent=5 // pred_fallthru
        _
    $region6: #{tpu_custom_call.1} parent=1 // loop_footer
      %s25 = sadd.s32 1, %s21
    $region7: #{tpu_custom_call.1} parent=1 // loop_footer_branch
      %20 = sbr.rel target = $region3
    $region8: #{tpu_custom_call.1} parent=1 // loop_exit
      _
    %4975 = vsyncpa [#allocation3], 1
    %s4976 = scalar_lea.sflag [#allocation3], 1
    %4977 = vsyncpa %s4976, 1
    %4978 = vsyncpa [#allocation6], 1
    %4979 = vsyncpa [#allocation9], 1
    %4980 = vsyncpa [#allocation4], 1
    %s4981 = scalar_lea.sflag [#allocation4], 1
    %4982 = vsyncpa %s4981, 1

</llo_original>
